<compile_context>
chip_gen: v6e
topology: v6e:2x2x1
jax: 0.10.0
libtpu: 0.0.40
codegen_flags: <defaults>
</compile_context>

<pallas_src>
import functools

import jax
import jax.numpy as jnp
from jax import lax
from jax.experimental import pallas as pl
from jax.experimental.pallas import tpu as pltpu


# ----------------------------------------------------------------------------
# Single fused kernel for the whole decoder layer (no grid, all VMEM-resident).
# ----------------------------------------------------------------------------
def _decoder_layer_kernel(
    # activations / masks
    x_ref, e_ref, slf_mask_ref, enc_mask_ref,
    # self-attention params (projection weights already doubled + head-fused)
    s_wq_ref, s_wk_ref, s_wv_ref, s_wp_ref, s_bp_ref, s_g_ref, s_b_ref,
    # enc-dec attention params
    c_wq_ref, c_wk_ref, c_wv_ref, c_wp_ref, c_bp_ref, c_g_ref, c_b_ref,
    # position-wise FFN params
    f_w1_ref, f_b1_ref, f_w2_ref, f_b2_ref, f_g_ref, f_b_ref,
    # outputs
    out_ref, slf_attn_ref, enc_attn_ref,
    *, n_head, d_model, d_k, d_v):

    scale = 1.0 / (d_model ** 0.5)            # temper = sqrt(d_model)
    neg = jnp.float32(-1e30)                  # == -inf fill for non-fully-masked rows

    def layer_norm(y, g, b):
        mu = jnp.mean(y, axis=-1, keepdims=True)
        var = jnp.mean(jnp.square(y - mu), axis=-1, keepdims=True)
        return (y - mu) * lax.rsqrt(var + 1e-5) * g + b

    def mha(q, k, v, mask, wq_ref, wk_ref, wv_ref, wp_ref, bp_ref, g_ref, b_ref):
        # Lane-dense fused projections: (len, d_model) @ (d_model, n_head*d_k).
        # The "doubled" projection of the reference is folded into the weights.
        qs_all = jnp.dot(q, wq_ref[...], preferred_element_type=jnp.float32)
        ks_all = jnp.dot(k, wk_ref[...], preferred_element_type=jnp.float32)
        vs_all = jnp.dot(v, wv_ref[...], preferred_element_type=jnp.float32)

        heads, attns = [], []
        for h in range(n_head):               # static unroll; n_head is tiny
            qs = qs_all[:, h * d_k:(h + 1) * d_k]
            ks = ks_all[:, h * d_k:(h + 1) * d_k]
            vs = vs_all[:, h * d_v:(h + 1) * d_v]

            # Q @ K^T without materializing a transpose of K.
            s = lax.dot_general(qs, ks, (((1,), (1,)), ((), ())),
                                preferred_element_type=jnp.float32) * scale
            s = jnp.where(mask != 0, neg, s)              # masked_fill_(mask, -inf)
            m = jnp.max(s, axis=-1, keepdims=True)
            p = jnp.exp(s - m)
            attn = p / jnp.sum(p, axis=-1, keepdims=True)  # exact (attn is an output)
            attns.append(attn)
            heads.append(jnp.dot(attn, vs, preferred_element_type=jnp.float32))

        heads_cat = jnp.concatenate(heads, axis=-1)   # (len_q, n_head*d_v) = lane-dense
        attn_cat = jnp.concatenate(attns, axis=-1)    # (len_q, n_head*len_k), one store
        # split(dim=0)+cat(dim=-1)+Linear == concat @ W_proj : one K=128 dot.
        proj = jnp.dot(heads_cat, wp_ref[...],
                       preferred_element_type=jnp.float32) + bp_ref[...]
        # residual = q ; LayerNorm(proj + residual); dropout = identity
        return layer_norm(proj + q, g_ref[...], b_ref[...]), attn_cat

    x = x_ref[...]                            # (len_q, d_model)
    e = e_ref[...]                            # (len_k, d_model)

    # 1) masked self-attention
    h1, slf_attn = mha(x, x, x, slf_mask_ref[...],
                       s_wq_ref, s_wk_ref, s_wv_ref, s_wp_ref, s_bp_ref,
                       s_g_ref, s_b_ref)
    slf_attn_ref[...] = slf_attn

    # 2) decoder-encoder attention
    h2, enc_attn = mha(h1, e, e, enc_mask_ref[...],
                       c_wq_ref, c_wk_ref, c_wv_ref, c_wp_ref, c_bp_ref,
                       c_g_ref, c_b_ref)
    enc_attn_ref[...] = enc_attn

    # 3) position-wise FFN (Conv1d kernel=1 == per-token matmul) + residual + LN
    hid = jnp.maximum(
        jnp.dot(h2, f_w1_ref[...], preferred_element_type=jnp.float32) + f_b1_ref[...],
        0.0)
    y = jnp.dot(hid, f_w2_ref[...], preferred_element_type=jnp.float32) + f_b2_ref[...]
    out_ref[...] = layer_norm(y + h2, f_g_ref[...], f_b_ref[...])


# ----------------------------------------------------------------------------
# Wrapper
# ----------------------------------------------------------------------------
def _fuse_doubled_heads(w):
    """(n_head, d_model, d) per-head W -> per-head (W @ W), laid out lane-dense as
    (d_model, n_head*d).  Valid because the reference applies the projection twice
    and q @ (W @ W) == (q @ W) @ W (requires d == d_model, as the reference does)."""
    n_head, d_model, d = w.shape
    assert d == d_model, "reference doubled-bmm requires d_k == d_v == d_model"
    w2 = jnp.einsum("hmd,hde->hme", w, w)                  # per-head W @ W
    return jnp.transpose(w2, (1, 0, 2)).reshape(d_model, n_head * d)


def decoder_layer(dec_input, enc_output, slf_attn_mask, dec_enc_attn_mask,
                  params, *, n_head, d_model, d_k, d_v):
    """dec_input/enc_output: (1, seq, d_model); masks: (1, len_q, len_k) int32."""
    x = dec_input[0]
    e = enc_output[0]
    slf_mask = slf_attn_mask[0].astype(jnp.int32)
    enc_mask = dec_enc_attn_mask[0].astype(jnp.int32)
    len_q = x.shape[0]
    len_k = e.shape[0]

    sa, ca, ff = params["slf_attn"], params["enc_attn"], params["pos_ffn"]

    # One-time host/XLA-side weight fusion (doubled projection + head fusion).
    sa_wq, sa_wk, sa_wv = (_fuse_doubled_heads(sa["w_qs"]),
                           _fuse_doubled_heads(sa["w_ks"]),
                           _fuse_doubled_heads(sa["w_vs"]))
    ca_wq, ca_wk, ca_wv = (_fuse_doubled_heads(ca["w_qs"]),
                           _fuse_doubled_heads(ca["w_ks"]),
                           _fuse_doubled_heads(ca["w_vs"]))

    vmem = pl.BlockSpec(memory_space=pltpu.MemorySpace.VMEM)
    n_inputs = 24

    out, slf_attn_packed, enc_attn_packed = pl.pallas_call(
        functools.partial(_decoder_layer_kernel,
                          n_head=n_head, d_model=d_model, d_k=d_k, d_v=d_v),
        out_shape=(
            jax.ShapeDtypeStruct((len_q, d_model), jnp.float32),
            jax.ShapeDtypeStruct((len_q, n_head * len_q), jnp.float32),
            jax.ShapeDtypeStruct((len_q, n_head * len_k), jnp.float32),
        ),
        in_specs=[vmem] * n_inputs,
        out_specs=(vmem, vmem, vmem),
    )(x, e, slf_mask, enc_mask,
      sa_wq, sa_wk, sa_wv, sa["w_proj"], sa["b_proj"], sa["ln_gamma"], sa["ln_beta"],
      ca_wq, ca_wk, ca_wv, ca["w_proj"], ca["b_proj"], ca["ln_gamma"], ca["ln_beta"],
      ff["w1"], ff["b1"], ff["w2"], ff["b2"], ff["ln_gamma"], ff["ln_beta"])

    # Unpack lane-packed attention maps to the reference (n_head*batch, len_q, len_k)
    # layout (batch == 1).
    slf_attn = slf_attn_packed.reshape(len_q, n_head, len_q).transpose(1, 0, 2)
    enc_attn = enc_attn_packed.reshape(len_q, n_head, len_k).transpose(1, 0, 2)
    return out[None, ...], slf_attn, enc_attn


# ----------------------------------------------------------------------------
# Pure-JAX reference (mirrors the PyTorch module, eval mode) for validation.
# ----------------------------------------------------------------------------
def _reference_decoder_layer(dec_input, enc_output, slf_mask, enc_mask, params,
                             *, n_head, d_model):
    hi = lax.Precision.HIGHEST

    def layer_norm(y, g, b):
        mu = jnp.mean(y, axis=-1, keepdims=True)
        var = jnp.mean(jnp.square(y - mu), axis=-1, keepdims=True)
        return (y - mu) * lax.rsqrt(var + 1e-5) * g + b

    def mha(q, k, v, mask, p):
        heads, attns = [], []
        for h in range(n_head):
            qs = jnp.einsum("ld,de->le", jnp.einsum("ld,de->le", q, p["w_qs"][h],
                                                    precision=hi),
                            p["w_qs"][h], precision=hi)
            ks = jnp.einsum("ld,de->le", jnp.einsum("ld,de->le", k, p["w_ks"][h],
                                                    precision=hi),
                            p["w_ks"][h], precision=hi)
            vs = jnp.einsum("ld,de->le", jnp.einsum("ld,de->le", v, p["w_vs"][h],
                                                    precision=hi),
                            p["w_vs"][h], precision=hi)
            s = jnp.einsum("qd,kd->qk", qs, ks, precision=hi) / (d_model ** 0.5)
            s = jnp.where(mask != 0, -1e30, s)
            attn = jax.nn.softmax(s, axis=-1)
            attns.append(attn)
            heads.append(jnp.einsum("qk,kd->qd", attn, vs, precision=hi))
        cat = jnp.concatenate(heads, axis=-1)
        proj = jnp.einsum("qd,de->qe", cat, p["w_proj"], precision=hi) + p["b_proj"]
        return layer_norm(proj + q, p["ln_gamma"], p["ln_beta"]), jnp.stack(attns)

    x, e = dec_input[0], enc_output[0]
    h1, a1 = mha(x, x, x, slf_mask[0], params["slf_attn"])
    h2, a2 = mha(h1, e, e, enc_mask[0], params["enc_attn"])
    ff = params["pos_ffn"]
    hid = jnp.maximum(jnp.einsum("qd,de->qe", h2, ff["w1"], precision=hi) + ff["b1"], 0.0)
    y = jnp.einsum("qd,de->qe", hid, ff["w2"], precision=hi) + ff["b2"]
    out = layer_norm(y + h2, ff["ln_gamma"], ff["ln_beta"])
    return out[None, ...], a1, a2


# ----------------------------------------------------------------------------
# Deterministic parameter construction
# ----------------------------------------------------------------------------
def _xavier_normal(key, shape, fan_in, fan_out):
    std = (2.0 / (fan_in + fan_out)) ** 0.5
    return std * jax.random.normal(key, shape, dtype=jnp.float32)


def make_mha_params(key, n_head, d_model, d_k, d_v):
    k0, k1, k2, k3 = jax.random.split(key, 4)
    return {
        "w_qs": _xavier_normal(k0, (n_head, d_model, d_k), d_model * d_k, n_head * d_k),
        "w_ks": _xavier_normal(k1, (n_head, d_model, d_k), d_model * d_k, n_head * d_k),
        "w_vs": _xavier_normal(k2, (n_head, d_model, d_v), d_model * d_v, n_head * d_v),
        # stored transposed vs. torch Linear: y = x @ w_proj + b_proj
        "w_proj": _xavier_normal(k3, (n_head * d_v, d_model), n_head * d_v, d_model),
        "b_proj": jnp.zeros((1, d_model), jnp.float32),
        "ln_gamma": jnp.ones((1, d_model), jnp.float32),
        "ln_beta": jnp.zeros((1, d_model), jnp.float32),
    }


def make_ffn_params(key, d_model, d_inner):
    k0, k1, k2, k3 = jax.random.split(key, 4)
    # Conv1d(kernel=1) weights stored as plain (in, out) matmul weights.
    return {
        "w1": _xavier_normal(k0, (d_model, d_inner), d_model, d_inner),
        "b1": 0.01 * jax.random.normal(k1, (1, d_inner), dtype=jnp.float32),
        "w2": _xavier_normal(k2, (d_inner, d_model), d_inner, d_model),
        "b2": 0.01 * jax.random.normal(k3, (1, d_model), dtype=jnp.float32),
        "ln_gamma": jnp.ones((1, d_model), jnp.float32),
        "ln_beta": jnp.zeros((1, d_model), jnp.float32),
    }


if __name__ == "__main__":
    # batch must be 1 and d_k == d_v == d_model for the reference forward
    # (doubled bmm) to be well-formed.
    batch, seq, d_model, n_head, d_inner = 1, 8, 32, 4, 64
    d_k = d_v = d_model

    root = jax.random.PRNGKey(0)
    k_in, k_enc, k_slf, k_encatt, k_ffn = jax.random.split(root, 5)

    dec_input = jax.random.normal(k_in, (batch, seq, d_model), dtype=jnp.float32)
    enc_output = jax.random.normal(k_enc, (batch, seq, d_model), dtype=jnp.float32)

    # causal self-attention mask (1 = masked), no mask for dec-enc attention
    causal = (jnp.arange(seq)[None, :] > jnp.arange(seq)[:, None]).astype(jnp.int32)
    slf_attn_mask = causal[None, ...]                               # (1, seq, seq)
    dec_enc_attn_mask = jnp.zeros((batch, seq, seq), jnp.int32)     # (1, seq, seq)

    params = {
        "slf_attn": make_mha_params(k_slf, n_head, d_model, d_k, d_v),
        "enc_attn": make_mha_params(k_encatt, n_head, d_model, d_k, d_v),
        "pos_ffn": make_ffn_params(k_ffn, d_model, d_inner),
    }

    dec_out, slf_attn, enc_attn = decoder_layer(
        dec_input, enc_output, slf_attn_mask, dec_enc_attn_mask, params,
        n_head=n_head, d_model=d_model, d_k=d_k, d_v=d_v)
    jax.block_until_ready((dec_out, slf_attn, enc_attn))

    assert dec_out.shape == (batch, seq, d_model)
    assert slf_attn.shape == (n_head * batch, seq, seq)
    assert enc_attn.shape == (n_head * batch, seq, seq)
    assert bool(jnp.all(jnp.isfinite(dec_out)))
    assert bool(jnp.all(jnp.isfinite(slf_attn)))
    assert bool(jnp.all(jnp.isfinite(enc_attn)))
    # softmax rows sum to 1 (exact division in-kernel)
    assert bool(jnp.all(jnp.abs(jnp.sum(slf_attn, axis=-1) - 1.0) < 1e-4))
    assert bool(jnp.all(jnp.abs(jnp.sum(enc_attn, axis=-1) - 1.0) < 1e-4))

    # numerical check against a pure-JAX reference of the original module
    ref_out, ref_slf, ref_enc = _reference_decoder_layer(
        dec_input, enc_output, slf_attn_mask, dec_enc_attn_mask, params,
        n_head=n_head, d_model=d_model)
    assert bool(jnp.allclose(dec_out, ref_out, rtol=1e-2, atol=1e-2))
    assert bool(jnp.allclose(slf_attn, ref_slf, rtol=1e-2, atol=1e-2))
    assert bool(jnp.allclose(enc_attn, ref_enc, rtol=1e-2, atol=1e-2))

    print("KERNEL_OK")
</pallas_src>

<mosaic_0001>
module attributes {stable_mosaic.version = 11 : i64} {
  func.func @_decoder_layer_kernel(%arg0: memref<8x32xf32, #tpu.memory_space<vmem>>, %arg1: memref<8x32xf32, #tpu.memory_space<vmem>>, %arg2: memref<8x8xi32, #tpu.memory_space<vmem>>, %arg3: memref<8x8xi32, #tpu.memory_space<vmem>>, %arg4: memref<32x128xf32, #tpu.memory_space<vmem>>, %arg5: memref<32x128xf32, #tpu.memory_space<vmem>>, %arg6: memref<32x128xf32, #tpu.memory_space<vmem>>, %arg7: memref<128x32xf32, #tpu.memory_space<vmem>>, %arg8: memref<1x32xf32, #tpu.memory_space<vmem>>, %arg9: memref<1x32xf32, #tpu.memory_space<vmem>>, %arg10: memref<1x32xf32, #tpu.memory_space<vmem>>, %arg11: memref<32x128xf32, #tpu.memory_space<vmem>>, %arg12: memref<32x128xf32, #tpu.memory_space<vmem>>, %arg13: memref<32x128xf32, #tpu.memory_space<vmem>>, %arg14: memref<128x32xf32, #tpu.memory_space<vmem>>, %arg15: memref<1x32xf32, #tpu.memory_space<vmem>>, %arg16: memref<1x32xf32, #tpu.memory_space<vmem>>, %arg17: memref<1x32xf32, #tpu.memory_space<vmem>>, %arg18: memref<32x64xf32, #tpu.memory_space<vmem>>, %arg19: memref<1x64xf32, #tpu.memory_space<vmem>>, %arg20: memref<64x32xf32, #tpu.memory_space<vmem>>, %arg21: memref<1x32xf32, #tpu.memory_space<vmem>>, %arg22: memref<1x32xf32, #tpu.memory_space<vmem>>, %arg23: memref<1x32xf32, #tpu.memory_space<vmem>>, %arg24: memref<8x32xf32, #tpu.memory_space<vmem>>, %arg25: memref<8x32xf32, #tpu.memory_space<vmem>>, %arg26: memref<8x32xf32, #tpu.memory_space<vmem>>) attributes {dimension_semantics = [], scalar_prefetch = 0 : i64, scratch_operands = 0 : i64, tpu.core_type = #tpu.core_type<tc>} {
    %c0 = arith.constant 0 : index
    %c0_0 = arith.constant 0 : index
    %0 = vector.load %arg0[%c0, %c0_0] : memref<8x32xf32, #tpu.memory_space<vmem>>, vector<8x32xf32>
    %c0_1 = arith.constant 0 : index
    %c0_2 = arith.constant 0 : index
    %1 = vector.load %arg1[%c0_1, %c0_2] : memref<8x32xf32, #tpu.memory_space<vmem>>, vector<8x32xf32>
    %c0_3 = arith.constant 0 : index
    %c0_4 = arith.constant 0 : index
    %2 = vector.load %arg2[%c0_3, %c0_4] : memref<8x8xi32, #tpu.memory_space<vmem>>, vector<8x8xi32>
    %c0_5 = arith.constant 0 : index
    %c0_6 = arith.constant 0 : index
    %3 = vector.load %arg4[%c0_5, %c0_6] : memref<32x128xf32, #tpu.memory_space<vmem>>, vector<32x128xf32>
    %cst = arith.constant dense<0.000000e+00> : vector<8x128xf32>
    %4 = tpu.matmul %0, %3, %cst {dimension_numbers = #tpu.dot_dimension_numbers<[1], [0], [0], [1], [0, 0, 1, 1], [], []>} : vector<8x32xf32>, vector<32x128xf32>, vector<8x128xf32> -> vector<8x128xf32>
    %c0_7 = arith.constant 0 : index
    %c0_8 = arith.constant 0 : index
    %5 = vector.load %arg5[%c0_7, %c0_8] : memref<32x128xf32, #tpu.memory_space<vmem>>, vector<32x128xf32>
    %cst_9 = arith.constant dense<0.000000e+00> : vector<8x128xf32>
    %6 = tpu.matmul %0, %5, %cst_9 {dimension_numbers = #tpu.dot_dimension_numbers<[1], [0], [0], [1], [0, 0, 1, 1], [], []>} : vector<8x32xf32>, vector<32x128xf32>, vector<8x128xf32> -> vector<8x128xf32>
    %c0_10 = arith.constant 0 : index
    %c0_11 = arith.constant 0 : index
    %7 = vector.load %arg6[%c0_10, %c0_11] : memref<32x128xf32, #tpu.memory_space<vmem>>, vector<32x128xf32>
    %cst_12 = arith.constant dense<0.000000e+00> : vector<8x128xf32>
    %8 = tpu.matmul %0, %7, %cst_12 {dimension_numbers = #tpu.dot_dimension_numbers<[1], [0], [0], [1], [0, 0, 1, 1], [], []>} : vector<8x32xf32>, vector<32x128xf32>, vector<8x128xf32> -> vector<8x128xf32>
    %9 = vector.extract_strided_slice %4 {offsets = [0, 0], sizes = [8, 32], strides = [1, 1]} : vector<8x128xf32> to vector<8x32xf32>
    %10 = vector.extract_strided_slice %6 {offsets = [0, 0], sizes = [8, 32], strides = [1, 1]} : vector<8x128xf32> to vector<8x32xf32>
    %11 = vector.extract_strided_slice %8 {offsets = [0, 0], sizes = [8, 32], strides = [1, 1]} : vector<8x128xf32> to vector<8x32xf32>
    %cst_13 = arith.constant dense<0.000000e+00> : vector<8x8xf32>
    %12 = tpu.matmul %9, %10, %cst_13 {dimension_numbers = #tpu.dot_dimension_numbers<[1], [1], [0], [0], [0, 0, 1, 0], [], []>} : vector<8x32xf32>, vector<8x32xf32>, vector<8x8xf32> -> vector<8x8xf32>
    %cst_14 = arith.constant 0.176776692 : f32
    %13 = vector.broadcast %cst_14 : f32 to vector<8x8xf32>
    %14 = arith.mulf %12, %13 : vector<8x8xf32>
    %c0_i32 = arith.constant 0 : i32
    %15 = vector.broadcast %c0_i32 : i32 to vector<8x8xi32>
    %16 = arith.cmpi ne, %2, %15 : vector<8x8xi32>
    %cst_15 = arith.constant -1.000000e+30 : f32
    %17 = vector.broadcast %cst_15 : f32 to vector<8x8xf32>
    %18 = arith.select %16, %17, %14 : vector<8x8xi1>, vector<8x8xf32>
    %cst_16 = arith.constant dense<0xFF800000> : vector<8xf32>
    %19 = vector.multi_reduction <maximumf>, %18, %cst_16 [1] : vector<8x8xf32> to vector<8xf32>
    %20 = vector.shape_cast %19 : vector<8xf32> to vector<8x1xf32>
    %21 = vector.broadcast %20 : vector<8x1xf32> to vector<8x8xf32>
    %22 = arith.subf %18, %21 : vector<8x8xf32>
    %23 = math.exp %22 : vector<8x8xf32>
    %cst_17 = arith.constant dense<0.000000e+00> : vector<8xf32>
    %24 = vector.multi_reduction <add>, %23, %cst_17 [1] : vector<8x8xf32> to vector<8xf32>
    %25 = vector.shape_cast %24 : vector<8xf32> to vector<8x1xf32>
    %26 = vector.broadcast %25 : vector<8x1xf32> to vector<8x8xf32>
    %27 = arith.divf %23, %26 : vector<8x8xf32>
    %cst_18 = arith.constant dense<0.000000e+00> : vector<8x32xf32>
    %28 = tpu.matmul %27, %11, %cst_18 {dimension_numbers = #tpu.dot_dimension_numbers<[1], [0], [0], [1], [0, 0, 1, 1], [], []>} : vector<8x8xf32>, vector<8x32xf32>, vector<8x32xf32> -> vector<8x32xf32>
    %29 = vector.extract_strided_slice %4 {offsets = [0, 32], sizes = [8, 32], strides = [1, 1]} : vector<8x128xf32> to vector<8x32xf32>
    %30 = vector.extract_strided_slice %6 {offsets = [0, 32], sizes = [8, 32], strides = [1, 1]} : vector<8x128xf32> to vector<8x32xf32>
    %31 = vector.extract_strided_slice %8 {offsets = [0, 32], sizes = [8, 32], strides = [1, 1]} : vector<8x128xf32> to vector<8x32xf32>
    %cst_19 = arith.constant dense<0.000000e+00> : vector<8x8xf32>
    %32 = tpu.matmul %29, %30, %cst_19 {dimension_numbers = #tpu.dot_dimension_numbers<[1], [1], [0], [0], [0, 0, 1, 0], [], []>} : vector<8x32xf32>, vector<8x32xf32>, vector<8x8xf32> -> vector<8x8xf32>
    %cst_20 = arith.constant 0.176776692 : f32
    %33 = vector.broadcast %cst_20 : f32 to vector<8x8xf32>
    %34 = arith.mulf %32, %33 : vector<8x8xf32>
    %c0_i32_21 = arith.constant 0 : i32
    %35 = vector.broadcast %c0_i32_21 : i32 to vector<8x8xi32>
    %36 = arith.cmpi ne, %2, %35 : vector<8x8xi32>
    %cst_22 = arith.constant -1.000000e+30 : f32
    %37 = vector.broadcast %cst_22 : f32 to vector<8x8xf32>
    %38 = arith.select %36, %37, %34 : vector<8x8xi1>, vector<8x8xf32>
    %cst_23 = arith.constant dense<0xFF800000> : vector<8xf32>
    %39 = vector.multi_reduction <maximumf>, %38, %cst_23 [1] : vector<8x8xf32> to vector<8xf32>
    %40 = vector.shape_cast %39 : vector<8xf32> to vector<8x1xf32>
    %41 = vector.broadcast %40 : vector<8x1xf32> to vector<8x8xf32>
    %42 = arith.subf %38, %41 : vector<8x8xf32>
    %43 = math.exp %42 : vector<8x8xf32>
    %cst_24 = arith.constant dense<0.000000e+00> : vector<8xf32>
    %44 = vector.multi_reduction <add>, %43, %cst_24 [1] : vector<8x8xf32> to vector<8xf32>
    %45 = vector.shape_cast %44 : vector<8xf32> to vector<8x1xf32>
    %46 = vector.broadcast %45 : vector<8x1xf32> to vector<8x8xf32>
    %47 = arith.divf %43, %46 : vector<8x8xf32>
    %cst_25 = arith.constant dense<0.000000e+00> : vector<8x32xf32>
    %48 = tpu.matmul %47, %31, %cst_25 {dimension_numbers = #tpu.dot_dimension_numbers<[1], [0], [0], [1], [0, 0, 1, 1], [], []>} : vector<8x8xf32>, vector<8x32xf32>, vector<8x32xf32> -> vector<8x32xf32>
    %49 = vector.extract_strided_slice %4 {offsets = [0, 64], sizes = [8, 32], strides = [1, 1]} : vector<8x128xf32> to vector<8x32xf32>
    %50 = vector.extract_strided_slice %6 {offsets = [0, 64], sizes = [8, 32], strides = [1, 1]} : vector<8x128xf32> to vector<8x32xf32>
    %51 = vector.extract_strided_slice %8 {offsets = [0, 64], sizes = [8, 32], strides = [1, 1]} : vector<8x128xf32> to vector<8x32xf32>
    %cst_26 = arith.constant dense<0.000000e+00> : vector<8x8xf32>
    %52 = tpu.matmul %49, %50, %cst_26 {dimension_numbers = #tpu.dot_dimension_numbers<[1], [1], [0], [0], [0, 0, 1, 0], [], []>} : vector<8x32xf32>, vector<8x32xf32>, vector<8x8xf32> -> vector<8x8xf32>
    %cst_27 = arith.constant 0.176776692 : f32
    %53 = vector.broadcast %cst_27 : f32 to vector<8x8xf32>
    %54 = arith.mulf %52, %53 : vector<8x8xf32>
    %c0_i32_28 = arith.constant 0 : i32
    %55 = vector.broadcast %c0_i32_28 : i32 to vector<8x8xi32>
    %56 = arith.cmpi ne, %2, %55 : vector<8x8xi32>
    %cst_29 = arith.constant -1.000000e+30 : f32
    %57 = vector.broadcast %cst_29 : f32 to vector<8x8xf32>
    %58 = arith.select %56, %57, %54 : vector<8x8xi1>, vector<8x8xf32>
    %cst_30 = arith.constant dense<0xFF800000> : vector<8xf32>
    %59 = vector.multi_reduction <maximumf>, %58, %cst_30 [1] : vector<8x8xf32> to vector<8xf32>
    %60 = vector.shape_cast %59 : vector<8xf32> to vector<8x1xf32>
    %61 = vector.broadcast %60 : vector<8x1xf32> to vector<8x8xf32>
    %62 = arith.subf %58, %61 : vector<8x8xf32>
    %63 = math.exp %62 : vector<8x8xf32>
    %cst_31 = arith.constant dense<0.000000e+00> : vector<8xf32>
    %64 = vector.multi_reduction <add>, %63, %cst_31 [1] : vector<8x8xf32> to vector<8xf32>
    %65 = vector.shape_cast %64 : vector<8xf32> to vector<8x1xf32>
    %66 = vector.broadcast %65 : vector<8x1xf32> to vector<8x8xf32>
    %67 = arith.divf %63, %66 : vector<8x8xf32>
    %cst_32 = arith.constant dense<0.000000e+00> : vector<8x32xf32>
    %68 = tpu.matmul %67, %51, %cst_32 {dimension_numbers = #tpu.dot_dimension_numbers<[1], [0], [0], [1], [0, 0, 1, 1], [], []>} : vector<8x8xf32>, vector<8x32xf32>, vector<8x32xf32> -> vector<8x32xf32>
    %69 = vector.extract_strided_slice %4 {offsets = [0, 96], sizes = [8, 32], strides = [1, 1]} : vector<8x128xf32> to vector<8x32xf32>
    %70 = vector.extract_strided_slice %6 {offsets = [0, 96], sizes = [8, 32], strides = [1, 1]} : vector<8x128xf32> to vector<8x32xf32>
    %71 = vector.extract_strided_slice %8 {offsets = [0, 96], sizes = [8, 32], strides = [1, 1]} : vector<8x128xf32> to vector<8x32xf32>
    %cst_33 = arith.constant dense<0.000000e+00> : vector<8x8xf32>
    %72 = tpu.matmul %69, %70, %cst_33 {dimension_numbers = #tpu.dot_dimension_numbers<[1], [1], [0], [0], [0, 0, 1, 0], [], []>} : vector<8x32xf32>, vector<8x32xf32>, vector<8x8xf32> -> vector<8x8xf32>
    %cst_34 = arith.constant 0.176776692 : f32
    %73 = vector.broadcast %cst_34 : f32 to vector<8x8xf32>
    %74 = arith.mulf %72, %73 : vector<8x8xf32>
    %c0_i32_35 = arith.constant 0 : i32
    %75 = vector.broadcast %c0_i32_35 : i32 to vector<8x8xi32>
    %76 = arith.cmpi ne, %2, %75 : vector<8x8xi32>
    %cst_36 = arith.constant -1.000000e+30 : f32
    %77 = vector.broadcast %cst_36 : f32 to vector<8x8xf32>
    %78 = arith.select %76, %77, %74 : vector<8x8xi1>, vector<8x8xf32>
    %cst_37 = arith.constant dense<0xFF800000> : vector<8xf32>
    %79 = vector.multi_reduction <maximumf>, %78, %cst_37 [1] : vector<8x8xf32> to vector<8xf32>
    %80 = vector.shape_cast %79 : vector<8xf32> to vector<8x1xf32>
    %81 = vector.broadcast %80 : vector<8x1xf32> to vector<8x8xf32>
    %82 = arith.subf %78, %81 : vector<8x8xf32>
    %83 = math.exp %82 : vector<8x8xf32>
    %cst_38 = arith.constant dense<0.000000e+00> : vector<8xf32>
    %84 = vector.multi_reduction <add>, %83, %cst_38 [1] : vector<8x8xf32> to vector<8xf32>
    %85 = vector.shape_cast %84 : vector<8xf32> to vector<8x1xf32>
    %86 = vector.broadcast %85 : vector<8x1xf32> to vector<8x8xf32>
    %87 = arith.divf %83, %86 : vector<8x8xf32>
    %cst_39 = arith.constant dense<0.000000e+00> : vector<8x32xf32>
    %88 = tpu.matmul %87, %71, %cst_39 {dimension_numbers = #tpu.dot_dimension_numbers<[1], [0], [0], [1], [0, 0, 1, 1], [], []>} : vector<8x8xf32>, vector<8x32xf32>, vector<8x32xf32> -> vector<8x32xf32>
    %89 = tpu.concatenate %28, %48, %68, %88 in 1 : vector<8x32xf32>, vector<8x32xf32>, vector<8x32xf32>, vector<8x32xf32> -> vector<8x128xf32>
    %90 = tpu.concatenate %27, %47, %67, %87 in 1 : vector<8x8xf32>, vector<8x8xf32>, vector<8x8xf32>, vector<8x8xf32> -> vector<8x32xf32>
    %c0_40 = arith.constant 0 : index
    %c0_41 = arith.constant 0 : index
    %91 = vector.load %arg7[%c0_40, %c0_41] : memref<128x32xf32, #tpu.memory_space<vmem>>, vector<128x32xf32>
    %cst_42 = arith.constant dense<0.000000e+00> : vector<8x32xf32>
    %92 = tpu.matmul %89, %91, %cst_42 {dimension_numbers = #tpu.dot_dimension_numbers<[1], [0], [0], [1], [0, 0, 1, 1], [], []>} : vector<8x128xf32>, vector<128x32xf32>, vector<8x32xf32> -> vector<8x32xf32>
    %c0_43 = arith.constant 0 : index
    %c0_44 = arith.constant 0 : index
    %93 = vector.load %arg8[%c0_43, %c0_44] : memref<1x32xf32, #tpu.memory_space<vmem>>, vector<1x32xf32>
    %94 = vector.broadcast %93 : vector<1x32xf32> to vector<8x32xf32>
    %95 = arith.addf %92, %94 : vector<8x32xf32>
    %96 = arith.addf %95, %0 : vector<8x32xf32>
    %c0_45 = arith.constant 0 : index
    %c0_46 = arith.constant 0 : index
    %97 = vector.load %arg9[%c0_45, %c0_46] : memref<1x32xf32, #tpu.memory_space<vmem>>, vector<1x32xf32>
    %c0_47 = arith.constant 0 : index
    %c0_48 = arith.constant 0 : index
    %98 = vector.load %arg10[%c0_47, %c0_48] : memref<1x32xf32, #tpu.memory_space<vmem>>, vector<1x32xf32>
    %cst_49 = arith.constant dense<0.000000e+00> : vector<8xf32>
    %99 = vector.multi_reduction <add>, %96, %cst_49 [1] : vector<8x32xf32> to vector<8xf32>
    %100 = vector.shape_cast %99 : vector<8xf32> to vector<8x1xf32>
    %cst_50 = arith.constant 3.200000e+01 : f32
    %101 = vector.broadcast %cst_50 : f32 to vector<8x1xf32>
    %102 = arith.divf %100, %101 : vector<8x1xf32>
    %103 = vector.broadcast %102 : vector<8x1xf32> to vector<8x32xf32>
    %104 = arith.subf %96, %103 : vector<8x32xf32>
    %105 = arith.mulf %104, %104 : vector<8x32xf32>
    %cst_51 = arith.constant dense<0.000000e+00> : vector<8xf32>
    %106 = vector.multi_reduction <add>, %105, %cst_51 [1] : vector<8x32xf32> to vector<8xf32>
    %107 = vector.shape_cast %106 : vector<8xf32> to vector<8x1xf32>
    %cst_52 = arith.constant 3.200000e+01 : f32
    %108 = vector.broadcast %cst_52 : f32 to vector<8x1xf32>
    %109 = arith.divf %107, %108 : vector<8x1xf32>
    %110 = vector.broadcast %102 : vector<8x1xf32> to vector<8x32xf32>
    %111 = arith.subf %96, %110 : vector<8x32xf32>
    %cst_53 = arith.constant 9.99999974E-6 : f32
    %112 = vector.broadcast %cst_53 : f32 to vector<8x1xf32>
    %113 = arith.addf %109, %112 : vector<8x1xf32>
    %114 = math.rsqrt %113 : vector<8x1xf32>
    %115 = vector.broadcast %114 : vector<8x1xf32> to vector<8x32xf32>
    %116 = arith.mulf %111, %115 : vector<8x32xf32>
    %117 = vector.broadcast %97 : vector<1x32xf32> to vector<8x32xf32>
    %118 = arith.mulf %116, %117 : vector<8x32xf32>
    %119 = vector.broadcast %98 : vector<1x32xf32> to vector<8x32xf32>
    %120 = arith.addf %118, %119 : vector<8x32xf32>
    %c0_54 = arith.constant 0 : index
    %c0_55 = arith.constant 0 : index
    %121 = vector.load %arg25[%c0_54, %c0_55] : memref<8x32xf32, #tpu.memory_space<vmem>>, vector<8x32xf32>
    tpu.vector_store %arg25[%c0_54, %c0_55], %90 {strides = array<i32>} : memref<8x32xf32, #tpu.memory_space<vmem>>, vector<8x32xf32>,
    %c0_56 = arith.constant 0 : index
    %c0_57 = arith.constant 0 : index
    %122 = vector.load %arg3[%c0_56, %c0_57] : memref<8x8xi32, #tpu.memory_space<vmem>>, vector<8x8xi32>
    %c0_58 = arith.constant 0 : index
    %c0_59 = arith.constant 0 : index
    %123 = vector.load %arg11[%c0_58, %c0_59] : memref<32x128xf32, #tpu.memory_space<vmem>>, vector<32x128xf32>
    %cst_60 = arith.constant dense<0.000000e+00> : vector<8x128xf32>
    %124 = tpu.matmul %120, %123, %cst_60 {dimension_numbers = #tpu.dot_dimension_numbers<[1], [0], [0], [1], [0, 0, 1, 1], [], []>} : vector<8x32xf32>, vector<32x128xf32>, vector<8x128xf32> -> vector<8x128xf32>
    %c0_61 = arith.constant 0 : index
    %c0_62 = arith.constant 0 : index
    %125 = vector.load %arg12[%c0_61, %c0_62] : memref<32x128xf32, #tpu.memory_space<vmem>>, vector<32x128xf32>
    %cst_63 = arith.constant dense<0.000000e+00> : vector<8x128xf32>
    %126 = tpu.matmul %1, %125, %cst_63 {dimension_numbers = #tpu.dot_dimension_numbers<[1], [0], [0], [1], [0, 0, 1, 1], [], []>} : vector<8x32xf32>, vector<32x128xf32>, vector<8x128xf32> -> vector<8x128xf32>
    %c0_64 = arith.constant 0 : index
    %c0_65 = arith.constant 0 : index
    %127 = vector.load %arg13[%c0_64, %c0_65] : memref<32x128xf32, #tpu.memory_space<vmem>>, vector<32x128xf32>
    %cst_66 = arith.constant dense<0.000000e+00> : vector<8x128xf32>
    %128 = tpu.matmul %1, %127, %cst_66 {dimension_numbers = #tpu.dot_dimension_numbers<[1], [0], [0], [1], [0, 0, 1, 1], [], []>} : vector<8x32xf32>, vector<32x128xf32>, vector<8x128xf32> -> vector<8x128xf32>
    %129 = vector.extract_strided_slice %124 {offsets = [0, 0], sizes = [8, 32], strides = [1, 1]} : vector<8x128xf32> to vector<8x32xf32>
    %130 = vector.extract_strided_slice %126 {offsets = [0, 0], sizes = [8, 32], strides = [1, 1]} : vector<8x128xf32> to vector<8x32xf32>
    %131 = vector.extract_strided_slice %128 {offsets = [0, 0], sizes = [8, 32], strides = [1, 1]} : vector<8x128xf32> to vector<8x32xf32>
    %cst_67 = arith.constant dense<0.000000e+00> : vector<8x8xf32>
    %132 = tpu.matmul %129, %130, %cst_67 {dimension_numbers = #tpu.dot_dimension_numbers<[1], [1], [0], [0], [0, 0, 1, 0], [], []>} : vector<8x32xf32>, vector<8x32xf32>, vector<8x8xf32> -> vector<8x8xf32>
    %cst_68 = arith.constant 0.176776692 : f32
    %133 = vector.broadcast %cst_68 : f32 to vector<8x8xf32>
    %134 = arith.mulf %132, %133 : vector<8x8xf32>
    %c0_i32_69 = arith.constant 0 : i32
    %135 = vector.broadcast %c0_i32_69 : i32 to vector<8x8xi32>
    %136 = arith.cmpi ne, %122, %135 : vector<8x8xi32>
    %cst_70 = arith.constant -1.000000e+30 : f32
    %137 = vector.broadcast %cst_70 : f32 to vector<8x8xf32>
    %138 = arith.select %136, %137, %134 : vector<8x8xi1>, vector<8x8xf32>
    %cst_71 = arith.constant dense<0xFF800000> : vector<8xf32>
    %139 = vector.multi_reduction <maximumf>, %138, %cst_71 [1] : vector<8x8xf32> to vector<8xf32>
    %140 = vector.shape_cast %139 : vector<8xf32> to vector<8x1xf32>
    %141 = vector.broadcast %140 : vector<8x1xf32> to vector<8x8xf32>
    %142 = arith.subf %138, %141 : vector<8x8xf32>
    %143 = math.exp %142 : vector<8x8xf32>
    %cst_72 = arith.constant dense<0.000000e+00> : vector<8xf32>
    %144 = vector.multi_reduction <add>, %143, %cst_72 [1] : vector<8x8xf32> to vector<8xf32>
    %145 = vector.shape_cast %144 : vector<8xf32> to vector<8x1xf32>
    %146 = vector.broadcast %145 : vector<8x1xf32> to vector<8x8xf32>
    %147 = arith.divf %143, %146 : vector<8x8xf32>
    %cst_73 = arith.constant dense<0.000000e+00> : vector<8x32xf32>
    %148 = tpu.matmul %147, %131, %cst_73 {dimension_numbers = #tpu.dot_dimension_numbers<[1], [0], [0], [1], [0, 0, 1, 1], [], []>} : vector<8x8xf32>, vector<8x32xf32>, vector<8x32xf32> -> vector<8x32xf32>
    %149 = vector.extract_strided_slice %124 {offsets = [0, 32], sizes = [8, 32], strides = [1, 1]} : vector<8x128xf32> to vector<8x32xf32>
    %150 = vector.extract_strided_slice %126 {offsets = [0, 32], sizes = [8, 32], strides = [1, 1]} : vector<8x128xf32> to vector<8x32xf32>
    %151 = vector.extract_strided_slice %128 {offsets = [0, 32], sizes = [8, 32], strides = [1, 1]} : vector<8x128xf32> to vector<8x32xf32>
    %cst_74 = arith.constant dense<0.000000e+00> : vector<8x8xf32>
    %152 = tpu.matmul %149, %150, %cst_74 {dimension_numbers = #tpu.dot_dimension_numbers<[1], [1], [0], [0], [0, 0, 1, 0], [], []>} : vector<8x32xf32>, vector<8x32xf32>, vector<8x8xf32> -> vector<8x8xf32>
    %cst_75 = arith.constant 0.176776692 : f32
    %153 = vector.broadcast %cst_75 : f32 to vector<8x8xf32>
    %154 = arith.mulf %152, %153 : vector<8x8xf32>
    %c0_i32_76 = arith.constant 0 : i32
    %155 = vector.broadcast %c0_i32_76 : i32 to vector<8x8xi32>
    %156 = arith.cmpi ne, %122, %155 : vector<8x8xi32>
    %cst_77 = arith.constant -1.000000e+30 : f32
    %157 = vector.broadcast %cst_77 : f32 to vector<8x8xf32>
    %158 = arith.select %156, %157, %154 : vector<8x8xi1>, vector<8x8xf32>
    %cst_78 = arith.constant dense<0xFF800000> : vector<8xf32>
    %159 = vector.multi_reduction <maximumf>, %158, %cst_78 [1] : vector<8x8xf32> to vector<8xf32>
    %160 = vector.shape_cast %159 : vector<8xf32> to vector<8x1xf32>
    %161 = vector.broadcast %160 : vector<8x1xf32> to vector<8x8xf32>
    %162 = arith.subf %158, %161 : vector<8x8xf32>
    %163 = math.exp %162 : vector<8x8xf32>
    %cst_79 = arith.constant dense<0.000000e+00> : vector<8xf32>
    %164 = vector.multi_reduction <add>, %163, %cst_79 [1] : vector<8x8xf32> to vector<8xf32>
    %165 = vector.shape_cast %164 : vector<8xf32> to vector<8x1xf32>
    %166 = vector.broadcast %165 : vector<8x1xf32> to vector<8x8xf32>
    %167 = arith.divf %163, %166 : vector<8x8xf32>
    %cst_80 = arith.constant dense<0.000000e+00> : vector<8x32xf32>
    %168 = tpu.matmul %167, %151, %cst_80 {dimension_numbers = #tpu.dot_dimension_numbers<[1], [0], [0], [1], [0, 0, 1, 1], [], []>} : vector<8x8xf32>, vector<8x32xf32>, vector<8x32xf32> -> vector<8x32xf32>
    %169 = vector.extract_strided_slice %124 {offsets = [0, 64], sizes = [8, 32], strides = [1, 1]} : vector<8x128xf32> to vector<8x32xf32>
    %170 = vector.extract_strided_slice %126 {offsets = [0, 64], sizes = [8, 32], strides = [1, 1]} : vector<8x128xf32> to vector<8x32xf32>
    %171 = vector.extract_strided_slice %128 {offsets = [0, 64], sizes = [8, 32], strides = [1, 1]} : vector<8x128xf32> to vector<8x32xf32>
    %cst_81 = arith.constant dense<0.000000e+00> : vector<8x8xf32>
    %172 = tpu.matmul %169, %170, %cst_81 {dimension_numbers = #tpu.dot_dimension_numbers<[1], [1], [0], [0], [0, 0, 1, 0], [], []>} : vector<8x32xf32>, vector<8x32xf32>, vector<8x8xf32> -> vector<8x8xf32>
    %cst_82 = arith.constant 0.176776692 : f32
    %173 = vector.broadcast %cst_82 : f32 to vector<8x8xf32>
    %174 = arith.mulf %172, %173 : vector<8x8xf32>
    %c0_i32_83 = arith.constant 0 : i32
    %175 = vector.broadcast %c0_i32_83 : i32 to vector<8x8xi32>
    %176 = arith.cmpi ne, %122, %175 : vector<8x8xi32>
    %cst_84 = arith.constant -1.000000e+30 : f32
    %177 = vector.broadcast %cst_84 : f32 to vector<8x8xf32>
    %178 = arith.select %176, %177, %174 : vector<8x8xi1>, vector<8x8xf32>
    %cst_85 = arith.constant dense<0xFF800000> : vector<8xf32>
    %179 = vector.multi_reduction <maximumf>, %178, %cst_85 [1] : vector<8x8xf32> to vector<8xf32>
    %180 = vector.shape_cast %179 : vector<8xf32> to vector<8x1xf32>
    %181 = vector.broadcast %180 : vector<8x1xf32> to vector<8x8xf32>
    %182 = arith.subf %178, %181 : vector<8x8xf32>
    %183 = math.exp %182 : vector<8x8xf32>
    %cst_86 = arith.constant dense<0.000000e+00> : vector<8xf32>
    %184 = vector.multi_reduction <add>, %183, %cst_86 [1] : vector<8x8xf32> to vector<8xf32>
    %185 = vector.shape_cast %184 : vector<8xf32> to vector<8x1xf32>
    %186 = vector.broadcast %185 : vector<8x1xf32> to vector<8x8xf32>
    %187 = arith.divf %183, %186 : vector<8x8xf32>
    %cst_87 = arith.constant dense<0.000000e+00> : vector<8x32xf32>
    %188 = tpu.matmul %187, %171, %cst_87 {dimension_numbers = #tpu.dot_dimension_numbers<[1], [0], [0], [1], [0, 0, 1, 1], [], []>} : vector<8x8xf32>, vector<8x32xf32>, vector<8x32xf32> -> vector<8x32xf32>
    %189 = vector.extract_strided_slice %124 {offsets = [0, 96], sizes = [8, 32], strides = [1, 1]} : vector<8x128xf32> to vector<8x32xf32>
    %190 = vector.extract_strided_slice %126 {offsets = [0, 96], sizes = [8, 32], strides = [1, 1]} : vector<8x128xf32> to vector<8x32xf32>
    %191 = vector.extract_strided_slice %128 {offsets = [0, 96], sizes = [8, 32], strides = [1, 1]} : vector<8x128xf32> to vector<8x32xf32>
    %cst_88 = arith.constant dense<0.000000e+00> : vector<8x8xf32>
    %192 = tpu.matmul %189, %190, %cst_88 {dimension_numbers = #tpu.dot_dimension_numbers<[1], [1], [0], [0], [0, 0, 1, 0], [], []>} : vector<8x32xf32>, vector<8x32xf32>, vector<8x8xf32> -> vector<8x8xf32>
    %cst_89 = arith.constant 0.176776692 : f32
    %193 = vector.broadcast %cst_89 : f32 to vector<8x8xf32>
    %194 = arith.mulf %192, %193 : vector<8x8xf32>
    %c0_i32_90 = arith.constant 0 : i32
    %195 = vector.broadcast %c0_i32_90 : i32 to vector<8x8xi32>
    %196 = arith.cmpi ne, %122, %195 : vector<8x8xi32>
    %cst_91 = arith.constant -1.000000e+30 : f32
    %197 = vector.broadcast %cst_91 : f32 to vector<8x8xf32>
    %198 = arith.select %196, %197, %194 : vector<8x8xi1>, vector<8x8xf32>
    %cst_92 = arith.constant dense<0xFF800000> : vector<8xf32>
    %199 = vector.multi_reduction <maximumf>, %198, %cst_92 [1] : vector<8x8xf32> to vector<8xf32>
    %200 = vector.shape_cast %199 : vector<8xf32> to vector<8x1xf32>
    %201 = vector.broadcast %200 : vector<8x1xf32> to vector<8x8xf32>
    %202 = arith.subf %198, %201 : vector<8x8xf32>
    %203 = math.exp %202 : vector<8x8xf32>
    %cst_93 = arith.constant dense<0.000000e+00> : vector<8xf32>
    %204 = vector.multi_reduction <add>, %203, %cst_93 [1] : vector<8x8xf32> to vector<8xf32>
    %205 = vector.shape_cast %204 : vector<8xf32> to vector<8x1xf32>
    %206 = vector.broadcast %205 : vector<8x1xf32> to vector<8x8xf32>
    %207 = arith.divf %203, %206 : vector<8x8xf32>
    %cst_94 = arith.constant dense<0.000000e+00> : vector<8x32xf32>
    %208 = tpu.matmul %207, %191, %cst_94 {dimension_numbers = #tpu.dot_dimension_numbers<[1], [0], [0], [1], [0, 0, 1, 1], [], []>} : vector<8x8xf32>, vector<8x32xf32>, vector<8x32xf32> -> vector<8x32xf32>
    %209 = tpu.concatenate %148, %168, %188, %208 in 1 : vector<8x32xf32>, vector<8x32xf32>, vector<8x32xf32>, vector<8x32xf32> -> vector<8x128xf32>
    %210 = tpu.concatenate %147, %167, %187, %207 in 1 : vector<8x8xf32>, vector<8x8xf32>, vector<8x8xf32>, vector<8x8xf32> -> vector<8x32xf32>
    %c0_95 = arith.constant 0 : index
    %c0_96 = arith.constant 0 : index
    %211 = vector.load %arg14[%c0_95, %c0_96] : memref<128x32xf32, #tpu.memory_space<vmem>>, vector<128x32xf32>
    %cst_97 = arith.constant dense<0.000000e+00> : vector<8x32xf32>
    %212 = tpu.matmul %209, %211, %cst_97 {dimension_numbers = #tpu.dot_dimension_numbers<[1], [0], [0], [1], [0, 0, 1, 1], [], []>} : vector<8x128xf32>, vector<128x32xf32>, vector<8x32xf32> -> vector<8x32xf32>
    %c0_98 = arith.constant 0 : index
    %c0_99 = arith.constant 0 : index
    %213 = vector.load %arg15[%c0_98, %c0_99] : memref<1x32xf32, #tpu.memory_space<vmem>>, vector<1x32xf32>
    %214 = vector.broadcast %213 : vector<1x32xf32> to vector<8x32xf32>
    %215 = arith.addf %212, %214 : vector<8x32xf32>
    %216 = arith.addf %215, %120 : vector<8x32xf32>
    %c0_100 = arith.constant 0 : index
    %c0_101 = arith.constant 0 : index
    %217 = vector.load %arg16[%c0_100, %c0_101] : memref<1x32xf32, #tpu.memory_space<vmem>>, vector<1x32xf32>
    %c0_102 = arith.constant 0 : index
    %c0_103 = arith.constant 0 : index
    %218 = vector.load %arg17[%c0_102, %c0_103] : memref<1x32xf32, #tpu.memory_space<vmem>>, vector<1x32xf32>
    %cst_104 = arith.constant dense<0.000000e+00> : vector<8xf32>
    %219 = vector.multi_reduction <add>, %216, %cst_104 [1] : vector<8x32xf32> to vector<8xf32>
    %220 = vector.shape_cast %219 : vector<8xf32> to vector<8x1xf32>
    %cst_105 = arith.constant 3.200000e+01 : f32
    %221 = vector.broadcast %cst_105 : f32 to vector<8x1xf32>
    %222 = arith.divf %220, %221 : vector<8x1xf32>
    %223 = vector.broadcast %222 : vector<8x1xf32> to vector<8x32xf32>
    %224 = arith.subf %216, %223 : vector<8x32xf32>
    %225 = arith.mulf %224, %224 : vector<8x32xf32>
    %cst_106 = arith.constant dense<0.000000e+00> : vector<8xf32>
    %226 = vector.multi_reduction <add>, %225, %cst_106 [1] : vector<8x32xf32> to vector<8xf32>
    %227 = vector.shape_cast %226 : vector<8xf32> to vector<8x1xf32>
    %cst_107 = arith.constant 3.200000e+01 : f32
    %228 = vector.broadcast %cst_107 : f32 to vector<8x1xf32>
    %229 = arith.divf %227, %228 : vector<8x1xf32>
    %230 = vector.broadcast %222 : vector<8x1xf32> to vector<8x32xf32>
    %231 = arith.subf %216, %230 : vector<8x32xf32>
    %cst_108 = arith.constant 9.99999974E-6 : f32
    %232 = vector.broadcast %cst_108 : f32 to vector<8x1xf32>
    %233 = arith.addf %229, %232 : vector<8x1xf32>
    %234 = math.rsqrt %233 : vector<8x1xf32>
    %235 = vector.broadcast %234 : vector<8x1xf32> to vector<8x32xf32>
    %236 = arith.mulf %231, %235 : vector<8x32xf32>
    %237 = vector.broadcast %217 : vector<1x32xf32> to vector<8x32xf32>
    %238 = arith.mulf %236, %237 : vector<8x32xf32>
    %239 = vector.broadcast %218 : vector<1x32xf32> to vector<8x32xf32>
    %240 = arith.addf %238, %239 : vector<8x32xf32>
    %c0_109 = arith.constant 0 : index
    %c0_110 = arith.constant 0 : index
    %241 = vector.load %arg26[%c0_109, %c0_110] : memref<8x32xf32, #tpu.memory_space<vmem>>, vector<8x32xf32>
    tpu.vector_store %arg26[%c0_109, %c0_110], %210 {strides = array<i32>} : memref<8x32xf32, #tpu.memory_space<vmem>>, vector<8x32xf32>,
    %c0_111 = arith.constant 0 : index
    %c0_112 = arith.constant 0 : index
    %242 = vector.load %arg18[%c0_111, %c0_112] : memref<32x64xf32, #tpu.memory_space<vmem>>, vector<32x64xf32>
    %cst_113 = arith.constant dense<0.000000e+00> : vector<8x64xf32>
    %243 = tpu.matmul %240, %242, %cst_113 {dimension_numbers = #tpu.dot_dimension_numbers<[1], [0], [0], [1], [0, 0, 1, 1], [], []>} : vector<8x32xf32>, vector<32x64xf32>, vector<8x64xf32> -> vector<8x64xf32>
    %c0_114 = arith.constant 0 : index
    %c0_115 = arith.constant 0 : index
    %244 = vector.load %arg19[%c0_114, %c0_115] : memref<1x64xf32, #tpu.memory_space<vmem>>, vector<1x64xf32>
    %245 = vector.broadcast %244 : vector<1x64xf32> to vector<8x64xf32>
    %246 = arith.addf %243, %245 : vector<8x64xf32>
    %cst_116 = arith.constant 0.000000e+00 : f32
    %247 = vector.broadcast %cst_116 : f32 to vector<8x64xf32>
    %248 = arith.maximumf %246, %247 : vector<8x64xf32>
    %c0_117 = arith.constant 0 : index
    %c0_118 = arith.constant 0 : index
    %249 = vector.load %arg20[%c0_117, %c0_118] : memref<64x32xf32, #tpu.memory_space<vmem>>, vector<64x32xf32>
    %cst_119 = arith.constant dense<0.000000e+00> : vector<8x32xf32>
    %250 = tpu.matmul %248, %249, %cst_119 {dimension_numbers = #tpu.dot_dimension_numbers<[1], [0], [0], [1], [0, 0, 1, 1], [], []>} : vector<8x64xf32>, vector<64x32xf32>, vector<8x32xf32> -> vector<8x32xf32>
    %c0_120 = arith.constant 0 : index
    %c0_121 = arith.constant 0 : index
    %251 = vector.load %arg21[%c0_120, %c0_121] : memref<1x32xf32, #tpu.memory_space<vmem>>, vector<1x32xf32>
    %252 = vector.broadcast %251 : vector<1x32xf32> to vector<8x32xf32>
    %253 = arith.addf %250, %252 : vector<8x32xf32>
    %254 = arith.addf %253, %240 : vector<8x32xf32>
    %c0_122 = arith.constant 0 : index
    %c0_123 = arith.constant 0 : index
    %255 = vector.load %arg22[%c0_122, %c0_123] : memref<1x32xf32, #tpu.memory_space<vmem>>, vector<1x32xf32>
    %c0_124 = arith.constant 0 : index
    %c0_125 = arith.constant 0 : index
    %256 = vector.load %arg23[%c0_124, %c0_125] : memref<1x32xf32, #tpu.memory_space<vmem>>, vector<1x32xf32>
    %cst_126 = arith.constant dense<0.000000e+00> : vector<8xf32>
    %257 = vector.multi_reduction <add>, %254, %cst_126 [1] : vector<8x32xf32> to vector<8xf32>
    %258 = vector.shape_cast %257 : vector<8xf32> to vector<8x1xf32>
    %cst_127 = arith.constant 3.200000e+01 : f32
    %259 = vector.broadcast %cst_127 : f32 to vector<8x1xf32>
    %260 = arith.divf %258, %259 : vector<8x1xf32>
    %261 = vector.broadcast %260 : vector<8x1xf32> to vector<8x32xf32>
    %262 = arith.subf %254, %261 : vector<8x32xf32>
    %263 = arith.mulf %262, %262 : vector<8x32xf32>
    %cst_128 = arith.constant dense<0.000000e+00> : vector<8xf32>
    %264 = vector.multi_reduction <add>, %263, %cst_128 [1] : vector<8x32xf32> to vector<8xf32>
    %265 = vector.shape_cast %264 : vector<8xf32> to vector<8x1xf32>
    %cst_129 = arith.constant 3.200000e+01 : f32
    %266 = vector.broadcast %cst_129 : f32 to vector<8x1xf32>
    %267 = arith.divf %265, %266 : vector<8x1xf32>
    %268 = vector.broadcast %260 : vector<8x1xf32> to vector<8x32xf32>
    %269 = arith.subf %254, %268 : vector<8x32xf32>
    %cst_130 = arith.constant 9.99999974E-6 : f32
    %270 = vector.broadcast %cst_130 : f32 to vector<8x1xf32>
    %271 = arith.addf %267, %270 : vector<8x1xf32>
    %272 = math.rsqrt %271 : vector<8x1xf32>
    %273 = vector.broadcast %272 : vector<8x1xf32> to vector<8x32xf32>
    %274 = arith.mulf %269, %273 : vector<8x32xf32>
    %275 = vector.broadcast %255 : vector<1x32xf32> to vector<8x32xf32>
    %276 = arith.mulf %274, %275 : vector<8x32xf32>
    %277 = vector.broadcast %256 : vector<1x32xf32> to vector<8x32xf32>
    %278 = arith.addf %276, %277 : vector<8x32xf32>
    %c0_131 = arith.constant 0 : index
    %c0_132 = arith.constant 0 : index
    %279 = vector.load %arg24[%c0_131, %c0_132] : memref<8x32xf32, #tpu.memory_space<vmem>>, vector<8x32xf32>
    tpu.vector_store %arg24[%c0_131, %c0_132], %278 {strides = array<i32>} : memref<8x32xf32, #tpu.memory_space<vmem>>, vector<8x32xf32>,
    return
  }
}

</mosaic_0001>

<llo_original>
// kernel: tpu_custom_call.1
$region0: #{tpu_custom_call.1}
  #allocation0 [shape = 'u32[]', space=smem, size = 0x4, offset = 0x4, fixed_abs, tag = 'smem constant byte address 0x4 - core index']
  #allocation1 [shape = 'u32[144,128]{1,0:T(1,128)}', space=vmem, size = 0x12000, scoped, tag = 'internal scratch']
  %s0 = inlined_call_operand.vmem [shape: f32[8,32], index: 0, kind: input, shape index: {}]
  %s1 = inlined_call_operand.vmem [shape: f32[8,32], index: 1, kind: input, shape index: {}]
  %s2 = inlined_call_operand.vmem [shape: s32[8,8], index: 2, kind: input, shape index: {}]
  %s3 = inlined_call_operand.vmem [shape: s32[8,8], index: 3, kind: input, shape index: {}]
  %s4 = inlined_call_operand.vmem [shape: f32[32,128], index: 4, kind: input, shape index: {}]
  %s5 = inlined_call_operand.vmem [shape: f32[32,128], index: 5, kind: input, shape index: {}]
  %s6 = inlined_call_operand.vmem [shape: f32[32,128], index: 6, kind: input, shape index: {}]
  %s7 = inlined_call_operand.vmem [shape: f32[128,32], index: 7, kind: input, shape index: {}]
  %s8 = inlined_call_operand.vmem [shape: f32[1,32], index: 8, kind: input, shape index: {}]
  %s9 = inlined_call_operand.vmem [shape: f32[1,32], index: 9, kind: input, shape index: {}]
  %s10 = inlined_call_operand.vmem [shape: f32[1,32], index: 10, kind: input, shape index: {}]
  %s11 = inlined_call_operand.vmem [shape: f32[32,128], index: 11, kind: input, shape index: {}]
  %s12 = inlined_call_operand.vmem [shape: f32[32,128], index: 12, kind: input, shape index: {}]
  %s13 = inlined_call_operand.vmem [shape: f32[32,128], index: 13, kind: input, shape index: {}]
  %s14 = inlined_call_operand.vmem [shape: f32[128,32], index: 14, kind: input, shape index: {}]
  %s15 = inlined_call_operand.vmem [shape: f32[1,32], index: 15, kind: input, shape index: {}]
  %s16 = inlined_call_operand.vmem [shape: f32[1,32], index: 16, kind: input, shape index: {}]
  %s17 = inlined_call_operand.vmem [shape: f32[1,32], index: 17, kind: input, shape index: {}]
  %s18 = inlined_call_operand.vmem [shape: f32[32,64], index: 18, kind: input, shape index: {}]
  %s19 = inlined_call_operand.vmem [shape: f32[1,64], index: 19, kind: input, shape index: {}]
  %s20 = inlined_call_operand.vmem [shape: f32[64,32], index: 20, kind: input, shape index: {}]
  %s21 = inlined_call_operand.vmem [shape: f32[1,32], index: 21, kind: input, shape index: {}]
  %s22 = inlined_call_operand.vmem [shape: f32[1,32], index: 22, kind: input, shape index: {}]
  %s23 = inlined_call_operand.vmem [shape: f32[1,32], index: 23, kind: input, shape index: {}]
  %s24 = inlined_call_operand.hbm [shape: f32[8,32], index: 24, kind: output, shape index: {0}]
  %s25 = inlined_call_operand.hbm [shape: f32[8,32], index: 25, kind: output, shape index: {1}]
  %s26 = inlined_call_operand.hbm [shape: f32[8,32], index: 26, kind: output, shape index: {2}]
  %27 = xla_tuple %s24, %s25, %s26
  %s28 = sld [smem:[#allocation0]]
  $region122: #{tpu_custom_call.1} parent=0
    _
  %s30 = ssub.s32 1, %s28
  %s31 = scalar_select 0, %s30, %s28
  $region1: #{tpu_custom_call.1} parent=0
    #allocation2 [shape = 'u8[4096]{0}', space=vmem, size = 0x1000, scoped, tag = 'output window, operand 0, single buffered']
    #allocation3 [shape = 's32[1]{0}', space=sflag, size = 0x4, scoped, tag = 'scoped memory for tpu_custom_call.1']
    #allocation4 [shape = 'u8[4096]{0}', space=vmem, size = 0x1000, scoped, tag = 'output window, operand 1, single buffered']
    #allocation5 [shape = 's32[1]{0}', space=sflag, size = 0x4, scoped, tag = 'scoped memory for tpu_custom_call.1']
    #allocation6 [shape = 'u8[4096]{0}', space=vmem, size = 0x1000, scoped, tag = 'output window, operand 2, single buffered']
    %32 = vsyncpa [#allocation3], 0
    %33 = vsyncpa [#allocation5], 0
    // Predicated region
    $region2: #{tpu_custom_call.1} parent=1 // pred_check
      _
    $region3: #{tpu_custom_call.1} parent=1 // pred_check_branch
      %35 = sbr.rel (0) target = $region5
    $region4: #{tpu_custom_call.1} parent=1 // pred_region
      _
    $region5: #{tpu_custom_call.1} parent=1 // pred_fallthru
      _
    // Predicated region
    $region6: #{tpu_custom_call.1} parent=1 // pred_check
      _
    $region7: #{tpu_custom_call.1} parent=1 // pred_check_branch
      %37 = sbr.rel (0) target = $region9
    $region8: #{tpu_custom_call.1} parent=1 // pred_region
      _
    $region9: #{tpu_custom_call.1} parent=1 // pred_fallthru
      _
    // Predicated region
    $region10: #{tpu_custom_call.1} parent=1 // pred_check
      _
    $region11: #{tpu_custom_call.1} parent=1 // pred_check_branch
      %39 = sbr.rel (0) target = $region13
    $region12: #{tpu_custom_call.1} parent=1 // pred_region
      _
    $region13: #{tpu_custom_call.1} parent=1 // pred_fallthru
      _
    // Predicated region
    $region14: #{tpu_custom_call.1} parent=1 // pred_check
      _
    $region15: #{tpu_custom_call.1} parent=1 // pred_check_branch
      %41 = sbr.rel (0) target = $region17
    $region16: #{tpu_custom_call.1} parent=1 // pred_region
      _
    $region17: #{tpu_custom_call.1} parent=1 // pred_fallthru
      _
    // Predicated region
    $region18: #{tpu_custom_call.1} parent=1 // pred_check
      _
    $region19: #{tpu_custom_call.1} parent=1 // pred_check_branch
      %43 = sbr.rel (0) target = $region21
    $region20: #{tpu_custom_call.1} parent=1 // pred_region
      _
    $region21: #{tpu_custom_call.1} parent=1 // pred_fallthru
      _
    // Predicated region
    $region22: #{tpu_custom_call.1} parent=1 // pred_check
      _
    $region23: #{tpu_custom_call.1} parent=1 // pred_check_branch
      %45 = sbr.rel (0) target = $region25
    $region24: #{tpu_custom_call.1} parent=1 // pred_region
      _
    $region25: #{tpu_custom_call.1} parent=1 // pred_fallthru
      _
    // Predicated region
    $region26: #{tpu_custom_call.1} parent=1 // pred_check
      _
    $region27: #{tpu_custom_call.1} parent=1 // pred_check_branch
      %47 = sbr.rel (0) target = $region29
    $region28: #{tpu_custom_call.1} parent=1 // pred_region
      _
    $region29: #{tpu_custom_call.1} parent=1 // pred_fallthru
      _
    // Predicated region
    $region30: #{tpu_custom_call.1} parent=1 // pred_check
      _
    $region31: #{tpu_custom_call.1} parent=1 // pred_check_branch
      %49 = sbr.rel (0) target = $region33
    $region32: #{tpu_custom_call.1} parent=1 // pred_region
      _
    $region33: #{tpu_custom_call.1} parent=1 // pred_fallthru
      _
    // Predicated region
    $region34: #{tpu_custom_call.1} parent=1 // pred_check
      _
    $region35: #{tpu_custom_call.1} parent=1 // pred_check_branch
      %51 = sbr.rel (0) target = $region37
    $region36: #{tpu_custom_call.1} parent=1 // pred_region
      _
    $region37: #{tpu_custom_call.1} parent=1 // pred_fallthru
      _
    // Predicated region
    $region38: #{tpu_custom_call.1} parent=1 // pred_check
      _
    $region39: #{tpu_custom_call.1} parent=1 // pred_check_branch
      %53 = sbr.rel (0) target = $region41
    $region40: #{tpu_custom_call.1} parent=1 // pred_region
      _
    $region41: #{tpu_custom_call.1} parent=1 // pred_fallthru
      _
    // Predicated region
    $region42: #{tpu_custom_call.1} parent=1 // pred_check
      _
    $region43: #{tpu_custom_call.1} parent=1 // pred_check_branch
      %55 = sbr.rel (0) target = $region45
    $region44: #{tpu_custom_call.1} parent=1 // pred_region
      _
    $region45: #{tpu_custom_call.1} parent=1 // pred_fallthru
      _
    // Predicated region
    $region46: #{tpu_custom_call.1} parent=1 // pred_check
      _
    $region47: #{tpu_custom_call.1} parent=1 // pred_check_branch
      %57 = sbr.rel (0) target = $region49
    $region48: #{tpu_custom_call.1} parent=1 // pred_region
      _
    $region49: #{tpu_custom_call.1} parent=1 // pred_fallthru
      _
    // Predicated region
    $region50: #{tpu_custom_call.1} parent=1 // pred_check
      _
    $region51: #{tpu_custom_call.1} parent=1 // pred_check_branch
      %59 = sbr.rel (0) target = $region53
    $region52: #{tpu_custom_call.1} parent=1 // pred_region
      _
    $region53: #{tpu_custom_call.1} parent=1 // pred_fallthru
      _
    // Predicated region
    $region54: #{tpu_custom_call.1} parent=1 // pred_check
      _
    $region55: #{tpu_custom_call.1} parent=1 // pred_check_branch
      %61 = sbr.rel (0) target = $region57
    $region56: #{tpu_custom_call.1} parent=1 // pred_region
      _
    $region57: #{tpu_custom_call.1} parent=1 // pred_fallthru
      _
    // Predicated region
    $region58: #{tpu_custom_call.1} parent=1 // pred_check
      _
    $region59: #{tpu_custom_call.1} parent=1 // pred_check_branch
      %63 = sbr.rel (0) target = $region61
    $region60: #{tpu_custom_call.1} parent=1 // pred_region
      _
    $region61: #{tpu_custom_call.1} parent=1 // pred_fallthru
      _
    // Predicated region
    $region62: #{tpu_custom_call.1} parent=1 // pred_check
      _
    $region63: #{tpu_custom_call.1} parent=1 // pred_check_branch
      %65 = sbr.rel (0) target = $region65
    $region64: #{tpu_custom_call.1} parent=1 // pred_region
      _
    $region65: #{tpu_custom_call.1} parent=1 // pred_fallthru
      _
    // Predicated region
    $region66: #{tpu_custom_call.1} parent=1 // pred_check
      _
    $region67: #{tpu_custom_call.1} parent=1 // pred_check_branch
      %67 = sbr.rel (0) target = $region69
    $region68: #{tpu_custom_call.1} parent=1 // pred_region
      _
    $region69: #{tpu_custom_call.1} parent=1 // pred_fallthru
      _
    // Predicated region
    $region70: #{tpu_custom_call.1} parent=1 // pred_check
      _
    $region71: #{tpu_custom_call.1} parent=1 // pred_check_branch
      %69 = sbr.rel (0) target = $region73
    $region72: #{tpu_custom_call.1} parent=1 // pred_region
      _
    $region73: #{tpu_custom_call.1} parent=1 // pred_fallthru
      _
    // Predicated region
    $region74: #{tpu_custom_call.1} parent=1 // pred_check
      _
    $region75: #{tpu_custom_call.1} parent=1 // pred_check_branch
      %71 = sbr.rel (0) target = $region77
    $region76: #{tpu_custom_call.1} parent=1 // pred_region
      _
    $region77: #{tpu_custom_call.1} parent=1 // pred_fallthru
      _
    // Predicated region
    $region78: #{tpu_custom_call.1} parent=1 // pred_check
      _
    $region79: #{tpu_custom_call.1} parent=1 // pred_check_branch
      %73 = sbr.rel (0) target = $region81
    $region80: #{tpu_custom_call.1} parent=1 // pred_region
      _
    $region81: #{tpu_custom_call.1} parent=1 // pred_fallthru
      _
    // Predicated region
    $region82: #{tpu_custom_call.1} parent=1 // pred_check
      _
    $region83: #{tpu_custom_call.1} parent=1 // pred_check_branch
      %75 = sbr.rel (0) target = $region85
    $region84: #{tpu_custom_call.1} parent=1 // pred_region
      _
    $region85: #{tpu_custom_call.1} parent=1 // pred_fallthru
      _
    // Predicated region
    $region86: #{tpu_custom_call.1} parent=1 // pred_check
      _
    $region87: #{tpu_custom_call.1} parent=1 // pred_check_branch
      %77 = sbr.rel (0) target = $region89
    $region88: #{tpu_custom_call.1} parent=1 // pred_region
      _
    $region89: #{tpu_custom_call.1} parent=1 // pred_fallthru
      _
    // Predicated region
    $region90: #{tpu_custom_call.1} parent=1 // pred_check
      _
    $region91: #{tpu_custom_call.1} parent=1 // pred_check_branch
      %79 = sbr.rel (0) target = $region93
    $region92: #{tpu_custom_call.1} parent=1 // pred_region
      _
    $region93: #{tpu_custom_call.1} parent=1 // pred_fallthru
      _
    // Predicated region
    $region94: #{tpu_custom_call.1} parent=1 // pred_check
      _
    $region95: #{tpu_custom_call.1} parent=1 // pred_check_branch
      %81 = sbr.rel (0) target = $region97
    $region96: #{tpu_custom_call.1} parent=1 // pred_region
      _
    $region97: #{tpu_custom_call.1} parent=1 // pred_fallthru
      _
    %v82 = vld [vmem:[%s0] sm:$0xff]
    %v83 = vld [vmem:[%s1] sm:$0xff]
    %v84 = vld [vmem:[%s2] sm:$0xff]
    %v85 = vld [vmem:[%s4] sm:$0xff]
    %v86 = vld [vmem:[%s4 + $0x8] sm:$0xff]
    %v87 = vld [vmem:[%s4 + $0x10] sm:$0xff]
    %v88 = vld [vmem:[%s4 + $0x18] sm:$0xff]
    %vm89 = vcmask 261120
    %v91 = vsel %vm89, %v82, 0
    %93 = vmatprep.subr.mxu0 0.0
    %94 = vmatpush1.msra.mxu0 0.0
    %95 = vmatprep.subr.mxu0 0.0
    %96 = vmatpush1.msra.mxu0 0.0
    %97 = vmatprep.subr.mxu0 0.0
    %98 = vmatpush1.msra.mxu0 0.0
    %99 = vmatprep.subr.mxu0 0.0
    %100 = vmatpush1.msra.mxu0 0.0
    %101 = vmatprep.subr.mxu0 0.0
    %102 = vmatpush1.msra.mxu0 0.0
    %103 = vmatprep.subr.mxu0 0.0
    %104 = vmatpush1.msra.mxu0 0.0
    %105 = vmatprep.subr.mxu0 0.0
    %106 = vmatpush1.msra.mxu0 0.0
    %107 = vmatprep.subr.mxu0 0.0
    %108 = vmatpush1.msra.mxu0 0.0
    %109 = vmatprep.subr.mxu0 0.0
    %110 = vmatpush1.msra.mxu0 0.0
    %111 = vmatprep.subr.mxu0 0.0
    %112 = vmatpush1.msra.mxu0 0.0
    %113 = vmatprep.subr.mxu0 0.0
    %114 = vmatpush1.msra.mxu0 0.0
    %115 = vmatprep.subr.mxu0 0.0
    %116 = vmatpush1.msra.mxu0 0.0
    %117 = vmatprep.subr.mxu0 0.0
    %118 = vmatpush1.msra.mxu0 %v88
    %119 = vmatprep.subr.mxu0 0.0
    %120 = vmatpush1.msra.mxu0 %v87
    %121 = vmatprep.subr.mxu0 0.0
    %122 = vmatpush1.msra.mxu0 %v86
    %123 = vmatprep.subr.mxu0 0.0
    %124 = vmatpush1.msra.mxu0 %v85
    %125 = vmatprep.subr.mxu0 0.0
    %126 = vmatpush2.msra.mxu0 0.0
    %127 = vmatprep.subr.mxu0 0.0
    %128 = vmatpush2.msra.mxu0 0.0
    %129 = vmatprep.subr.mxu0 0.0
    %130 = vmatpush2.msra.mxu0 0.0
    %131 = vmatprep.subr.mxu0 0.0
    %132 = vmatpush2.msra.mxu0 0.0
    %133 = vmatprep.subr.mxu0 0.0
    %134 = vmatpush2.msra.mxu0 0.0
    %135 = vmatprep.subr.mxu0 0.0
    %136 = vmatpush2.msra.mxu0 0.0
    %137 = vmatprep.subr.mxu0 0.0
    %138 = vmatpush2.msra.mxu0 0.0
    %139 = vmatprep.subr.mxu0 0.0
    %140 = vmatpush2.msra.mxu0 0.0
    %141 = vmatprep.subr.mxu0 0.0
    %142 = vmatpush2.msra.mxu0 0.0
    %143 = vmatprep.subr.mxu0 0.0
    %144 = vmatpush2.msra.mxu0 0.0
    %145 = vmatprep.subr.mxu0 0.0
    %146 = vmatpush2.msra.mxu0 0.0
    %147 = vmatprep.subr.mxu0 0.0
    %148 = vmatpush2.msra.mxu0 0.0
    %149 = vmatprep.subr.mxu0 0.0
    %150 = vmatpush2.msra.mxu0 0.0
    %151 = vmatprep.subr.mxu0 0.0
    %152 = vmatpush2.msra.mxu0 0.0
    %153 = vmatprep.subr.mxu0 0.0
    %154 = vmatpush2.msra.mxu0 0.0
    %155 = vmatprep.subr.mxu0 0.0
    %156 = vmatpush2.msra.mxu0 0.0
    %157 = vmatprep.mubr.f32.mxu0 0.0
    %158 = vmatmul.mubr.f32.gmra.mxu0 %v91
    %v159 = vpop.f32.mrf.mxu0
    %v160 = vadd.f32 0.0, %v159
    %v161 = vpop.f32.mrf.mxu0
    %162 = vdwg.mxu0
    %v163 = vld [vmem:[%s5] sm:$0xff]
    %v164 = vld [vmem:[%s5 + $0x8] sm:$0xff]
    %v165 = vld [vmem:[%s5 + $0x10] sm:$0xff]
    %v166 = vld [vmem:[%s5 + $0x18] sm:$0xff]
    %167 = vmatprep.subr.mxu0 0.0
    %168 = vmatpush1.msra.mxu0 0.0
    %169 = vmatprep.subr.mxu0 0.0
    %170 = vmatpush1.msra.mxu0 0.0
    %171 = vmatprep.subr.mxu0 0.0
    %172 = vmatpush1.msra.mxu0 0.0
    %173 = vmatprep.subr.mxu0 0.0
    %174 = vmatpush1.msra.mxu0 0.0
    %175 = vmatprep.subr.mxu0 0.0
    %176 = vmatpush1.msra.mxu0 0.0
    %177 = vmatprep.subr.mxu0 0.0
    %178 = vmatpush1.msra.mxu0 0.0
    %179 = vmatprep.subr.mxu0 0.0
    %180 = vmatpush1.msra.mxu0 0.0
    %181 = vmatprep.subr.mxu0 0.0
    %182 = vmatpush1.msra.mxu0 0.0
    %183 = vmatprep.subr.mxu0 0.0
    %184 = vmatpush1.msra.mxu0 0.0
    %185 = vmatprep.subr.mxu0 0.0
    %186 = vmatpush1.msra.mxu0 0.0
    %187 = vmatprep.subr.mxu0 0.0
    %188 = vmatpush1.msra.mxu0 0.0
    %189 = vmatprep.subr.mxu0 0.0
    %190 = vmatpush1.msra.mxu0 0.0
    %191 = vmatprep.subr.mxu0 0.0
    %192 = vmatpush1.msra.mxu0 %v166
    %193 = vmatprep.subr.mxu0 0.0
    %194 = vmatpush1.msra.mxu0 %v165
    %195 = vmatprep.subr.mxu0 0.0
    %196 = vmatpush1.msra.mxu0 %v164
    %197 = vmatprep.subr.mxu0 0.0
    %198 = vmatpush1.msra.mxu0 %v163
    %199 = vmatprep.subr.mxu0 0.0
    %200 = vmatpush2.msra.mxu0 0.0
    %201 = vmatprep.subr.mxu0 0.0
    %202 = vmatpush2.msra.mxu0 0.0
    %203 = vmatprep.subr.mxu0 0.0
    %204 = vmatpush2.msra.mxu0 0.0
    %205 = vmatprep.subr.mxu0 0.0
    %206 = vmatpush2.msra.mxu0 0.0
    %207 = vmatprep.subr.mxu0 0.0
    %208 = vmatpush2.msra.mxu0 0.0
    %209 = vmatprep.subr.mxu0 0.0
    %210 = vmatpush2.msra.mxu0 0.0
    %211 = vmatprep.subr.mxu0 0.0
    %212 = vmatpush2.msra.mxu0 0.0
    %213 = vmatprep.subr.mxu0 0.0
    %214 = vmatpush2.msra.mxu0 0.0
    %215 = vmatprep.subr.mxu0 0.0
    %216 = vmatpush2.msra.mxu0 0.0
    %217 = vmatprep.subr.mxu0 0.0
    %218 = vmatpush2.msra.mxu0 0.0
    %219 = vmatprep.subr.mxu0 0.0
    %220 = vmatpush2.msra.mxu0 0.0
    %221 = vmatprep.subr.mxu0 0.0
    %222 = vmatpush2.msra.mxu0 0.0
    %223 = vmatprep.subr.mxu0 0.0
    %224 = vmatpush2.msra.mxu0 0.0
    %225 = vmatprep.subr.mxu0 0.0
    %226 = vmatpush2.msra.mxu0 0.0
    %227 = vmatprep.subr.mxu0 0.0
    %228 = vmatpush2.msra.mxu0 0.0
    %229 = vmatprep.subr.mxu0 0.0
    %230 = vmatpush2.msra.mxu0 0.0
    %231 = vmatprep.mubr.f32.mxu0 0.0
    %232 = vmatmul.mubr.f32.gmra.mxu0 %v91
    %v233 = vpop.f32.mrf.mxu0
    %v234 = vadd.f32 0.0, %v233
    %v235 = vpop.f32.mrf.mxu0
    %236 = vdwg.mxu0
    %v237 = vld [vmem:[%s6] sm:$0xff]
    %v238 = vld [vmem:[%s6 + $0x8] sm:$0xff]
    %v239 = vld [vmem:[%s6 + $0x10] sm:$0xff]
    %v240 = vld [vmem:[%s6 + $0x18] sm:$0xff]
    %241 = vmatprep.subr.mxu0 0.0
    %242 = vmatpush1.msra.mxu0 0.0
    %243 = vmatprep.subr.mxu0 0.0
    %244 = vmatpush1.msra.mxu0 0.0
    %245 = vmatprep.subr.mxu0 0.0
    %246 = vmatpush1.msra.mxu0 0.0
    %247 = vmatprep.subr.mxu0 0.0
    %248 = vmatpush1.msra.mxu0 0.0
    %249 = vmatprep.subr.mxu0 0.0
    %250 = vmatpush1.msra.mxu0 0.0
    %251 = vmatprep.subr.mxu0 0.0
    %252 = vmatpush1.msra.mxu0 0.0
    %253 = vmatprep.subr.mxu0 0.0
    %254 = vmatpush1.msra.mxu0 0.0
    %255 = vmatprep.subr.mxu0 0.0
    %256 = vmatpush1.msra.mxu0 0.0
    %257 = vmatprep.subr.mxu0 0.0
    %258 = vmatpush1.msra.mxu0 0.0
    %259 = vmatprep.subr.mxu0 0.0
    %260 = vmatpush1.msra.mxu0 0.0
    %261 = vmatprep.subr.mxu0 0.0
    %262 = vmatpush1.msra.mxu0 0.0
    %263 = vmatprep.subr.mxu0 0.0
    %264 = vmatpush1.msra.mxu0 0.0
    %265 = vmatprep.subr.mxu0 0.0
    %266 = vmatpush1.msra.mxu0 %v240
    %267 = vmatprep.subr.mxu0 0.0
    %268 = vmatpush1.msra.mxu0 %v239
    %269 = vmatprep.subr.mxu0 0.0
    %270 = vmatpush1.msra.mxu0 %v238
    %271 = vmatprep.subr.mxu0 0.0
    %272 = vmatpush1.msra.mxu0 %v237
    %273 = vmatprep.subr.mxu0 0.0
    %274 = vmatpush2.msra.mxu0 0.0
    %275 = vmatprep.subr.mxu0 0.0
    %276 = vmatpush2.msra.mxu0 0.0
    %277 = vmatprep.subr.mxu0 0.0
    %278 = vmatpush2.msra.mxu0 0.0
    %279 = vmatprep.subr.mxu0 0.0
    %280 = vmatpush2.msra.mxu0 0.0
    %281 = vmatprep.subr.mxu0 0.0
    %282 = vmatpush2.msra.mxu0 0.0
    %283 = vmatprep.subr.mxu0 0.0
    %284 = vmatpush2.msra.mxu0 0.0
    %285 = vmatprep.subr.mxu0 0.0
    %286 = vmatpush2.msra.mxu0 0.0
    %287 = vmatprep.subr.mxu0 0.0
    %288 = vmatpush2.msra.mxu0 0.0
    %289 = vmatprep.subr.mxu0 0.0
    %290 = vmatpush2.msra.mxu0 0.0
    %291 = vmatprep.subr.mxu0 0.0
    %292 = vmatpush2.msra.mxu0 0.0
    %293 = vmatprep.subr.mxu0 0.0
    %294 = vmatpush2.msra.mxu0 0.0
    %295 = vmatprep.subr.mxu0 0.0
    %296 = vmatpush2.msra.mxu0 0.0
    %297 = vmatprep.subr.mxu0 0.0
    %298 = vmatpush2.msra.mxu0 0.0
    %299 = vmatprep.subr.mxu0 0.0
    %300 = vmatpush2.msra.mxu0 0.0
    %301 = vmatprep.subr.mxu0 0.0
    %302 = vmatpush2.msra.mxu0 0.0
    %303 = vmatprep.subr.mxu0 0.0
    %304 = vmatpush2.msra.mxu0 0.0
    %305 = vmatprep.mubr.f32.mxu0 0.0
    %306 = vmatmul.mubr.f32.gmra.mxu0 %v91
    %v307 = vpop.f32.mrf.mxu0
    %v308 = vadd.f32 0.0, %v307
    %v309 = vpop.f32.mrf.mxu0
    %310 = vdwg.mxu0
    %v312 = vsel %vm89, %v160, 0
    %v315 = vsel %vm89, %v234, 0
    %317 = vmatprep.subr.mxu0 0.0
    %318 = vmatpush1.xpose.msra.mxu0 0.0
    %319 = vmatprep.subr.mxu0 0.0
    %320 = vmatpush1.xpose.msra.mxu0 0.0
    %321 = vmatprep.subr.mxu0 0.0
    %322 = vmatpush1.xpose.msra.mxu0 0.0
    %323 = vmatprep.subr.mxu0 0.0
    %324 = vmatpush1.xpose.msra.mxu0 0.0
    %325 = vmatprep.subr.mxu0 0.0
    %326 = vmatpush1.xpose.msra.mxu0 0.0
    %327 = vmatprep.subr.mxu0 0.0
    %328 = vmatpush1.xpose.msra.mxu0 0.0
    %329 = vmatprep.subr.mxu0 0.0
    %330 = vmatpush1.xpose.msra.mxu0 0.0
    %331 = vmatprep.subr.mxu0 0.0
    %332 = vmatpush1.xpose.msra.mxu0 0.0
    %333 = vmatprep.subr.mxu0 0.0
    %334 = vmatpush1.xpose.msra.mxu0 0.0
    %335 = vmatprep.subr.mxu0 0.0
    %336 = vmatpush1.xpose.msra.mxu0 0.0
    %337 = vmatprep.subr.mxu0 0.0
    %338 = vmatpush1.xpose.msra.mxu0 0.0
    %339 = vmatprep.subr.mxu0 0.0
    %340 = vmatpush1.xpose.msra.mxu0 0.0
    %341 = vmatprep.subr.mxu0 0.0
    %342 = vmatpush1.xpose.msra.mxu0 0.0
    %343 = vmatprep.subr.mxu0 0.0
    %344 = vmatpush1.xpose.msra.mxu0 0.0
    %345 = vmatprep.subr.mxu0 0.0
    %346 = vmatpush1.xpose.msra.mxu0 0.0
    %347 = vmatprep.subr.mxu0 0.0
    %348 = vmatpush1.xpose.msra.mxu0 %v315
    %349 = vmatprep.subr.mxu0 0.0
    %350 = vmatpush2.xpose.msra.mxu0 0.0
    %351 = vmatprep.subr.mxu0 0.0
    %352 = vmatpush2.xpose.msra.mxu0 0.0
    %353 = vmatprep.subr.mxu0 0.0
    %354 = vmatpush2.xpose.msra.mxu0 0.0
    %355 = vmatprep.subr.mxu0 0.0
    %356 = vmatpush2.xpose.msra.mxu0 0.0
    %357 = vmatprep.subr.mxu0 0.0
    %358 = vmatpush2.xpose.msra.mxu0 0.0
    %359 = vmatprep.subr.mxu0 0.0
    %360 = vmatpush2.xpose.msra.mxu0 0.0
    %361 = vmatprep.subr.mxu0 0.0
    %362 = vmatpush2.xpose.msra.mxu0 0.0
    %363 = vmatprep.subr.mxu0 0.0
    %364 = vmatpush2.xpose.msra.mxu0 0.0
    %365 = vmatprep.subr.mxu0 0.0
    %366 = vmatpush2.xpose.msra.mxu0 0.0
    %367 = vmatprep.subr.mxu0 0.0
    %368 = vmatpush2.xpose.msra.mxu0 0.0
    %369 = vmatprep.subr.mxu0 0.0
    %370 = vmatpush2.xpose.msra.mxu0 0.0
    %371 = vmatprep.subr.mxu0 0.0
    %372 = vmatpush2.xpose.msra.mxu0 0.0
    %373 = vmatprep.subr.mxu0 0.0
    %374 = vmatpush2.xpose.msra.mxu0 0.0
    %375 = vmatprep.subr.mxu0 0.0
    %376 = vmatpush2.xpose.msra.mxu0 0.0
    %377 = vmatprep.subr.mxu0 0.0
    %378 = vmatpush2.xpose.msra.mxu0 0.0
    %379 = vmatprep.subr.mxu0 0.0
    %380 = vmatpush2.xpose.msra.mxu0 0.0
    %381 = vmatprep.mubr.f32.mxu0 0.0
    %382 = vmatmul.mubr.f32.gmra.mxu0 %v312
    %v383 = vpop.f32.mrf.mxu0
    %v384 = vadd.f32 0.0, %v383
    %v385 = vpop.f32.mrf.mxu0
    %386 = vdwg.mxu0
    %v387 = vmul.f32 %v384, 0.17677669
    %vm388 = vcmp.ne.s32.totalorder %v84, 0
    %v389 = vsel %vm388, -1e+30, %v387
    %vm390 = vcmask 64512
    %v391 = vsel %vm390, %v389, -inf
    %392 = vmax.xlane.f32.xlu0 %v391
    %v393 = vpop.xlane.xlu0 %392
    %v394 = vsub.f32 %v389, %v393
    %v395 = vmul.f32 %v394, 1.442695
    %v396 = vpow.pop %v395
    %v397 = vsel %vm390, %v396, 0.0
    %398 = vadd.xlane.f32.xlu0 %v397
    %v399 = vpop.xlane.xlu0 %398
    %v400 = vrcp.pop %v399
    %v401 = vmul.f32 %v396, %v400
    %v403 = vsel %vm390, %v401, 0
    %405 = vmatprep.subr.mxu0 0.0
    %406 = vmatpush1.msra.mxu0 0.0
    %407 = vmatprep.subr.mxu0 0.0
    %408 = vmatpush1.msra.mxu0 0.0
    %409 = vmatprep.subr.mxu0 0.0
    %410 = vmatpush1.msra.mxu0 0.0
    %411 = vmatprep.subr.mxu0 0.0
    %412 = vmatpush1.msra.mxu0 0.0
    %413 = vmatprep.subr.mxu0 0.0
    %414 = vmatpush1.msra.mxu0 0.0
    %415 = vmatprep.subr.mxu0 0.0
    %416 = vmatpush1.msra.mxu0 0.0
    %417 = vmatprep.subr.mxu0 0.0
    %418 = vmatpush1.msra.mxu0 0.0
    %419 = vmatprep.subr.mxu0 0.0
    %420 = vmatpush1.msra.mxu0 0.0
    %421 = vmatprep.subr.mxu0 0.0
    %422 = vmatpush1.msra.mxu0 0.0
    %423 = vmatprep.subr.mxu0 0.0
    %424 = vmatpush1.msra.mxu0 0.0
    %425 = vmatprep.subr.mxu0 0.0
    %426 = vmatpush1.msra.mxu0 0.0
    %427 = vmatprep.subr.mxu0 0.0
    %428 = vmatpush1.msra.mxu0 0.0
    %429 = vmatprep.subr.mxu0 0.0
    %430 = vmatpush1.msra.mxu0 0.0
    %431 = vmatprep.subr.mxu0 0.0
    %432 = vmatpush1.msra.mxu0 0.0
    %433 = vmatprep.subr.mxu0 0.0
    %434 = vmatpush1.msra.mxu0 0.0
    %435 = vmatprep.subr.mxu0 0.0
    %436 = vmatpush1.msra.mxu0 %v308
    %437 = vmatprep.subr.mxu0 0.0
    %438 = vmatpush2.msra.mxu0 0.0
    %439 = vmatprep.subr.mxu0 0.0
    %440 = vmatpush2.msra.mxu0 0.0
    %441 = vmatprep.subr.mxu0 0.0
    %442 = vmatpush2.msra.mxu0 0.0
    %443 = vmatprep.subr.mxu0 0.0
    %444 = vmatpush2.msra.mxu0 0.0
    %445 = vmatprep.subr.mxu0 0.0
    %446 = vmatpush2.msra.mxu0 0.0
    %447 = vmatprep.subr.mxu0 0.0
    %448 = vmatpush2.msra.mxu0 0.0
    %449 = vmatprep.subr.mxu0 0.0
    %450 = vmatpush2.msra.mxu0 0.0
    %451 = vmatprep.subr.mxu0 0.0
    %452 = vmatpush2.msra.mxu0 0.0
    %453 = vmatprep.subr.mxu0 0.0
    %454 = vmatpush2.msra.mxu0 0.0
    %455 = vmatprep.subr.mxu0 0.0
    %456 = vmatpush2.msra.mxu0 0.0
    %457 = vmatprep.subr.mxu0 0.0
    %458 = vmatpush2.msra.mxu0 0.0
    %459 = vmatprep.subr.mxu0 0.0
    %460 = vmatpush2.msra.mxu0 0.0
    %461 = vmatprep.subr.mxu0 0.0
    %462 = vmatpush2.msra.mxu0 0.0
    %463 = vmatprep.subr.mxu0 0.0
    %464 = vmatpush2.msra.mxu0 0.0
    %465 = vmatprep.subr.mxu0 0.0
    %466 = vmatpush2.msra.mxu0 0.0
    %467 = vmatprep.subr.mxu0 0.0
    %468 = vmatpush2.msra.mxu0 0.0
    %469 = vmatprep.mubr.f32.mxu0 0.0
    %470 = vmatmul.mubr.f32.gmra.mxu0 %v403
    %v471 = vpop.f32.mrf.mxu0
    %v472 = vadd.f32 0.0, %v471
    %v473 = vpop.f32.mrf.mxu0
    %474 = vdwg.mxu0
    %475 = vrot.lane.b32.xlu0 %v160, 96
    %v476 = vpop.permute.xlu0 %475
    %477 = vrot.lane.b32.xlu0 %v234, 96
    %v478 = vpop.permute.xlu0 %477
    %v479 = vsel %vm89, %v476, 0
    %v481 = vsel %vm89, %v478, 0
    %483 = vmatprep.subr.mxu0 0.0
    %484 = vmatpush1.xpose.msra.mxu0 0.0
    %485 = vmatprep.subr.mxu0 0.0
    %486 = vmatpush1.xpose.msra.mxu0 0.0
    %487 = vmatprep.subr.mxu0 0.0
    %488 = vmatpush1.xpose.msra.mxu0 0.0
    %489 = vmatprep.subr.mxu0 0.0
    %490 = vmatpush1.xpose.msra.mxu0 0.0
    %491 = vmatprep.subr.mxu0 0.0
    %492 = vmatpush1.xpose.msra.mxu0 0.0
    %493 = vmatprep.subr.mxu0 0.0
    %494 = vmatpush1.xpose.msra.mxu0 0.0
    %495 = vmatprep.subr.mxu0 0.0
    %496 = vmatpush1.xpose.msra.mxu0 0.0
    %497 = vmatprep.subr.mxu0 0.0
    %498 = vmatpush1.xpose.msra.mxu0 0.0
    %499 = vmatprep.subr.mxu0 0.0
    %500 = vmatpush1.xpose.msra.mxu0 0.0
    %501 = vmatprep.subr.mxu0 0.0
    %502 = vmatpush1.xpose.msra.mxu0 0.0
    %503 = vmatprep.subr.mxu0 0.0
    %504 = vmatpush1.xpose.msra.mxu0 0.0
    %505 = vmatprep.subr.mxu0 0.0
    %506 = vmatpush1.xpose.msra.mxu0 0.0
    %507 = vmatprep.subr.mxu0 0.0
    %508 = vmatpush1.xpose.msra.mxu0 0.0
    %509 = vmatprep.subr.mxu0 0.0
    %510 = vmatpush1.xpose.msra.mxu0 0.0
    %511 = vmatprep.subr.mxu0 0.0
    %512 = vmatpush1.xpose.msra.mxu0 0.0
    %513 = vmatprep.subr.mxu0 0.0
    %514 = vmatpush1.xpose.msra.mxu0 %v481
    %515 = vmatprep.subr.mxu0 0.0
    %516 = vmatpush2.xpose.msra.mxu0 0.0
    %517 = vmatprep.subr.mxu0 0.0
    %518 = vmatpush2.xpose.msra.mxu0 0.0
    %519 = vmatprep.subr.mxu0 0.0
    %520 = vmatpush2.xpose.msra.mxu0 0.0
    %521 = vmatprep.subr.mxu0 0.0
    %522 = vmatpush2.xpose.msra.mxu0 0.0
    %523 = vmatprep.subr.mxu0 0.0
    %524 = vmatpush2.xpose.msra.mxu0 0.0
    %525 = vmatprep.subr.mxu0 0.0
    %526 = vmatpush2.xpose.msra.mxu0 0.0
    %527 = vmatprep.subr.mxu0 0.0
    %528 = vmatpush2.xpose.msra.mxu0 0.0
    %529 = vmatprep.subr.mxu0 0.0
    %530 = vmatpush2.xpose.msra.mxu0 0.0
    %531 = vmatprep.subr.mxu0 0.0
    %532 = vmatpush2.xpose.msra.mxu0 0.0
    %533 = vmatprep.subr.mxu0 0.0
    %534 = vmatpush2.xpose.msra.mxu0 0.0
    %535 = vmatprep.subr.mxu0 0.0
    %536 = vmatpush2.xpose.msra.mxu0 0.0
    %537 = vmatprep.subr.mxu0 0.0
    %538 = vmatpush2.xpose.msra.mxu0 0.0
    %539 = vmatprep.subr.mxu0 0.0
    %540 = vmatpush2.xpose.msra.mxu0 0.0
    %541 = vmatprep.subr.mxu0 0.0
    %542 = vmatpush2.xpose.msra.mxu0 0.0
    %543 = vmatprep.subr.mxu0 0.0
    %544 = vmatpush2.xpose.msra.mxu0 0.0
    %545 = vmatprep.subr.mxu0 0.0
    %546 = vmatpush2.xpose.msra.mxu0 0.0
    %547 = vmatprep.mubr.f32.mxu0 0.0
    %548 = vmatmul.mubr.f32.gmra.mxu0 %v479
    %v549 = vpop.f32.mrf.mxu0
    %v550 = vadd.f32 0.0, %v549
    %v551 = vpop.f32.mrf.mxu0
    %552 = vdwg.mxu0
    %v553 = vmul.f32 %v550, 0.17677669
    %v554 = vsel %vm388, -1e+30, %v553
    %v555 = vsel %vm390, %v554, -inf
    %556 = vmax.xlane.f32.xlu0 %v555
    %v557 = vpop.xlane.xlu0 %556
    %v558 = vsub.f32 %v554, %v557
    %v559 = vmul.f32 %v558, 1.442695
    %v560 = vpow.pop %v559
    %v561 = vsel %vm390, %v560, 0.0
    %562 = vadd.xlane.f32.xlu0 %v561
    %v563 = vpop.xlane.xlu0 %562
    %v564 = vrcp.pop %v563
    %v565 = vmul.f32 %v560, %v564
    %567 = vrot.lane.b32.xlu0 %v308, 96
    %v568 = vpop.permute.xlu0 %567
    %v571 = vsel %vm390, %v565, 0
    %573 = vmatprep.subr.mxu0 0.0
    %574 = vmatpush1.msra.mxu0 0.0
    %575 = vmatprep.subr.mxu0 0.0
    %576 = vmatpush1.msra.mxu0 0.0
    %577 = vmatprep.subr.mxu0 0.0
    %578 = vmatpush1.msra.mxu0 0.0
    %579 = vmatprep.subr.mxu0 0.0
    %580 = vmatpush1.msra.mxu0 0.0
    %581 = vmatprep.subr.mxu0 0.0
    %582 = vmatpush1.msra.mxu0 0.0
    %583 = vmatprep.subr.mxu0 0.0
    %584 = vmatpush1.msra.mxu0 0.0
    %585 = vmatprep.subr.mxu0 0.0
    %586 = vmatpush1.msra.mxu0 0.0
    %587 = vmatprep.subr.mxu0 0.0
    %588 = vmatpush1.msra.mxu0 0.0
    %589 = vmatprep.subr.mxu0 0.0
    %590 = vmatpush1.msra.mxu0 0.0
    %591 = vmatprep.subr.mxu0 0.0
    %592 = vmatpush1.msra.mxu0 0.0
    %593 = vmatprep.subr.mxu0 0.0
    %594 = vmatpush1.msra.mxu0 0.0
    %595 = vmatprep.subr.mxu0 0.0
    %596 = vmatpush1.msra.mxu0 0.0
    %597 = vmatprep.subr.mxu0 0.0
    %598 = vmatpush1.msra.mxu0 0.0
    %599 = vmatprep.subr.mxu0 0.0
    %600 = vmatpush1.msra.mxu0 0.0
    %601 = vmatprep.subr.mxu0 0.0
    %602 = vmatpush1.msra.mxu0 0.0
    %603 = vmatprep.subr.mxu0 0.0
    %604 = vmatpush1.msra.mxu0 %v568
    %605 = vmatprep.subr.mxu0 0.0
    %606 = vmatpush2.msra.mxu0 0.0
    %607 = vmatprep.subr.mxu0 0.0
    %608 = vmatpush2.msra.mxu0 0.0
    %609 = vmatprep.subr.mxu0 0.0
    %610 = vmatpush2.msra.mxu0 0.0
    %611 = vmatprep.subr.mxu0 0.0
    %612 = vmatpush2.msra.mxu0 0.0
    %613 = vmatprep.subr.mxu0 0.0
    %614 = vmatpush2.msra.mxu0 0.0
    %615 = vmatprep.subr.mxu0 0.0
    %616 = vmatpush2.msra.mxu0 0.0
    %617 = vmatprep.subr.mxu0 0.0
    %618 = vmatpush2.msra.mxu0 0.0
    %619 = vmatprep.subr.mxu0 0.0
    %620 = vmatpush2.msra.mxu0 0.0
    %621 = vmatprep.subr.mxu0 0.0
    %622 = vmatpush2.msra.mxu0 0.0
    %623 = vmatprep.subr.mxu0 0.0
    %624 = vmatpush2.msra.mxu0 0.0
    %625 = vmatprep.subr.mxu0 0.0
    %626 = vmatpush2.msra.mxu0 0.0
    %627 = vmatprep.subr.mxu0 0.0
    %628 = vmatpush2.msra.mxu0 0.0
    %629 = vmatprep.subr.mxu0 0.0
    %630 = vmatpush2.msra.mxu0 0.0
    %631 = vmatprep.subr.mxu0 0.0
    %632 = vmatpush2.msra.mxu0 0.0
    %633 = vmatprep.subr.mxu0 0.0
    %634 = vmatpush2.msra.mxu0 0.0
    %635 = vmatprep.subr.mxu0 0.0
    %636 = vmatpush2.msra.mxu0 0.0
    %637 = vmatprep.mubr.f32.mxu0 0.0
    %638 = vmatmul.mubr.f32.gmra.mxu0 %v571
    %v639 = vpop.f32.mrf.mxu0
    %v640 = vadd.f32 0.0, %v639
    %v641 = vpop.f32.mrf.mxu0
    %642 = vdwg.mxu0
    %643 = vrot.lane.b32.xlu0 %v160, 64
    %v644 = vpop.permute.xlu0 %643
    %645 = vrot.lane.b32.xlu0 %v234, 64
    %v646 = vpop.permute.xlu0 %645
    %v647 = vsel %vm89, %v644, 0
    %v649 = vsel %vm89, %v646, 0
    %651 = vmatprep.subr.mxu0 0.0
    %652 = vmatpush1.xpose.msra.mxu0 0.0
    %653 = vmatprep.subr.mxu0 0.0
    %654 = vmatpush1.xpose.msra.mxu0 0.0
    %655 = vmatprep.subr.mxu0 0.0
    %656 = vmatpush1.xpose.msra.mxu0 0.0
    %657 = vmatprep.subr.mxu0 0.0
    %658 = vmatpush1.xpose.msra.mxu0 0.0
    %659 = vmatprep.subr.mxu0 0.0
    %660 = vmatpush1.xpose.msra.mxu0 0.0
    %661 = vmatprep.subr.mxu0 0.0
    %662 = vmatpush1.xpose.msra.mxu0 0.0
    %663 = vmatprep.subr.mxu0 0.0
    %664 = vmatpush1.xpose.msra.mxu0 0.0
    %665 = vmatprep.subr.mxu0 0.0
    %666 = vmatpush1.xpose.msra.mxu0 0.0
    %667 = vmatprep.subr.mxu0 0.0
    %668 = vmatpush1.xpose.msra.mxu0 0.0
    %669 = vmatprep.subr.mxu0 0.0
    %670 = vmatpush1.xpose.msra.mxu0 0.0
    %671 = vmatprep.subr.mxu0 0.0
    %672 = vmatpush1.xpose.msra.mxu0 0.0
    %673 = vmatprep.subr.mxu0 0.0
    %674 = vmatpush1.xpose.msra.mxu0 0.0
    %675 = vmatprep.subr.mxu0 0.0
    %676 = vmatpush1.xpose.msra.mxu0 0.0
    %677 = vmatprep.subr.mxu0 0.0
    %678 = vmatpush1.xpose.msra.mxu0 0.0
    %679 = vmatprep.subr.mxu0 0.0
    %680 = vmatpush1.xpose.msra.mxu0 0.0
    %681 = vmatprep.subr.mxu0 0.0
    %682 = vmatpush1.xpose.msra.mxu0 %v649
    %683 = vmatprep.subr.mxu0 0.0
    %684 = vmatpush2.xpose.msra.mxu0 0.0
    %685 = vmatprep.subr.mxu0 0.0
    %686 = vmatpush2.xpose.msra.mxu0 0.0
    %687 = vmatprep.subr.mxu0 0.0
    %688 = vmatpush2.xpose.msra.mxu0 0.0
    %689 = vmatprep.subr.mxu0 0.0
    %690 = vmatpush2.xpose.msra.mxu0 0.0
    %691 = vmatprep.subr.mxu0 0.0
    %692 = vmatpush2.xpose.msra.mxu0 0.0
    %693 = vmatprep.subr.mxu0 0.0
    %694 = vmatpush2.xpose.msra.mxu0 0.0
    %695 = vmatprep.subr.mxu0 0.0
    %696 = vmatpush2.xpose.msra.mxu0 0.0
    %697 = vmatprep.subr.mxu0 0.0
    %698 = vmatpush2.xpose.msra.mxu0 0.0
    %699 = vmatprep.subr.mxu0 0.0
    %700 = vmatpush2.xpose.msra.mxu0 0.0
    %701 = vmatprep.subr.mxu0 0.0
    %702 = vmatpush2.xpose.msra.mxu0 0.0
    %703 = vmatprep.subr.mxu0 0.0
    %704 = vmatpush2.xpose.msra.mxu0 0.0
    %705 = vmatprep.subr.mxu0 0.0
    %706 = vmatpush2.xpose.msra.mxu0 0.0
    %707 = vmatprep.subr.mxu0 0.0
    %708 = vmatpush2.xpose.msra.mxu0 0.0
    %709 = vmatprep.subr.mxu0 0.0
    %710 = vmatpush2.xpose.msra.mxu0 0.0
    %711 = vmatprep.subr.mxu0 0.0
    %712 = vmatpush2.xpose.msra.mxu0 0.0
    %713 = vmatprep.subr.mxu0 0.0
    %714 = vmatpush2.xpose.msra.mxu0 0.0
    %715 = vmatprep.mubr.f32.mxu0 0.0
    %716 = vmatmul.mubr.f32.gmra.mxu0 %v647
    %v717 = vpop.f32.mrf.mxu0
    %v718 = vadd.f32 0.0, %v717
    %v719 = vpop.f32.mrf.mxu0
    %720 = vdwg.mxu0
    %v721 = vmul.f32 %v718, 0.17677669
    %v722 = vsel %vm388, -1e+30, %v721
    %v723 = vsel %vm390, %v722, -inf
    %724 = vmax.xlane.f32.xlu0 %v723
    %v725 = vpop.xlane.xlu0 %724
    %v726 = vsub.f32 %v722, %v725
    %v727 = vmul.f32 %v726, 1.442695
    %v728 = vpow.pop %v727
    %v729 = vsel %vm390, %v728, 0.0
    %730 = vadd.xlane.f32.xlu0 %v729
    %v731 = vpop.xlane.xlu0 %730
    %v732 = vrcp.pop %v731
    %v733 = vmul.f32 %v728, %v732
    %734 = vrot.lane.b32.xlu0 %v308, 64
    %v735 = vpop.permute.xlu0 %734
    %v738 = vsel %vm390, %v733, 0
    %740 = vmatprep.subr.mxu0 0.0
    %741 = vmatpush1.msra.mxu0 0.0
    %742 = vmatprep.subr.mxu0 0.0
    %743 = vmatpush1.msra.mxu0 0.0
    %744 = vmatprep.subr.mxu0 0.0
    %745 = vmatpush1.msra.mxu0 0.0
    %746 = vmatprep.subr.mxu0 0.0
    %747 = vmatpush1.msra.mxu0 0.0
    %748 = vmatprep.subr.mxu0 0.0
    %749 = vmatpush1.msra.mxu0 0.0
    %750 = vmatprep.subr.mxu0 0.0
    %751 = vmatpush1.msra.mxu0 0.0
    %752 = vmatprep.subr.mxu0 0.0
    %753 = vmatpush1.msra.mxu0 0.0
    %754 = vmatprep.subr.mxu0 0.0
    %755 = vmatpush1.msra.mxu0 0.0
    %756 = vmatprep.subr.mxu0 0.0
    %757 = vmatpush1.msra.mxu0 0.0
    %758 = vmatprep.subr.mxu0 0.0
    %759 = vmatpush1.msra.mxu0 0.0
    %760 = vmatprep.subr.mxu0 0.0
    %761 = vmatpush1.msra.mxu0 0.0
    %762 = vmatprep.subr.mxu0 0.0
    %763 = vmatpush1.msra.mxu0 0.0
    %764 = vmatprep.subr.mxu0 0.0
    %765 = vmatpush1.msra.mxu0 0.0
    %766 = vmatprep.subr.mxu0 0.0
    %767 = vmatpush1.msra.mxu0 0.0
    %768 = vmatprep.subr.mxu0 0.0
    %769 = vmatpush1.msra.mxu0 0.0
    %770 = vmatprep.subr.mxu0 0.0
    %771 = vmatpush1.msra.mxu0 %v735
    %772 = vmatprep.subr.mxu0 0.0
    %773 = vmatpush2.msra.mxu0 0.0
    %774 = vmatprep.subr.mxu0 0.0
    %775 = vmatpush2.msra.mxu0 0.0
    %776 = vmatprep.subr.mxu0 0.0
    %777 = vmatpush2.msra.mxu0 0.0
    %778 = vmatprep.subr.mxu0 0.0
    %779 = vmatpush2.msra.mxu0 0.0
    %780 = vmatprep.subr.mxu0 0.0
    %781 = vmatpush2.msra.mxu0 0.0
    %782 = vmatprep.subr.mxu0 0.0
    %783 = vmatpush2.msra.mxu0 0.0
    %784 = vmatprep.subr.mxu0 0.0
    %785 = vmatpush2.msra.mxu0 0.0
    %786 = vmatprep.subr.mxu0 0.0
    %787 = vmatpush2.msra.mxu0 0.0
    %788 = vmatprep.subr.mxu0 0.0
    %789 = vmatpush2.msra.mxu0 0.0
    %790 = vmatprep.subr.mxu0 0.0
    %791 = vmatpush2.msra.mxu0 0.0
    %792 = vmatprep.subr.mxu0 0.0
    %793 = vmatpush2.msra.mxu0 0.0
    %794 = vmatprep.subr.mxu0 0.0
    %795 = vmatpush2.msra.mxu0 0.0
    %796 = vmatprep.subr.mxu0 0.0
    %797 = vmatpush2.msra.mxu0 0.0
    %798 = vmatprep.subr.mxu0 0.0
    %799 = vmatpush2.msra.mxu0 0.0
    %800 = vmatprep.subr.mxu0 0.0
    %801 = vmatpush2.msra.mxu0 0.0
    %802 = vmatprep.subr.mxu0 0.0
    %803 = vmatpush2.msra.mxu0 0.0
    %804 = vmatprep.mubr.f32.mxu0 0.0
    %805 = vmatmul.mubr.f32.gmra.mxu0 %v738
    %v806 = vpop.f32.mrf.mxu0
    %v807 = vadd.f32 0.0, %v806
    %v808 = vpop.f32.mrf.mxu0
    %809 = vdwg.mxu0
    %810 = vrot.lane.b32.xlu0 %v160, 32
    %v811 = vpop.permute.xlu0 %810
    %812 = vrot.lane.b32.xlu0 %v234, 32
    %v813 = vpop.permute.xlu0 %812
    %v814 = vsel %vm89, %v811, 0
    %v816 = vsel %vm89, %v813, 0
    %818 = vmatprep.subr.mxu0 0.0
    %819 = vmatpush1.xpose.msra.mxu0 0.0
    %820 = vmatprep.subr.mxu0 0.0
    %821 = vmatpush1.xpose.msra.mxu0 0.0
    %822 = vmatprep.subr.mxu0 0.0
    %823 = vmatpush1.xpose.msra.mxu0 0.0
    %824 = vmatprep.subr.mxu0 0.0
    %825 = vmatpush1.xpose.msra.mxu0 0.0
    %826 = vmatprep.subr.mxu0 0.0
    %827 = vmatpush1.xpose.msra.mxu0 0.0
    %828 = vmatprep.subr.mxu0 0.0
    %829 = vmatpush1.xpose.msra.mxu0 0.0
    %830 = vmatprep.subr.mxu0 0.0
    %831 = vmatpush1.xpose.msra.mxu0 0.0
    %832 = vmatprep.subr.mxu0 0.0
    %833 = vmatpush1.xpose.msra.mxu0 0.0
    %834 = vmatprep.subr.mxu0 0.0
    %835 = vmatpush1.xpose.msra.mxu0 0.0
    %836 = vmatprep.subr.mxu0 0.0
    %837 = vmatpush1.xpose.msra.mxu0 0.0
    %838 = vmatprep.subr.mxu0 0.0
    %839 = vmatpush1.xpose.msra.mxu0 0.0
    %840 = vmatprep.subr.mxu0 0.0
    %841 = vmatpush1.xpose.msra.mxu0 0.0
    %842 = vmatprep.subr.mxu0 0.0
    %843 = vmatpush1.xpose.msra.mxu0 0.0
    %844 = vmatprep.subr.mxu0 0.0
    %845 = vmatpush1.xpose.msra.mxu0 0.0
    %846 = vmatprep.subr.mxu0 0.0
    %847 = vmatpush1.xpose.msra.mxu0 0.0
    %848 = vmatprep.subr.mxu0 0.0
    %849 = vmatpush1.xpose.msra.mxu0 %v816
    %850 = vmatprep.subr.mxu0 0.0
    %851 = vmatpush2.xpose.msra.mxu0 0.0
    %852 = vmatprep.subr.mxu0 0.0
    %853 = vmatpush2.xpose.msra.mxu0 0.0
    %854 = vmatprep.subr.mxu0 0.0
    %855 = vmatpush2.xpose.msra.mxu0 0.0
    %856 = vmatprep.subr.mxu0 0.0
    %857 = vmatpush2.xpose.msra.mxu0 0.0
    %858 = vmatprep.subr.mxu0 0.0
    %859 = vmatpush2.xpose.msra.mxu0 0.0
    %860 = vmatprep.subr.mxu0 0.0
    %861 = vmatpush2.xpose.msra.mxu0 0.0
    %862 = vmatprep.subr.mxu0 0.0
    %863 = vmatpush2.xpose.msra.mxu0 0.0
    %864 = vmatprep.subr.mxu0 0.0
    %865 = vmatpush2.xpose.msra.mxu0 0.0
    %866 = vmatprep.subr.mxu0 0.0
    %867 = vmatpush2.xpose.msra.mxu0 0.0
    %868 = vmatprep.subr.mxu0 0.0
    %869 = vmatpush2.xpose.msra.mxu0 0.0
    %870 = vmatprep.subr.mxu0 0.0
    %871 = vmatpush2.xpose.msra.mxu0 0.0
    %872 = vmatprep.subr.mxu0 0.0
    %873 = vmatpush2.xpose.msra.mxu0 0.0
    %874 = vmatprep.subr.mxu0 0.0
    %875 = vmatpush2.xpose.msra.mxu0 0.0
    %876 = vmatprep.subr.mxu0 0.0
    %877 = vmatpush2.xpose.msra.mxu0 0.0
    %878 = vmatprep.subr.mxu0 0.0
    %879 = vmatpush2.xpose.msra.mxu0 0.0
    %880 = vmatprep.subr.mxu0 0.0
    %881 = vmatpush2.xpose.msra.mxu0 0.0
    %882 = vmatprep.mubr.f32.mxu0 0.0
    %883 = vmatmul.mubr.f32.gmra.mxu0 %v814
    %v884 = vpop.f32.mrf.mxu0
    %v885 = vadd.f32 0.0, %v884
    %v886 = vpop.f32.mrf.mxu0
    %887 = vdwg.mxu0
    %v888 = vmul.f32 %v885, 0.17677669
    %v889 = vsel %vm388, -1e+30, %v888
    %v890 = vsel %vm390, %v889, -inf
    %891 = vmax.xlane.f32.xlu0 %v890
    %v892 = vpop.xlane.xlu0 %891
    %v893 = vsub.f32 %v889, %v892
    %v894 = vmul.f32 %v893, 1.442695
    %v895 = vpow.pop %v894
    %v896 = vsel %vm390, %v895, 0.0
    %897 = vadd.xlane.f32.xlu0 %v896
    %v898 = vpop.xlane.xlu0 %897
    %v899 = vrcp.pop %v898
    %v900 = vmul.f32 %v895, %v899
    %901 = vrot.lane.b32.xlu0 %v308, 32
    %v902 = vpop.permute.xlu0 %901
    %v905 = vsel %vm390, %v900, 0
    %907 = vmatprep.subr.mxu0 0.0
    %908 = vmatpush1.msra.mxu0 0.0
    %909 = vmatprep.subr.mxu0 0.0
    %910 = vmatpush1.msra.mxu0 0.0
    %911 = vmatprep.subr.mxu0 0.0
    %912 = vmatpush1.msra.mxu0 0.0
    %913 = vmatprep.subr.mxu0 0.0
    %914 = vmatpush1.msra.mxu0 0.0
    %915 = vmatprep.subr.mxu0 0.0
    %916 = vmatpush1.msra.mxu0 0.0
    %917 = vmatprep.subr.mxu0 0.0
    %918 = vmatpush1.msra.mxu0 0.0
    %919 = vmatprep.subr.mxu0 0.0
    %920 = vmatpush1.msra.mxu0 0.0
    %921 = vmatprep.subr.mxu0 0.0
    %922 = vmatpush1.msra.mxu0 0.0
    %923 = vmatprep.subr.mxu0 0.0
    %924 = vmatpush1.msra.mxu0 0.0
    %925 = vmatprep.subr.mxu0 0.0
    %926 = vmatpush1.msra.mxu0 0.0
    %927 = vmatprep.subr.mxu0 0.0
    %928 = vmatpush1.msra.mxu0 0.0
    %929 = vmatprep.subr.mxu0 0.0
    %930 = vmatpush1.msra.mxu0 0.0
    %931 = vmatprep.subr.mxu0 0.0
    %932 = vmatpush1.msra.mxu0 0.0
    %933 = vmatprep.subr.mxu0 0.0
    %934 = vmatpush1.msra.mxu0 0.0
    %935 = vmatprep.subr.mxu0 0.0
    %936 = vmatpush1.msra.mxu0 0.0
    %937 = vmatprep.subr.mxu0 0.0
    %938 = vmatpush1.msra.mxu0 %v902
    %939 = vmatprep.subr.mxu0 0.0
    %940 = vmatpush2.msra.mxu0 0.0
    %941 = vmatprep.subr.mxu0 0.0
    %942 = vmatpush2.msra.mxu0 0.0
    %943 = vmatprep.subr.mxu0 0.0
    %944 = vmatpush2.msra.mxu0 0.0
    %945 = vmatprep.subr.mxu0 0.0
    %946 = vmatpush2.msra.mxu0 0.0
    %947 = vmatprep.subr.mxu0 0.0
    %948 = vmatpush2.msra.mxu0 0.0
    %949 = vmatprep.subr.mxu0 0.0
    %950 = vmatpush2.msra.mxu0 0.0
    %951 = vmatprep.subr.mxu0 0.0
    %952 = vmatpush2.msra.mxu0 0.0
    %953 = vmatprep.subr.mxu0 0.0
    %954 = vmatpush2.msra.mxu0 0.0
    %955 = vmatprep.subr.mxu0 0.0
    %956 = vmatpush2.msra.mxu0 0.0
    %957 = vmatprep.subr.mxu0 0.0
    %958 = vmatpush2.msra.mxu0 0.0
    %959 = vmatprep.subr.mxu0 0.0
    %960 = vmatpush2.msra.mxu0 0.0
    %961 = vmatprep.subr.mxu0 0.0
    %962 = vmatpush2.msra.mxu0 0.0
    %963 = vmatprep.subr.mxu0 0.0
    %964 = vmatpush2.msra.mxu0 0.0
    %965 = vmatprep.subr.mxu0 0.0
    %966 = vmatpush2.msra.mxu0 0.0
    %967 = vmatprep.subr.mxu0 0.0
    %968 = vmatpush2.msra.mxu0 0.0
    %969 = vmatprep.subr.mxu0 0.0
    %970 = vmatpush2.msra.mxu0 0.0
    %971 = vmatprep.mubr.f32.mxu0 0.0
    %972 = vmatmul.mubr.f32.gmra.mxu0 %v905
    %v973 = vpop.f32.mrf.mxu0
    %v974 = vadd.f32 0.0, %v973
    %v975 = vpop.f32.mrf.mxu0
    %976 = vdwg.mxu0
    %978 = vrot.lane.b32.xlu0 %v640, 32
    %v979 = vpop.permute.xlu0 %978
    %982 = vrot.lane.b32.xlu0 %v807, 64
    %v983 = vpop.permute.xlu0 %982
    %986 = vrot.lane.b32.xlu0 %v974, 96
    %v987 = vpop.permute.xlu0 %986
    %v989 = vsel %vm89, %v472, %v979
    %vm990 = vcmask 523264
    %v991 = vsel %vm990, %v989, %v983
    %vm992 = vcmask 785408
    %v993 = vsel %vm992, %v991, %v987
    %994 = vrot.lane.b32.xlu0 %v565, 8
    %v995 = vpop.permute.xlu0 %994
    %997 = vrot.lane.b32.xlu0 %v733, 16
    %v998 = vpop.permute.xlu0 %997
    %1000 = vrot.lane.b32.xlu0 %v900, 24
    %v1001 = vpop.permute.xlu0 %1000
    %v1003 = vsel %vm390, %v401, %v995
    %vm1004 = vcmask 130048
    %v1005 = vsel %vm1004, %v1003, %v998
    %vm1006 = vcmask 195584
    %v1007 = vsel %vm1006, %v1005, %v1001
    %v1008 = vld [vmem:[%s7] sm:$0xff]
    %v1009 = vld [vmem:[%s7 + $0x8] sm:$0xff]
    %v1010 = vld [vmem:[%s7 + $0x10] sm:$0xff]
    %v1011 = vld [vmem:[%s7 + $0x18] sm:$0xff]
    %v1012 = vld [vmem:[%s7 + $0x20] sm:$0xff]
    %v1013 = vld [vmem:[%s7 + $0x28] sm:$0xff]
    %v1014 = vld [vmem:[%s7 + $0x30] sm:$0xff]
    %v1015 = vld [vmem:[%s7 + $0x38] sm:$0xff]
    %v1016 = vld [vmem:[%s7 + $0x40] sm:$0xff]
    %v1017 = vld [vmem:[%s7 + $0x48] sm:$0xff]
    %v1018 = vld [vmem:[%s7 + $0x50] sm:$0xff]
    %v1019 = vld [vmem:[%s7 + $0x58] sm:$0xff]
    %v1020 = vld [vmem:[%s7 + $0x60] sm:$0xff]
    %v1021 = vld [vmem:[%s7 + $0x68] sm:$0xff]
    %v1022 = vld [vmem:[%s7 + $0x70] sm:$0xff]
    %v1023 = vld [vmem:[%s7 + $0x78] sm:$0xff]
    %v1024 = vld [vmem:[%s8] sm:$0x1]
    %v1026 = vlaneseq
    %v1027 = vshrl.u32 %v1026, 7
    %v1028 = vsub.s32 0, %v1027
    %v1029 = vrot.slane %v1024, %v1028
    %1031 = vmatprep.subr.mxu0 0.0
    %1032 = vmatpush1.msra.mxu0 %v1023
    %1033 = vmatprep.subr.mxu0 0.0
    %1034 = vmatpush1.msra.mxu0 %v1022
    %1035 = vmatprep.subr.mxu0 0.0
    %1036 = vmatpush1.msra.mxu0 %v1021
    %1037 = vmatprep.subr.mxu0 0.0
    %1038 = vmatpush1.msra.mxu0 %v1020
    %1039 = vmatprep.subr.mxu0 0.0
    %1040 = vmatpush1.msra.mxu0 %v1019
    %1041 = vmatprep.subr.mxu0 0.0
    %1042 = vmatpush1.msra.mxu0 %v1018
    %1043 = vmatprep.subr.mxu0 0.0
    %1044 = vmatpush1.msra.mxu0 %v1017
    %1045 = vmatprep.subr.mxu0 0.0
    %1046 = vmatpush1.msra.mxu0 %v1016
    %1047 = vmatprep.subr.mxu0 0.0
    %1048 = vmatpush1.msra.mxu0 %v1015
    %1049 = vmatprep.subr.mxu0 0.0
    %1050 = vmatpush1.msra.mxu0 %v1014
    %1051 = vmatprep.subr.mxu0 0.0
    %1052 = vmatpush1.msra.mxu0 %v1013
    %1053 = vmatprep.subr.mxu0 0.0
    %1054 = vmatpush1.msra.mxu0 %v1012
    %1055 = vmatprep.subr.mxu0 0.0
    %1056 = vmatpush1.msra.mxu0 %v1011
    %1057 = vmatprep.subr.mxu0 0.0
    %1058 = vmatpush1.msra.mxu0 %v1010
    %1059 = vmatprep.subr.mxu0 0.0
    %1060 = vmatpush1.msra.mxu0 %v1009
    %1061 = vmatprep.subr.mxu0 0.0
    %1062 = vmatpush1.msra.mxu0 %v1008
    %1063 = vmatprep.subr.mxu0 0.0
    %1064 = vmatpush2.msra.mxu0 0.0
    %1065 = vmatprep.subr.mxu0 0.0
    %1066 = vmatpush2.msra.mxu0 0.0
    %1067 = vmatprep.subr.mxu0 0.0
    %1068 = vmatpush2.msra.mxu0 0.0
    %1069 = vmatprep.subr.mxu0 0.0
    %1070 = vmatpush2.msra.mxu0 0.0
    %1071 = vmatprep.subr.mxu0 0.0
    %1072 = vmatpush2.msra.mxu0 0.0
    %1073 = vmatprep.subr.mxu0 0.0
    %1074 = vmatpush2.msra.mxu0 0.0
    %1075 = vmatprep.subr.mxu0 0.0
    %1076 = vmatpush2.msra.mxu0 0.0
    %1077 = vmatprep.subr.mxu0 0.0
    %1078 = vmatpush2.msra.mxu0 0.0
    %1079 = vmatprep.subr.mxu0 0.0
    %1080 = vmatpush2.msra.mxu0 0.0
    %1081 = vmatprep.subr.mxu0 0.0
    %1082 = vmatpush2.msra.mxu0 0.0
    %1083 = vmatprep.subr.mxu0 0.0
    %1084 = vmatpush2.msra.mxu0 0.0
    %1085 = vmatprep.subr.mxu0 0.0
    %1086 = vmatpush2.msra.mxu0 0.0
    %1087 = vmatprep.subr.mxu0 0.0
    %1088 = vmatpush2.msra.mxu0 0.0
    %1089 = vmatprep.subr.mxu0 0.0
    %1090 = vmatpush2.msra.mxu0 0.0
    %1091 = vmatprep.subr.mxu0 0.0
    %1092 = vmatpush2.msra.mxu0 0.0
    %1093 = vmatprep.subr.mxu0 0.0
    %1094 = vmatpush2.msra.mxu0 0.0
    %1095 = vmatprep.mubr.f32.mxu0 0.0
    %1096 = vmatmul.mubr.f32.gmra.mxu0 %v993
    %v1097 = vpop.f32.mrf.mxu0
    %v1098 = vadd.f32 %v1029, %v1097
    %v1099 = vpop.f32.mrf.mxu0
    %1100 = vdwg.mxu0
    %v1101 = vadd.f32 %v1098, %v82
    %v1102 = vld [vmem:[%s9] sm:$0x1]
    %v1103 = vld [vmem:[%s10] sm:$0x1]
    %v1104 = vsel %vm89, %v1101, 0.0
    %1105 = vadd.xlane.f32.xlu0 %v1104
    %v1106 = vpop.xlane.xlu0 %1105
    %v1107 = vrcp.pop 32.0
    %v1108 = vmul.f32 %v1106, %v1107
    %v1109 = vsub.f32 %v1101, %v1108
    %v1110 = vmul.f32 %v1109, %v1109
    %v1111 = vsel %vm89, %v1110, 0.0
    %1112 = vadd.xlane.f32.xlu0 %v1111
    %v1113 = vpop.xlane.xlu0 %1112
    %v1114 = vmul.f32 %v1113, %v1107
    %v1115 = vadd.f32 %v1114, 1e-05
    %v1116 = vrsqrt.pop %v1115
    %v1117 = vmul.f32 %v1109, %v1116
    %v1119 = vlaneseq
    %v1120 = vshrl.u32 %v1119, 7
    %v1121 = vsub.s32 0, %v1120
    %v1122 = vrot.slane %v1102, %v1121
    %v1124 = vmul.f32 %v1117, %v1122
    %v1126 = vlaneseq
    %v1127 = vshrl.u32 %v1126, 7
    %v1128 = vsub.s32 0, %v1127
    %v1129 = vrot.slane %v1103, %v1128
    %v1131 = vadd.f32 %v1124, %v1129
    %1132 = vst.msk [vmem:[#allocation4] sm:$0xff] %vm89, %v1007
    %v1133 = vld [vmem:[%s3] sm:$0xff]
    %v1134 = vld [vmem:[%s11] sm:$0xff]
    %v1135 = vld [vmem:[%s11 + $0x8] sm:$0xff]
    %v1136 = vld [vmem:[%s11 + $0x10] sm:$0xff]
    %v1137 = vld [vmem:[%s11 + $0x18] sm:$0xff]
    %v1139 = vsel %vm89, %v1131, 0
    %1141 = vmatprep.subr.mxu0 0.0
    %1142 = vmatpush1.msra.mxu0 0.0
    %1143 = vmatprep.subr.mxu0 0.0
    %1144 = vmatpush1.msra.mxu0 0.0
    %1145 = vmatprep.subr.mxu0 0.0
    %1146 = vmatpush1.msra.mxu0 0.0
    %1147 = vmatprep.subr.mxu0 0.0
    %1148 = vmatpush1.msra.mxu0 0.0
    %1149 = vmatprep.subr.mxu0 0.0
    %1150 = vmatpush1.msra.mxu0 0.0
    %1151 = vmatprep.subr.mxu0 0.0
    %1152 = vmatpush1.msra.mxu0 0.0
    %1153 = vmatprep.subr.mxu0 0.0
    %1154 = vmatpush1.msra.mxu0 0.0
    %1155 = vmatprep.subr.mxu0 0.0
    %1156 = vmatpush1.msra.mxu0 0.0
    %1157 = vmatprep.subr.mxu0 0.0
    %1158 = vmatpush1.msra.mxu0 0.0
    %1159 = vmatprep.subr.mxu0 0.0
    %1160 = vmatpush1.msra.mxu0 0.0
    %1161 = vmatprep.subr.mxu0 0.0
    %1162 = vmatpush1.msra.mxu0 0.0
    %1163 = vmatprep.subr.mxu0 0.0
    %1164 = vmatpush1.msra.mxu0 0.0
    %1165 = vmatprep.subr.mxu0 0.0
    %1166 = vmatpush1.msra.mxu0 %v1137
    %1167 = vmatprep.subr.mxu0 0.0
    %1168 = vmatpush1.msra.mxu0 %v1136
    %1169 = vmatprep.subr.mxu0 0.0
    %1170 = vmatpush1.msra.mxu0 %v1135
    %1171 = vmatprep.subr.mxu0 0.0
    %1172 = vmatpush1.msra.mxu0 %v1134
    %1173 = vmatprep.subr.mxu0 0.0
    %1174 = vmatpush2.msra.mxu0 0.0
    %1175 = vmatprep.subr.mxu0 0.0
    %1176 = vmatpush2.msra.mxu0 0.0
    %1177 = vmatprep.subr.mxu0 0.0
    %1178 = vmatpush2.msra.mxu0 0.0
    %1179 = vmatprep.subr.mxu0 0.0
    %1180 = vmatpush2.msra.mxu0 0.0
    %1181 = vmatprep.subr.mxu0 0.0
    %1182 = vmatpush2.msra.mxu0 0.0
    %1183 = vmatprep.subr.mxu0 0.0
    %1184 = vmatpush2.msra.mxu0 0.0
    %1185 = vmatprep.subr.mxu0 0.0
    %1186 = vmatpush2.msra.mxu0 0.0
    %1187 = vmatprep.subr.mxu0 0.0
    %1188 = vmatpush2.msra.mxu0 0.0
    %1189 = vmatprep.subr.mxu0 0.0
    %1190 = vmatpush2.msra.mxu0 0.0
    %1191 = vmatprep.subr.mxu0 0.0
    %1192 = vmatpush2.msra.mxu0 0.0
    %1193 = vmatprep.subr.mxu0 0.0
    %1194 = vmatpush2.msra.mxu0 0.0
    %1195 = vmatprep.subr.mxu0 0.0
    %1196 = vmatpush2.msra.mxu0 0.0
    %1197 = vmatprep.subr.mxu0 0.0
    %1198 = vmatpush2.msra.mxu0 0.0
    %1199 = vmatprep.subr.mxu0 0.0
    %1200 = vmatpush2.msra.mxu0 0.0
    %1201 = vmatprep.subr.mxu0 0.0
    %1202 = vmatpush2.msra.mxu0 0.0
    %1203 = vmatprep.subr.mxu0 0.0
    %1204 = vmatpush2.msra.mxu0 0.0
    %1205 = vmatprep.mubr.f32.mxu0 0.0
    %1206 = vmatmul.mubr.f32.gmra.mxu0 %v1139
    %v1207 = vpop.f32.mrf.mxu0
    %v1208 = vadd.f32 0.0, %v1207
    %v1209 = vpop.f32.mrf.mxu0
    %1210 = vdwg.mxu0
    %v1211 = vld [vmem:[%s12] sm:$0xff]
    %v1212 = vld [vmem:[%s12 + $0x8] sm:$0xff]
    %v1213 = vld [vmem:[%s12 + $0x10] sm:$0xff]
    %v1214 = vld [vmem:[%s12 + $0x18] sm:$0xff]
    %v1216 = vsel %vm89, %v83, 0
    %1218 = vmatprep.subr.mxu0 0.0
    %1219 = vmatpush1.msra.mxu0 0.0
    %1220 = vmatprep.subr.mxu0 0.0
    %1221 = vmatpush1.msra.mxu0 0.0
    %1222 = vmatprep.subr.mxu0 0.0
    %1223 = vmatpush1.msra.mxu0 0.0
    %1224 = vmatprep.subr.mxu0 0.0
    %1225 = vmatpush1.msra.mxu0 0.0
    %1226 = vmatprep.subr.mxu0 0.0
    %1227 = vmatpush1.msra.mxu0 0.0
    %1228 = vmatprep.subr.mxu0 0.0
    %1229 = vmatpush1.msra.mxu0 0.0
    %1230 = vmatprep.subr.mxu0 0.0
    %1231 = vmatpush1.msra.mxu0 0.0
    %1232 = vmatprep.subr.mxu0 0.0
    %1233 = vmatpush1.msra.mxu0 0.0
    %1234 = vmatprep.subr.mxu0 0.0
    %1235 = vmatpush1.msra.mxu0 0.0
    %1236 = vmatprep.subr.mxu0 0.0
    %1237 = vmatpush1.msra.mxu0 0.0
    %1238 = vmatprep.subr.mxu0 0.0
    %1239 = vmatpush1.msra.mxu0 0.0
    %1240 = vmatprep.subr.mxu0 0.0
    %1241 = vmatpush1.msra.mxu0 0.0
    %1242 = vmatprep.subr.mxu0 0.0
    %1243 = vmatpush1.msra.mxu0 %v1214
    %1244 = vmatprep.subr.mxu0 0.0
    %1245 = vmatpush1.msra.mxu0 %v1213
    %1246 = vmatprep.subr.mxu0 0.0
    %1247 = vmatpush1.msra.mxu0 %v1212
    %1248 = vmatprep.subr.mxu0 0.0
    %1249 = vmatpush1.msra.mxu0 %v1211
    %1250 = vmatprep.subr.mxu0 0.0
    %1251 = vmatpush2.msra.mxu0 0.0
    %1252 = vmatprep.subr.mxu0 0.0
    %1253 = vmatpush2.msra.mxu0 0.0
    %1254 = vmatprep.subr.mxu0 0.0
    %1255 = vmatpush2.msra.mxu0 0.0
    %1256 = vmatprep.subr.mxu0 0.0
    %1257 = vmatpush2.msra.mxu0 0.0
    %1258 = vmatprep.subr.mxu0 0.0
    %1259 = vmatpush2.msra.mxu0 0.0
    %1260 = vmatprep.subr.mxu0 0.0
    %1261 = vmatpush2.msra.mxu0 0.0
    %1262 = vmatprep.subr.mxu0 0.0
    %1263 = vmatpush2.msra.mxu0 0.0
    %1264 = vmatprep.subr.mxu0 0.0
    %1265 = vmatpush2.msra.mxu0 0.0
    %1266 = vmatprep.subr.mxu0 0.0
    %1267 = vmatpush2.msra.mxu0 0.0
    %1268 = vmatprep.subr.mxu0 0.0
    %1269 = vmatpush2.msra.mxu0 0.0
    %1270 = vmatprep.subr.mxu0 0.0
    %1271 = vmatpush2.msra.mxu0 0.0
    %1272 = vmatprep.subr.mxu0 0.0
    %1273 = vmatpush2.msra.mxu0 0.0
    %1274 = vmatprep.subr.mxu0 0.0
    %1275 = vmatpush2.msra.mxu0 0.0
    %1276 = vmatprep.subr.mxu0 0.0
    %1277 = vmatpush2.msra.mxu0 0.0
    %1278 = vmatprep.subr.mxu0 0.0
    %1279 = vmatpush2.msra.mxu0 0.0
    %1280 = vmatprep.subr.mxu0 0.0
    %1281 = vmatpush2.msra.mxu0 0.0
    %1282 = vmatprep.mubr.f32.mxu0 0.0
    %1283 = vmatmul.mubr.f32.gmra.mxu0 %v1216
    %v1284 = vpop.f32.mrf.mxu0
    %v1285 = vadd.f32 0.0, %v1284
    %v1286 = vpop.f32.mrf.mxu0
    %1287 = vdwg.mxu0
    %v1288 = vld [vmem:[%s13] sm:$0xff]
    %v1289 = vld [vmem:[%s13 + $0x8] sm:$0xff]
    %v1290 = vld [vmem:[%s13 + $0x10] sm:$0xff]
    %v1291 = vld [vmem:[%s13 + $0x18] sm:$0xff]
    %1292 = vmatprep.subr.mxu0 0.0
    %1293 = vmatpush1.msra.mxu0 0.0
    %1294 = vmatprep.subr.mxu0 0.0
    %1295 = vmatpush1.msra.mxu0 0.0
    %1296 = vmatprep.subr.mxu0 0.0
    %1297 = vmatpush1.msra.mxu0 0.0
    %1298 = vmatprep.subr.mxu0 0.0
    %1299 = vmatpush1.msra.mxu0 0.0
    %1300 = vmatprep.subr.mxu0 0.0
    %1301 = vmatpush1.msra.mxu0 0.0
    %1302 = vmatprep.subr.mxu0 0.0
    %1303 = vmatpush1.msra.mxu0 0.0
    %1304 = vmatprep.subr.mxu0 0.0
    %1305 = vmatpush1.msra.mxu0 0.0
    %1306 = vmatprep.subr.mxu0 0.0
    %1307 = vmatpush1.msra.mxu0 0.0
    %1308 = vmatprep.subr.mxu0 0.0
    %1309 = vmatpush1.msra.mxu0 0.0
    %1310 = vmatprep.subr.mxu0 0.0
    %1311 = vmatpush1.msra.mxu0 0.0
    %1312 = vmatprep.subr.mxu0 0.0
    %1313 = vmatpush1.msra.mxu0 0.0
    %1314 = vmatprep.subr.mxu0 0.0
    %1315 = vmatpush1.msra.mxu0 0.0
    %1316 = vmatprep.subr.mxu0 0.0
    %1317 = vmatpush1.msra.mxu0 %v1291
    %1318 = vmatprep.subr.mxu0 0.0
    %1319 = vmatpush1.msra.mxu0 %v1290
    %1320 = vmatprep.subr.mxu0 0.0
    %1321 = vmatpush1.msra.mxu0 %v1289
    %1322 = vmatprep.subr.mxu0 0.0
    %1323 = vmatpush1.msra.mxu0 %v1288
    %1324 = vmatprep.subr.mxu0 0.0
    %1325 = vmatpush2.msra.mxu0 0.0
    %1326 = vmatprep.subr.mxu0 0.0
    %1327 = vmatpush2.msra.mxu0 0.0
    %1328 = vmatprep.subr.mxu0 0.0
    %1329 = vmatpush2.msra.mxu0 0.0
    %1330 = vmatprep.subr.mxu0 0.0
    %1331 = vmatpush2.msra.mxu0 0.0
    %1332 = vmatprep.subr.mxu0 0.0
    %1333 = vmatpush2.msra.mxu0 0.0
    %1334 = vmatprep.subr.mxu0 0.0
    %1335 = vmatpush2.msra.mxu0 0.0
    %1336 = vmatprep.subr.mxu0 0.0
    %1337 = vmatpush2.msra.mxu0 0.0
    %1338 = vmatprep.subr.mxu0 0.0
    %1339 = vmatpush2.msra.mxu0 0.0
    %1340 = vmatprep.subr.mxu0 0.0
    %1341 = vmatpush2.msra.mxu0 0.0
    %1342 = vmatprep.subr.mxu0 0.0
    %1343 = vmatpush2.msra.mxu0 0.0
    %1344 = vmatprep.subr.mxu0 0.0
    %1345 = vmatpush2.msra.mxu0 0.0
    %1346 = vmatprep.subr.mxu0 0.0
    %1347 = vmatpush2.msra.mxu0 0.0
    %1348 = vmatprep.subr.mxu0 0.0
    %1349 = vmatpush2.msra.mxu0 0.0
    %1350 = vmatprep.subr.mxu0 0.0
    %1351 = vmatpush2.msra.mxu0 0.0
    %1352 = vmatprep.subr.mxu0 0.0
    %1353 = vmatpush2.msra.mxu0 0.0
    %1354 = vmatprep.subr.mxu0 0.0
    %1355 = vmatpush2.msra.mxu0 0.0
    %1356 = vmatprep.mubr.f32.mxu0 0.0
    %1357 = vmatmul.mubr.f32.gmra.mxu0 %v1216
    %v1358 = vpop.f32.mrf.mxu0
    %v1359 = vadd.f32 0.0, %v1358
    %v1360 = vpop.f32.mrf.mxu0
    %1361 = vdwg.mxu0
    %v1363 = vsel %vm89, %v1208, 0
    %v1366 = vsel %vm89, %v1285, 0
    %1368 = vmatprep.subr.mxu0 0.0
    %1369 = vmatpush1.xpose.msra.mxu0 0.0
    %1370 = vmatprep.subr.mxu0 0.0
    %1371 = vmatpush1.xpose.msra.mxu0 0.0
    %1372 = vmatprep.subr.mxu0 0.0
    %1373 = vmatpush1.xpose.msra.mxu0 0.0
    %1374 = vmatprep.subr.mxu0 0.0
    %1375 = vmatpush1.xpose.msra.mxu0 0.0
    %1376 = vmatprep.subr.mxu0 0.0
    %1377 = vmatpush1.xpose.msra.mxu0 0.0
    %1378 = vmatprep.subr.mxu0 0.0
    %1379 = vmatpush1.xpose.msra.mxu0 0.0
    %1380 = vmatprep.subr.mxu0 0.0
    %1381 = vmatpush1.xpose.msra.mxu0 0.0
    %1382 = vmatprep.subr.mxu0 0.0
    %1383 = vmatpush1.xpose.msra.mxu0 0.0
    %1384 = vmatprep.subr.mxu0 0.0
    %1385 = vmatpush1.xpose.msra.mxu0 0.0
    %1386 = vmatprep.subr.mxu0 0.0
    %1387 = vmatpush1.xpose.msra.mxu0 0.0
    %1388 = vmatprep.subr.mxu0 0.0
    %1389 = vmatpush1.xpose.msra.mxu0 0.0
    %1390 = vmatprep.subr.mxu0 0.0
    %1391 = vmatpush1.xpose.msra.mxu0 0.0
    %1392 = vmatprep.subr.mxu0 0.0
    %1393 = vmatpush1.xpose.msra.mxu0 0.0
    %1394 = vmatprep.subr.mxu0 0.0
    %1395 = vmatpush1.xpose.msra.mxu0 0.0
    %1396 = vmatprep.subr.mxu0 0.0
    %1397 = vmatpush1.xpose.msra.mxu0 0.0
    %1398 = vmatprep.subr.mxu0 0.0
    %1399 = vmatpush1.xpose.msra.mxu0 %v1366
    %1400 = vmatprep.subr.mxu0 0.0
    %1401 = vmatpush2.xpose.msra.mxu0 0.0
    %1402 = vmatprep.subr.mxu0 0.0
    %1403 = vmatpush2.xpose.msra.mxu0 0.0
    %1404 = vmatprep.subr.mxu0 0.0
    %1405 = vmatpush2.xpose.msra.mxu0 0.0
    %1406 = vmatprep.subr.mxu0 0.0
    %1407 = vmatpush2.xpose.msra.mxu0 0.0
    %1408 = vmatprep.subr.mxu0 0.0
    %1409 = vmatpush2.xpose.msra.mxu0 0.0
    %1410 = vmatprep.subr.mxu0 0.0
    %1411 = vmatpush2.xpose.msra.mxu0 0.0
    %1412 = vmatprep.subr.mxu0 0.0
    %1413 = vmatpush2.xpose.msra.mxu0 0.0
    %1414 = vmatprep.subr.mxu0 0.0
    %1415 = vmatpush2.xpose.msra.mxu0 0.0
    %1416 = vmatprep.subr.mxu0 0.0
    %1417 = vmatpush2.xpose.msra.mxu0 0.0
    %1418 = vmatprep.subr.mxu0 0.0
    %1419 = vmatpush2.xpose.msra.mxu0 0.0
    %1420 = vmatprep.subr.mxu0 0.0
    %1421 = vmatpush2.xpose.msra.mxu0 0.0
    %1422 = vmatprep.subr.mxu0 0.0
    %1423 = vmatpush2.xpose.msra.mxu0 0.0
    %1424 = vmatprep.subr.mxu0 0.0
    %1425 = vmatpush2.xpose.msra.mxu0 0.0
    %1426 = vmatprep.subr.mxu0 0.0
    %1427 = vmatpush2.xpose.msra.mxu0 0.0
    %1428 = vmatprep.subr.mxu0 0.0
    %1429 = vmatpush2.xpose.msra.mxu0 0.0
    %1430 = vmatprep.subr.mxu0 0.0
    %1431 = vmatpush2.xpose.msra.mxu0 0.0
    %1432 = vmatprep.mubr.f32.mxu0 0.0
    %1433 = vmatmul.mubr.f32.gmra.mxu0 %v1363
    %v1434 = vpop.f32.mrf.mxu0
    %v1435 = vadd.f32 0.0, %v1434
    %v1436 = vpop.f32.mrf.mxu0
    %1437 = vdwg.mxu0
    %v1438 = vmul.f32 %v1435, 0.17677669
    %vm1439 = vcmp.ne.s32.totalorder %v1133, 0
    %v1440 = vsel %vm1439, -1e+30, %v1438
    %v1441 = vsel %vm390, %v1440, -inf
    %1442 = vmax.xlane.f32.xlu0 %v1441
    %v1443 = vpop.xlane.xlu0 %1442
    %v1444 = vsub.f32 %v1440, %v1443
    %v1445 = vmul.f32 %v1444, 1.442695
    %v1446 = vpow.pop %v1445
    %v1447 = vsel %vm390, %v1446, 0.0
    %1448 = vadd.xlane.f32.xlu0 %v1447
    %v1449 = vpop.xlane.xlu0 %1448
    %v1450 = vrcp.pop %v1449
    %v1451 = vmul.f32 %v1446, %v1450
    %v1453 = vsel %vm390, %v1451, 0
    %1455 = vmatprep.subr.mxu0 0.0
    %1456 = vmatpush1.msra.mxu0 0.0
    %1457 = vmatprep.subr.mxu0 0.0
    %1458 = vmatpush1.msra.mxu0 0.0
    %1459 = vmatprep.subr.mxu0 0.0
    %1460 = vmatpush1.msra.mxu0 0.0
    %1461 = vmatprep.subr.mxu0 0.0
    %1462 = vmatpush1.msra.mxu0 0.0
    %1463 = vmatprep.subr.mxu0 0.0
    %1464 = vmatpush1.msra.mxu0 0.0
    %1465 = vmatprep.subr.mxu0 0.0
    %1466 = vmatpush1.msra.mxu0 0.0
    %1467 = vmatprep.subr.mxu0 0.0
    %1468 = vmatpush1.msra.mxu0 0.0
    %1469 = vmatprep.subr.mxu0 0.0
    %1470 = vmatpush1.msra.mxu0 0.0
    %1471 = vmatprep.subr.mxu0 0.0
    %1472 = vmatpush1.msra.mxu0 0.0
    %1473 = vmatprep.subr.mxu0 0.0
    %1474 = vmatpush1.msra.mxu0 0.0
    %1475 = vmatprep.subr.mxu0 0.0
    %1476 = vmatpush1.msra.mxu0 0.0
    %1477 = vmatprep.subr.mxu0 0.0
    %1478 = vmatpush1.msra.mxu0 0.0
    %1479 = vmatprep.subr.mxu0 0.0
    %1480 = vmatpush1.msra.mxu0 0.0
    %1481 = vmatprep.subr.mxu0 0.0
    %1482 = vmatpush1.msra.mxu0 0.0
    %1483 = vmatprep.subr.mxu0 0.0
    %1484 = vmatpush1.msra.mxu0 0.0
    %1485 = vmatprep.subr.mxu0 0.0
    %1486 = vmatpush1.msra.mxu0 %v1359
    %1487 = vmatprep.subr.mxu0 0.0
    %1488 = vmatpush2.msra.mxu0 0.0
    %1489 = vmatprep.subr.mxu0 0.0
    %1490 = vmatpush2.msra.mxu0 0.0
    %1491 = vmatprep.subr.mxu0 0.0
    %1492 = vmatpush2.msra.mxu0 0.0
    %1493 = vmatprep.subr.mxu0 0.0
    %1494 = vmatpush2.msra.mxu0 0.0
    %1495 = vmatprep.subr.mxu0 0.0
    %1496 = vmatpush2.msra.mxu0 0.0
    %1497 = vmatprep.subr.mxu0 0.0
    %1498 = vmatpush2.msra.mxu0 0.0
    %1499 = vmatprep.subr.mxu0 0.0
    %1500 = vmatpush2.msra.mxu0 0.0
    %1501 = vmatprep.subr.mxu0 0.0
    %1502 = vmatpush2.msra.mxu0 0.0
    %1503 = vmatprep.subr.mxu0 0.0
    %1504 = vmatpush2.msra.mxu0 0.0
    %1505 = vmatprep.subr.mxu0 0.0
    %1506 = vmatpush2.msra.mxu0 0.0
    %1507 = vmatprep.subr.mxu0 0.0
    %1508 = vmatpush2.msra.mxu0 0.0
    %1509 = vmatprep.subr.mxu0 0.0
    %1510 = vmatpush2.msra.mxu0 0.0
    %1511 = vmatprep.subr.mxu0 0.0
    %1512 = vmatpush2.msra.mxu0 0.0
    %1513 = vmatprep.subr.mxu0 0.0
    %1514 = vmatpush2.msra.mxu0 0.0
    %1515 = vmatprep.subr.mxu0 0.0
    %1516 = vmatpush2.msra.mxu0 0.0
    %1517 = vmatprep.subr.mxu0 0.0
    %1518 = vmatpush2.msra.mxu0 0.0
    %1519 = vmatprep.mubr.f32.mxu0 0.0
    %1520 = vmatmul.mubr.f32.gmra.mxu0 %v1453
    %v1521 = vpop.f32.mrf.mxu0
    %v1522 = vadd.f32 0.0, %v1521
    %v1523 = vpop.f32.mrf.mxu0
    %1524 = vdwg.mxu0
    %1525 = vrot.lane.b32.xlu0 %v1208, 96
    %v1526 = vpop.permute.xlu0 %1525
    %1527 = vrot.lane.b32.xlu0 %v1285, 96
    %v1528 = vpop.permute.xlu0 %1527
    %v1529 = vsel %vm89, %v1526, 0
    %v1531 = vsel %vm89, %v1528, 0
    %1533 = vmatprep.subr.mxu0 0.0
    %1534 = vmatpush1.xpose.msra.mxu0 0.0
    %1535 = vmatprep.subr.mxu0 0.0
    %1536 = vmatpush1.xpose.msra.mxu0 0.0
    %1537 = vmatprep.subr.mxu0 0.0
    %1538 = vmatpush1.xpose.msra.mxu0 0.0
    %1539 = vmatprep.subr.mxu0 0.0
    %1540 = vmatpush1.xpose.msra.mxu0 0.0
    %1541 = vmatprep.subr.mxu0 0.0
    %1542 = vmatpush1.xpose.msra.mxu0 0.0
    %1543 = vmatprep.subr.mxu0 0.0
    %1544 = vmatpush1.xpose.msra.mxu0 0.0
    %1545 = vmatprep.subr.mxu0 0.0
    %1546 = vmatpush1.xpose.msra.mxu0 0.0
    %1547 = vmatprep.subr.mxu0 0.0
    %1548 = vmatpush1.xpose.msra.mxu0 0.0
    %1549 = vmatprep.subr.mxu0 0.0
    %1550 = vmatpush1.xpose.msra.mxu0 0.0
    %1551 = vmatprep.subr.mxu0 0.0
    %1552 = vmatpush1.xpose.msra.mxu0 0.0
    %1553 = vmatprep.subr.mxu0 0.0
    %1554 = vmatpush1.xpose.msra.mxu0 0.0
    %1555 = vmatprep.subr.mxu0 0.0
    %1556 = vmatpush1.xpose.msra.mxu0 0.0
    %1557 = vmatprep.subr.mxu0 0.0
    %1558 = vmatpush1.xpose.msra.mxu0 0.0
    %1559 = vmatprep.subr.mxu0 0.0
    %1560 = vmatpush1.xpose.msra.mxu0 0.0
    %1561 = vmatprep.subr.mxu0 0.0
    %1562 = vmatpush1.xpose.msra.mxu0 0.0
    %1563 = vmatprep.subr.mxu0 0.0
    %1564 = vmatpush1.xpose.msra.mxu0 %v1531
    %1565 = vmatprep.subr.mxu0 0.0
    %1566 = vmatpush2.xpose.msra.mxu0 0.0
    %1567 = vmatprep.subr.mxu0 0.0
    %1568 = vmatpush2.xpose.msra.mxu0 0.0
    %1569 = vmatprep.subr.mxu0 0.0
    %1570 = vmatpush2.xpose.msra.mxu0 0.0
    %1571 = vmatprep.subr.mxu0 0.0
    %1572 = vmatpush2.xpose.msra.mxu0 0.0
    %1573 = vmatprep.subr.mxu0 0.0
    %1574 = vmatpush2.xpose.msra.mxu0 0.0
    %1575 = vmatprep.subr.mxu0 0.0
    %1576 = vmatpush2.xpose.msra.mxu0 0.0
    %1577 = vmatprep.subr.mxu0 0.0
    %1578 = vmatpush2.xpose.msra.mxu0 0.0
    %1579 = vmatprep.subr.mxu0 0.0
    %1580 = vmatpush2.xpose.msra.mxu0 0.0
    %1581 = vmatprep.subr.mxu0 0.0
    %1582 = vmatpush2.xpose.msra.mxu0 0.0
    %1583 = vmatprep.subr.mxu0 0.0
    %1584 = vmatpush2.xpose.msra.mxu0 0.0
    %1585 = vmatprep.subr.mxu0 0.0
    %1586 = vmatpush2.xpose.msra.mxu0 0.0
    %1587 = vmatprep.subr.mxu0 0.0
    %1588 = vmatpush2.xpose.msra.mxu0 0.0
    %1589 = vmatprep.subr.mxu0 0.0
    %1590 = vmatpush2.xpose.msra.mxu0 0.0
    %1591 = vmatprep.subr.mxu0 0.0
    %1592 = vmatpush2.xpose.msra.mxu0 0.0
    %1593 = vmatprep.subr.mxu0 0.0
    %1594 = vmatpush2.xpose.msra.mxu0 0.0
    %1595 = vmatprep.subr.mxu0 0.0
    %1596 = vmatpush2.xpose.msra.mxu0 0.0
    %1597 = vmatprep.mubr.f32.mxu0 0.0
    %1598 = vmatmul.mubr.f32.gmra.mxu0 %v1529
    %v1599 = vpop.f32.mrf.mxu0
    %v1600 = vadd.f32 0.0, %v1599
    %v1601 = vpop.f32.mrf.mxu0
    %1602 = vdwg.mxu0
    %v1603 = vmul.f32 %v1600, 0.17677669
    %v1604 = vsel %vm1439, -1e+30, %v1603
    %v1605 = vsel %vm390, %v1604, -inf
    %1606 = vmax.xlane.f32.xlu0 %v1605
    %v1607 = vpop.xlane.xlu0 %1606
    %v1608 = vsub.f32 %v1604, %v1607
    %v1609 = vmul.f32 %v1608, 1.442695
    %v1610 = vpow.pop %v1609
    %v1611 = vsel %vm390, %v1610, 0.0
    %1612 = vadd.xlane.f32.xlu0 %v1611
    %v1613 = vpop.xlane.xlu0 %1612
    %v1614 = vrcp.pop %v1613
    %v1615 = vmul.f32 %v1610, %v1614
    %1617 = vrot.lane.b32.xlu0 %v1359, 96
    %v1618 = vpop.permute.xlu0 %1617
    %v1621 = vsel %vm390, %v1615, 0
    %1623 = vmatprep.subr.mxu0 0.0
    %1624 = vmatpush1.msra.mxu0 0.0
    %1625 = vmatprep.subr.mxu0 0.0
    %1626 = vmatpush1.msra.mxu0 0.0
    %1627 = vmatprep.subr.mxu0 0.0
    %1628 = vmatpush1.msra.mxu0 0.0
    %1629 = vmatprep.subr.mxu0 0.0
    %1630 = vmatpush1.msra.mxu0 0.0
    %1631 = vmatprep.subr.mxu0 0.0
    %1632 = vmatpush1.msra.mxu0 0.0
    %1633 = vmatprep.subr.mxu0 0.0
    %1634 = vmatpush1.msra.mxu0 0.0
    %1635 = vmatprep.subr.mxu0 0.0
    %1636 = vmatpush1.msra.mxu0 0.0
    %1637 = vmatprep.subr.mxu0 0.0
    %1638 = vmatpush1.msra.mxu0 0.0
    %1639 = vmatprep.subr.mxu0 0.0
    %1640 = vmatpush1.msra.mxu0 0.0
    %1641 = vmatprep.subr.mxu0 0.0
    %1642 = vmatpush1.msra.mxu0 0.0
    %1643 = vmatprep.subr.mxu0 0.0
    %1644 = vmatpush1.msra.mxu0 0.0
    %1645 = vmatprep.subr.mxu0 0.0
    %1646 = vmatpush1.msra.mxu0 0.0
    %1647 = vmatprep.subr.mxu0 0.0
    %1648 = vmatpush1.msra.mxu0 0.0
    %1649 = vmatprep.subr.mxu0 0.0
    %1650 = vmatpush1.msra.mxu0 0.0
    %1651 = vmatprep.subr.mxu0 0.0
    %1652 = vmatpush1.msra.mxu0 0.0
    %1653 = vmatprep.subr.mxu0 0.0
    %1654 = vmatpush1.msra.mxu0 %v1618
    %1655 = vmatprep.subr.mxu0 0.0
    %1656 = vmatpush2.msra.mxu0 0.0
    %1657 = vmatprep.subr.mxu0 0.0
    %1658 = vmatpush2.msra.mxu0 0.0
    %1659 = vmatprep.subr.mxu0 0.0
    %1660 = vmatpush2.msra.mxu0 0.0
    %1661 = vmatprep.subr.mxu0 0.0
    %1662 = vmatpush2.msra.mxu0 0.0
    %1663 = vmatprep.subr.mxu0 0.0
    %1664 = vmatpush2.msra.mxu0 0.0
    %1665 = vmatprep.subr.mxu0 0.0
    %1666 = vmatpush2.msra.mxu0 0.0
    %1667 = vmatprep.subr.mxu0 0.0
    %1668 = vmatpush2.msra.mxu0 0.0
    %1669 = vmatprep.subr.mxu0 0.0
    %1670 = vmatpush2.msra.mxu0 0.0
    %1671 = vmatprep.subr.mxu0 0.0
    %1672 = vmatpush2.msra.mxu0 0.0
    %1673 = vmatprep.subr.mxu0 0.0
    %1674 = vmatpush2.msra.mxu0 0.0
    %1675 = vmatprep.subr.mxu0 0.0
    %1676 = vmatpush2.msra.mxu0 0.0
    %1677 = vmatprep.subr.mxu0 0.0
    %1678 = vmatpush2.msra.mxu0 0.0
    %1679 = vmatprep.subr.mxu0 0.0
    %1680 = vmatpush2.msra.mxu0 0.0
    %1681 = vmatprep.subr.mxu0 0.0
    %1682 = vmatpush2.msra.mxu0 0.0
    %1683 = vmatprep.subr.mxu0 0.0
    %1684 = vmatpush2.msra.mxu0 0.0
    %1685 = vmatprep.subr.mxu0 0.0
    %1686 = vmatpush2.msra.mxu0 0.0
    %1687 = vmatprep.mubr.f32.mxu0 0.0
    %1688 = vmatmul.mubr.f32.gmra.mxu0 %v1621
    %v1689 = vpop.f32.mrf.mxu0
    %v1690 = vadd.f32 0.0, %v1689
    %v1691 = vpop.f32.mrf.mxu0
    %1692 = vdwg.mxu0
    %1693 = vrot.lane.b32.xlu0 %v1208, 64
    %v1694 = vpop.permute.xlu0 %1693
    %1695 = vrot.lane.b32.xlu0 %v1285, 64
    %v1696 = vpop.permute.xlu0 %1695
    %v1697 = vsel %vm89, %v1694, 0
    %v1699 = vsel %vm89, %v1696, 0
    %1701 = vmatprep.subr.mxu0 0.0
    %1702 = vmatpush1.xpose.msra.mxu0 0.0
    %1703 = vmatprep.subr.mxu0 0.0
    %1704 = vmatpush1.xpose.msra.mxu0 0.0
    %1705 = vmatprep.subr.mxu0 0.0
    %1706 = vmatpush1.xpose.msra.mxu0 0.0
    %1707 = vmatprep.subr.mxu0 0.0
    %1708 = vmatpush1.xpose.msra.mxu0 0.0
    %1709 = vmatprep.subr.mxu0 0.0
    %1710 = vmatpush1.xpose.msra.mxu0 0.0
    %1711 = vmatprep.subr.mxu0 0.0
    %1712 = vmatpush1.xpose.msra.mxu0 0.0
    %1713 = vmatprep.subr.mxu0 0.0
    %1714 = vmatpush1.xpose.msra.mxu0 0.0
    %1715 = vmatprep.subr.mxu0 0.0
    %1716 = vmatpush1.xpose.msra.mxu0 0.0
    %1717 = vmatprep.subr.mxu0 0.0
    %1718 = vmatpush1.xpose.msra.mxu0 0.0
    %1719 = vmatprep.subr.mxu0 0.0
    %1720 = vmatpush1.xpose.msra.mxu0 0.0
    %1721 = vmatprep.subr.mxu0 0.0
    %1722 = vmatpush1.xpose.msra.mxu0 0.0
    %1723 = vmatprep.subr.mxu0 0.0
    %1724 = vmatpush1.xpose.msra.mxu0 0.0
    %1725 = vmatprep.subr.mxu0 0.0
    %1726 = vmatpush1.xpose.msra.mxu0 0.0
    %1727 = vmatprep.subr.mxu0 0.0
    %1728 = vmatpush1.xpose.msra.mxu0 0.0
    %1729 = vmatprep.subr.mxu0 0.0
    %1730 = vmatpush1.xpose.msra.mxu0 0.0
    %1731 = vmatprep.subr.mxu0 0.0
    %1732 = vmatpush1.xpose.msra.mxu0 %v1699
    %1733 = vmatprep.subr.mxu0 0.0
    %1734 = vmatpush2.xpose.msra.mxu0 0.0
    %1735 = vmatprep.subr.mxu0 0.0
    %1736 = vmatpush2.xpose.msra.mxu0 0.0
    %1737 = vmatprep.subr.mxu0 0.0
    %1738 = vmatpush2.xpose.msra.mxu0 0.0
    %1739 = vmatprep.subr.mxu0 0.0
    %1740 = vmatpush2.xpose.msra.mxu0 0.0
    %1741 = vmatprep.subr.mxu0 0.0
    %1742 = vmatpush2.xpose.msra.mxu0 0.0
    %1743 = vmatprep.subr.mxu0 0.0
    %1744 = vmatpush2.xpose.msra.mxu0 0.0
    %1745 = vmatprep.subr.mxu0 0.0
    %1746 = vmatpush2.xpose.msra.mxu0 0.0
    %1747 = vmatprep.subr.mxu0 0.0
    %1748 = vmatpush2.xpose.msra.mxu0 0.0
    %1749 = vmatprep.subr.mxu0 0.0
    %1750 = vmatpush2.xpose.msra.mxu0 0.0
    %1751 = vmatprep.subr.mxu0 0.0
    %1752 = vmatpush2.xpose.msra.mxu0 0.0
    %1753 = vmatprep.subr.mxu0 0.0
    %1754 = vmatpush2.xpose.msra.mxu0 0.0
    %1755 = vmatprep.subr.mxu0 0.0
    %1756 = vmatpush2.xpose.msra.mxu0 0.0
    %1757 = vmatprep.subr.mxu0 0.0
    %1758 = vmatpush2.xpose.msra.mxu0 0.0
    %1759 = vmatprep.subr.mxu0 0.0
    %1760 = vmatpush2.xpose.msra.mxu0 0.0
    %1761 = vmatprep.subr.mxu0 0.0
    %1762 = vmatpush2.xpose.msra.mxu0 0.0
    %1763 = vmatprep.subr.mxu0 0.0
    %1764 = vmatpush2.xpose.msra.mxu0 0.0
    %1765 = vmatprep.mubr.f32.mxu0 0.0
    %1766 = vmatmul.mubr.f32.gmra.mxu0 %v1697
    %v1767 = vpop.f32.mrf.mxu0
    %v1768 = vadd.f32 0.0, %v1767
    %v1769 = vpop.f32.mrf.mxu0
    %1770 = vdwg.mxu0
    %v1771 = vmul.f32 %v1768, 0.17677669
    %v1772 = vsel %vm1439, -1e+30, %v1771
    %v1773 = vsel %vm390, %v1772, -inf
    %1774 = vmax.xlane.f32.xlu0 %v1773
    %v1775 = vpop.xlane.xlu0 %1774
    %v1776 = vsub.f32 %v1772, %v1775
    %v1777 = vmul.f32 %v1776, 1.442695
    %v1778 = vpow.pop %v1777
    %v1779 = vsel %vm390, %v1778, 0.0
    %1780 = vadd.xlane.f32.xlu0 %v1779
    %v1781 = vpop.xlane.xlu0 %1780
    %v1782 = vrcp.pop %v1781
    %v1783 = vmul.f32 %v1778, %v1782
    %1784 = vrot.lane.b32.xlu0 %v1359, 64
    %v1785 = vpop.permute.xlu0 %1784
    %v1788 = vsel %vm390, %v1783, 0
    %1790 = vmatprep.subr.mxu0 0.0
    %1791 = vmatpush1.msra.mxu0 0.0
    %1792 = vmatprep.subr.mxu0 0.0
    %1793 = vmatpush1.msra.mxu0 0.0
    %1794 = vmatprep.subr.mxu0 0.0
    %1795 = vmatpush1.msra.mxu0 0.0
    %1796 = vmatprep.subr.mxu0 0.0
    %1797 = vmatpush1.msra.mxu0 0.0
    %1798 = vmatprep.subr.mxu0 0.0
    %1799 = vmatpush1.msra.mxu0 0.0
    %1800 = vmatprep.subr.mxu0 0.0
    %1801 = vmatpush1.msra.mxu0 0.0
    %1802 = vmatprep.subr.mxu0 0.0
    %1803 = vmatpush1.msra.mxu0 0.0
    %1804 = vmatprep.subr.mxu0 0.0
    %1805 = vmatpush1.msra.mxu0 0.0
    %1806 = vmatprep.subr.mxu0 0.0
    %1807 = vmatpush1.msra.mxu0 0.0
    %1808 = vmatprep.subr.mxu0 0.0
    %1809 = vmatpush1.msra.mxu0 0.0
    %1810 = vmatprep.subr.mxu0 0.0
    %1811 = vmatpush1.msra.mxu0 0.0
    %1812 = vmatprep.subr.mxu0 0.0
    %1813 = vmatpush1.msra.mxu0 0.0
    %1814 = vmatprep.subr.mxu0 0.0
    %1815 = vmatpush1.msra.mxu0 0.0
    %1816 = vmatprep.subr.mxu0 0.0
    %1817 = vmatpush1.msra.mxu0 0.0
    %1818 = vmatprep.subr.mxu0 0.0
    %1819 = vmatpush1.msra.mxu0 0.0
    %1820 = vmatprep.subr.mxu0 0.0
    %1821 = vmatpush1.msra.mxu0 %v1785
    %1822 = vmatprep.subr.mxu0 0.0
    %1823 = vmatpush2.msra.mxu0 0.0
    %1824 = vmatprep.subr.mxu0 0.0
    %1825 = vmatpush2.msra.mxu0 0.0
    %1826 = vmatprep.subr.mxu0 0.0
    %1827 = vmatpush2.msra.mxu0 0.0
    %1828 = vmatprep.subr.mxu0 0.0
    %1829 = vmatpush2.msra.mxu0 0.0
    %1830 = vmatprep.subr.mxu0 0.0
    %1831 = vmatpush2.msra.mxu0 0.0
    %1832 = vmatprep.subr.mxu0 0.0
    %1833 = vmatpush2.msra.mxu0 0.0
    %1834 = vmatprep.subr.mxu0 0.0
    %1835 = vmatpush2.msra.mxu0 0.0
    %1836 = vmatprep.subr.mxu0 0.0
    %1837 = vmatpush2.msra.mxu0 0.0
    %1838 = vmatprep.subr.mxu0 0.0
    %1839 = vmatpush2.msra.mxu0 0.0
    %1840 = vmatprep.subr.mxu0 0.0
    %1841 = vmatpush2.msra.mxu0 0.0
    %1842 = vmatprep.subr.mxu0 0.0
    %1843 = vmatpush2.msra.mxu0 0.0
    %1844 = vmatprep.subr.mxu0 0.0
    %1845 = vmatpush2.msra.mxu0 0.0
    %1846 = vmatprep.subr.mxu0 0.0
    %1847 = vmatpush2.msra.mxu0 0.0
    %1848 = vmatprep.subr.mxu0 0.0
    %1849 = vmatpush2.msra.mxu0 0.0
    %1850 = vmatprep.subr.mxu0 0.0
    %1851 = vmatpush2.msra.mxu0 0.0
    %1852 = vmatprep.subr.mxu0 0.0
    %1853 = vmatpush2.msra.mxu0 0.0
    %1854 = vmatprep.mubr.f32.mxu0 0.0
    %1855 = vmatmul.mubr.f32.gmra.mxu0 %v1788
    %v1856 = vpop.f32.mrf.mxu0
    %v1857 = vadd.f32 0.0, %v1856
    %v1858 = vpop.f32.mrf.mxu0
    %1859 = vdwg.mxu0
    %1860 = vrot.lane.b32.xlu0 %v1208, 32
    %v1861 = vpop.permute.xlu0 %1860
    %1862 = vrot.lane.b32.xlu0 %v1285, 32
    %v1863 = vpop.permute.xlu0 %1862
    %v1864 = vsel %vm89, %v1861, 0
    %v1866 = vsel %vm89, %v1863, 0
    %1868 = vmatprep.subr.mxu0 0.0
    %1869 = vmatpush1.xpose.msra.mxu0 0.0
    %1870 = vmatprep.subr.mxu0 0.0
    %1871 = vmatpush1.xpose.msra.mxu0 0.0
    %1872 = vmatprep.subr.mxu0 0.0
    %1873 = vmatpush1.xpose.msra.mxu0 0.0
    %1874 = vmatprep.subr.mxu0 0.0
    %1875 = vmatpush1.xpose.msra.mxu0 0.0
    %1876 = vmatprep.subr.mxu0 0.0
    %1877 = vmatpush1.xpose.msra.mxu0 0.0
    %1878 = vmatprep.subr.mxu0 0.0
    %1879 = vmatpush1.xpose.msra.mxu0 0.0
    %1880 = vmatprep.subr.mxu0 0.0
    %1881 = vmatpush1.xpose.msra.mxu0 0.0
    %1882 = vmatprep.subr.mxu0 0.0
    %1883 = vmatpush1.xpose.msra.mxu0 0.0
    %1884 = vmatprep.subr.mxu0 0.0
    %1885 = vmatpush1.xpose.msra.mxu0 0.0
    %1886 = vmatprep.subr.mxu0 0.0
    %1887 = vmatpush1.xpose.msra.mxu0 0.0
    %1888 = vmatprep.subr.mxu0 0.0
    %1889 = vmatpush1.xpose.msra.mxu0 0.0
    %1890 = vmatprep.subr.mxu0 0.0
    %1891 = vmatpush1.xpose.msra.mxu0 0.0
    %1892 = vmatprep.subr.mxu0 0.0
    %1893 = vmatpush1.xpose.msra.mxu0 0.0
    %1894 = vmatprep.subr.mxu0 0.0
    %1895 = vmatpush1.xpose.msra.mxu0 0.0
    %1896 = vmatprep.subr.mxu0 0.0
    %1897 = vmatpush1.xpose.msra.mxu0 0.0
    %1898 = vmatprep.subr.mxu0 0.0
    %1899 = vmatpush1.xpose.msra.mxu0 %v1866
    %1900 = vmatprep.subr.mxu0 0.0
    %1901 = vmatpush2.xpose.msra.mxu0 0.0
    %1902 = vmatprep.subr.mxu0 0.0
    %1903 = vmatpush2.xpose.msra.mxu0 0.0
    %1904 = vmatprep.subr.mxu0 0.0
    %1905 = vmatpush2.xpose.msra.mxu0 0.0
    %1906 = vmatprep.subr.mxu0 0.0
    %1907 = vmatpush2.xpose.msra.mxu0 0.0
    %1908 = vmatprep.subr.mxu0 0.0
    %1909 = vmatpush2.xpose.msra.mxu0 0.0
    %1910 = vmatprep.subr.mxu0 0.0
    %1911 = vmatpush2.xpose.msra.mxu0 0.0
    %1912 = vmatprep.subr.mxu0 0.0
    %1913 = vmatpush2.xpose.msra.mxu0 0.0
    %1914 = vmatprep.subr.mxu0 0.0
    %1915 = vmatpush2.xpose.msra.mxu0 0.0
    %1916 = vmatprep.subr.mxu0 0.0
    %1917 = vmatpush2.xpose.msra.mxu0 0.0
    %1918 = vmatprep.subr.mxu0 0.0
    %1919 = vmatpush2.xpose.msra.mxu0 0.0
    %1920 = vmatprep.subr.mxu0 0.0
    %1921 = vmatpush2.xpose.msra.mxu0 0.0
    %1922 = vmatprep.subr.mxu0 0.0
    %1923 = vmatpush2.xpose.msra.mxu0 0.0
    %1924 = vmatprep.subr.mxu0 0.0
    %1925 = vmatpush2.xpose.msra.mxu0 0.0
    %1926 = vmatprep.subr.mxu0 0.0
    %1927 = vmatpush2.xpose.msra.mxu0 0.0
    %1928 = vmatprep.subr.mxu0 0.0
    %1929 = vmatpush2.xpose.msra.mxu0 0.0
    %1930 = vmatprep.subr.mxu0 0.0
    %1931 = vmatpush2.xpose.msra.mxu0 0.0
    %1932 = vmatprep.mubr.f32.mxu0 0.0
    %1933 = vmatmul.mubr.f32.gmra.mxu0 %v1864
    %v1934 = vpop.f32.mrf.mxu0
    %v1935 = vadd.f32 0.0, %v1934
    %v1936 = vpop.f32.mrf.mxu0
    %1937 = vdwg.mxu0
    %v1938 = vmul.f32 %v1935, 0.17677669
    %v1939 = vsel %vm1439, -1e+30, %v1938
    %v1940 = vsel %vm390, %v1939, -inf
    %1941 = vmax.xlane.f32.xlu0 %v1940
    %v1942 = vpop.xlane.xlu0 %1941
    %v1943 = vsub.f32 %v1939, %v1942
    %v1944 = vmul.f32 %v1943, 1.442695
    %v1945 = vpow.pop %v1944
    %v1946 = vsel %vm390, %v1945, 0.0
    %1947 = vadd.xlane.f32.xlu0 %v1946
    %v1948 = vpop.xlane.xlu0 %1947
    %v1949 = vrcp.pop %v1948
    %v1950 = vmul.f32 %v1945, %v1949
    %1951 = vrot.lane.b32.xlu0 %v1359, 32
    %v1952 = vpop.permute.xlu0 %1951
    %v1955 = vsel %vm390, %v1950, 0
    %1957 = vmatprep.subr.mxu0 0.0
    %1958 = vmatpush1.msra.mxu0 0.0
    %1959 = vmatprep.subr.mxu0 0.0
    %1960 = vmatpush1.msra.mxu0 0.0
    %1961 = vmatprep.subr.mxu0 0.0
    %1962 = vmatpush1.msra.mxu0 0.0
    %1963 = vmatprep.subr.mxu0 0.0
    %1964 = vmatpush1.msra.mxu0 0.0
    %1965 = vmatprep.subr.mxu0 0.0
    %1966 = vmatpush1.msra.mxu0 0.0
    %1967 = vmatprep.subr.mxu0 0.0
    %1968 = vmatpush1.msra.mxu0 0.0
    %1969 = vmatprep.subr.mxu0 0.0
    %1970 = vmatpush1.msra.mxu0 0.0
    %1971 = vmatprep.subr.mxu0 0.0
    %1972 = vmatpush1.msra.mxu0 0.0
    %1973 = vmatprep.subr.mxu0 0.0
    %1974 = vmatpush1.msra.mxu0 0.0
    %1975 = vmatprep.subr.mxu0 0.0
    %1976 = vmatpush1.msra.mxu0 0.0
    %1977 = vmatprep.subr.mxu0 0.0
    %1978 = vmatpush1.msra.mxu0 0.0
    %1979 = vmatprep.subr.mxu0 0.0
    %1980 = vmatpush1.msra.mxu0 0.0
    %1981 = vmatprep.subr.mxu0 0.0
    %1982 = vmatpush1.msra.mxu0 0.0
    %1983 = vmatprep.subr.mxu0 0.0
    %1984 = vmatpush1.msra.mxu0 0.0
    %1985 = vmatprep.subr.mxu0 0.0
    %1986 = vmatpush1.msra.mxu0 0.0
    %1987 = vmatprep.subr.mxu0 0.0
    %1988 = vmatpush1.msra.mxu0 %v1952
    %1989 = vmatprep.subr.mxu0 0.0
    %1990 = vmatpush2.msra.mxu0 0.0
    %1991 = vmatprep.subr.mxu0 0.0
    %1992 = vmatpush2.msra.mxu0 0.0
    %1993 = vmatprep.subr.mxu0 0.0
    %1994 = vmatpush2.msra.mxu0 0.0
    %1995 = vmatprep.subr.mxu0 0.0
    %1996 = vmatpush2.msra.mxu0 0.0
    %1997 = vmatprep.subr.mxu0 0.0
    %1998 = vmatpush2.msra.mxu0 0.0
    %1999 = vmatprep.subr.mxu0 0.0
    %2000 = vmatpush2.msra.mxu0 0.0
    %2001 = vmatprep.subr.mxu0 0.0
    %2002 = vmatpush2.msra.mxu0 0.0
    %2003 = vmatprep.subr.mxu0 0.0
    %2004 = vmatpush2.msra.mxu0 0.0
    %2005 = vmatprep.subr.mxu0 0.0
    %2006 = vmatpush2.msra.mxu0 0.0
    %2007 = vmatprep.subr.mxu0 0.0
    %2008 = vmatpush2.msra.mxu0 0.0
    %2009 = vmatprep.subr.mxu0 0.0
    %2010 = vmatpush2.msra.mxu0 0.0
    %2011 = vmatprep.subr.mxu0 0.0
    %2012 = vmatpush2.msra.mxu0 0.0
    %2013 = vmatprep.subr.mxu0 0.0
    %2014 = vmatpush2.msra.mxu0 0.0
    %2015 = vmatprep.subr.mxu0 0.0
    %2016 = vmatpush2.msra.mxu0 0.0
    %2017 = vmatprep.subr.mxu0 0.0
    %2018 = vmatpush2.msra.mxu0 0.0
    %2019 = vmatprep.subr.mxu0 0.0
    %2020 = vmatpush2.msra.mxu0 0.0
    %2021 = vmatprep.mubr.f32.mxu0 0.0
    %2022 = vmatmul.mubr.f32.gmra.mxu0 %v1955
    %v2023 = vpop.f32.mrf.mxu0
    %v2024 = vadd.f32 0.0, %v2023
    %v2025 = vpop.f32.mrf.mxu0
    %2026 = vdwg.mxu0
    %2028 = vrot.lane.b32.xlu0 %v1690, 32
    %v2029 = vpop.permute.xlu0 %2028
    %2032 = vrot.lane.b32.xlu0 %v1857, 64
    %v2033 = vpop.permute.xlu0 %2032
    %2036 = vrot.lane.b32.xlu0 %v2024, 96
    %v2037 = vpop.permute.xlu0 %2036
    %v2039 = vsel %vm89, %v1522, %v2029
    %v2040 = vsel %vm990, %v2039, %v2033
    %v2041 = vsel %vm992, %v2040, %v2037
    %2042 = vrot.lane.b32.xlu0 %v1615, 8
    %v2043 = vpop.permute.xlu0 %2042
    %2045 = vrot.lane.b32.xlu0 %v1783, 16
    %v2046 = vpop.permute.xlu0 %2045
    %2048 = vrot.lane.b32.xlu0 %v1950, 24
    %v2049 = vpop.permute.xlu0 %2048
    %v2051 = vsel %vm390, %v1451, %v2043
    %v2052 = vsel %vm1004, %v2051, %v2046
    %v2053 = vsel %vm1006, %v2052, %v2049
    %v2054 = vld [vmem:[%s14] sm:$0xff]
    %v2055 = vld [vmem:[%s14 + $0x8] sm:$0xff]
    %v2056 = vld [vmem:[%s14 + $0x10] sm:$0xff]
    %v2057 = vld [vmem:[%s14 + $0x18] sm:$0xff]
    %v2058 = vld [vmem:[%s14 + $0x20] sm:$0xff]
    %v2059 = vld [vmem:[%s14 + $0x28] sm:$0xff]
    %v2060 = vld [vmem:[%s14 + $0x30] sm:$0xff]
    %v2061 = vld [vmem:[%s14 + $0x38] sm:$0xff]
    %v2062 = vld [vmem:[%s14 + $0x40] sm:$0xff]
    %v2063 = vld [vmem:[%s14 + $0x48] sm:$0xff]
    %v2064 = vld [vmem:[%s14 + $0x50] sm:$0xff]
    %v2065 = vld [vmem:[%s14 + $0x58] sm:$0xff]
    %v2066 = vld [vmem:[%s14 + $0x60] sm:$0xff]
    %v2067 = vld [vmem:[%s14 + $0x68] sm:$0xff]
    %v2068 = vld [vmem:[%s14 + $0x70] sm:$0xff]
    %v2069 = vld [vmem:[%s14 + $0x78] sm:$0xff]
    %v2070 = vld [vmem:[%s15] sm:$0x1]
    %v2072 = vlaneseq
    %v2073 = vshrl.u32 %v2072, 7
    %v2074 = vsub.s32 0, %v2073
    %v2075 = vrot.slane %v2070, %v2074
    %2077 = vmatprep.subr.mxu0 0.0
    %2078 = vmatpush1.msra.mxu0 %v2069
    %2079 = vmatprep.subr.mxu0 0.0
    %2080 = vmatpush1.msra.mxu0 %v2068
    %2081 = vmatprep.subr.mxu0 0.0
    %2082 = vmatpush1.msra.mxu0 %v2067
    %2083 = vmatprep.subr.mxu0 0.0
    %2084 = vmatpush1.msra.mxu0 %v2066
    %2085 = vmatprep.subr.mxu0 0.0
    %2086 = vmatpush1.msra.mxu0 %v2065
    %2087 = vmatprep.subr.mxu0 0.0
    %2088 = vmatpush1.msra.mxu0 %v2064
    %2089 = vmatprep.subr.mxu0 0.0
    %2090 = vmatpush1.msra.mxu0 %v2063
    %2091 = vmatprep.subr.mxu0 0.0
    %2092 = vmatpush1.msra.mxu0 %v2062
    %2093 = vmatprep.subr.mxu0 0.0
    %2094 = vmatpush1.msra.mxu0 %v2061
    %2095 = vmatprep.subr.mxu0 0.0
    %2096 = vmatpush1.msra.mxu0 %v2060
    %2097 = vmatprep.subr.mxu0 0.0
    %2098 = vmatpush1.msra.mxu0 %v2059
    %2099 = vmatprep.subr.mxu0 0.0
    %2100 = vmatpush1.msra.mxu0 %v2058
    %2101 = vmatprep.subr.mxu0 0.0
    %2102 = vmatpush1.msra.mxu0 %v2057
    %2103 = vmatprep.subr.mxu0 0.0
    %2104 = vmatpush1.msra.mxu0 %v2056
    %2105 = vmatprep.subr.mxu0 0.0
    %2106 = vmatpush1.msra.mxu0 %v2055
    %2107 = vmatprep.subr.mxu0 0.0
    %2108 = vmatpush1.msra.mxu0 %v2054
    %2109 = vmatprep.subr.mxu0 0.0
    %2110 = vmatpush2.msra.mxu0 0.0
    %2111 = vmatprep.subr.mxu0 0.0
    %2112 = vmatpush2.msra.mxu0 0.0
    %2113 = vmatprep.subr.mxu0 0.0
    %2114 = vmatpush2.msra.mxu0 0.0
    %2115 = vmatprep.subr.mxu0 0.0
    %2116 = vmatpush2.msra.mxu0 0.0
    %2117 = vmatprep.subr.mxu0 0.0
    %2118 = vmatpush2.msra.mxu0 0.0
    %2119 = vmatprep.subr.mxu0 0.0
    %2120 = vmatpush2.msra.mxu0 0.0
    %2121 = vmatprep.subr.mxu0 0.0
    %2122 = vmatpush2.msra.mxu0 0.0
    %2123 = vmatprep.subr.mxu0 0.0
    %2124 = vmatpush2.msra.mxu0 0.0
    %2125 = vmatprep.subr.mxu0 0.0
    %2126 = vmatpush2.msra.mxu0 0.0
    %2127 = vmatprep.subr.mxu0 0.0
    %2128 = vmatpush2.msra.mxu0 0.0
    %2129 = vmatprep.subr.mxu0 0.0
    %2130 = vmatpush2.msra.mxu0 0.0
    %2131 = vmatprep.subr.mxu0 0.0
    %2132 = vmatpush2.msra.mxu0 0.0
    %2133 = vmatprep.subr.mxu0 0.0
    %2134 = vmatpush2.msra.mxu0 0.0
    %2135 = vmatprep.subr.mxu0 0.0
    %2136 = vmatpush2.msra.mxu0 0.0
    %2137 = vmatprep.subr.mxu0 0.0
    %2138 = vmatpush2.msra.mxu0 0.0
    %2139 = vmatprep.subr.mxu0 0.0
    %2140 = vmatpush2.msra.mxu0 0.0
    %2141 = vmatprep.mubr.f32.mxu0 0.0
    %2142 = vmatmul.mubr.f32.gmra.mxu0 %v2041
    %v2143 = vpop.f32.mrf.mxu0
    %v2144 = vadd.f32 %v2075, %v2143
    %v2145 = vpop.f32.mrf.mxu0
    %2146 = vdwg.mxu0
    %v2147 = vadd.f32 %v2144, %v1131
    %v2148 = vld [vmem:[%s16] sm:$0x1]
    %v2149 = vld [vmem:[%s17] sm:$0x1]
    %v2150 = vsel %vm89, %v2147, 0.0
    %2151 = vadd.xlane.f32.xlu0 %v2150
    %v2152 = vpop.xlane.xlu0 %2151
    %v2153 = vmul.f32 %v2152, %v1107
    %v2154 = vsub.f32 %v2147, %v2153
    %v2155 = vmul.f32 %v2154, %v2154
    %v2156 = vsel %vm89, %v2155, 0.0
    %2157 = vadd.xlane.f32.xlu0 %v2156
    %v2158 = vpop.xlane.xlu0 %2157
    %v2159 = vmul.f32 %v2158, %v1107
    %v2160 = vadd.f32 %v2159, 1e-05
    %v2161 = vrsqrt.pop %v2160
    %v2162 = vmul.f32 %v2154, %v2161
    %v2164 = vlaneseq
    %v2165 = vshrl.u32 %v2164, 7
    %v2166 = vsub.s32 0, %v2165
    %v2167 = vrot.slane %v2148, %v2166
    %v2169 = vmul.f32 %v2162, %v2167
    %v2171 = vlaneseq
    %v2172 = vshrl.u32 %v2171, 7
    %v2173 = vsub.s32 0, %v2172
    %v2174 = vrot.slane %v2149, %v2173
    %v2176 = vadd.f32 %v2169, %v2174
    %2177 = vst.msk [vmem:[#allocation6] sm:$0xff] %vm89, %v2053
    %v2178 = vld [vmem:[%s18] sm:$0xff]
    %v2179 = vld [vmem:[%s18 + $0x8] sm:$0xff]
    %v2180 = vld [vmem:[%s18 + $0x10] sm:$0xff]
    %v2181 = vld [vmem:[%s18 + $0x18] sm:$0xff]
    %v2182 = vld [vmem:[%s19] sm:$0x1]
    %v2184 = vlaneseq
    %v2185 = vshrl.u32 %v2184, 7
    %v2186 = vsub.s32 0, %v2185
    %v2187 = vrot.slane %v2182, %v2186
    %v2190 = vsel %vm89, %v2176, 0
    %2192 = vmatprep.subr.mxu0 0.0
    %2193 = vmatpush1.msra.mxu0 0.0
    %2194 = vmatprep.subr.mxu0 0.0
    %2195 = vmatpush1.msra.mxu0 0.0
    %2196 = vmatprep.subr.mxu0 0.0
    %2197 = vmatpush1.msra.mxu0 0.0
    %2198 = vmatprep.subr.mxu0 0.0
    %2199 = vmatpush1.msra.mxu0 0.0
    %2200 = vmatprep.subr.mxu0 0.0
    %2201 = vmatpush1.msra.mxu0 0.0
    %2202 = vmatprep.subr.mxu0 0.0
    %2203 = vmatpush1.msra.mxu0 0.0
    %2204 = vmatprep.subr.mxu0 0.0
    %2205 = vmatpush1.msra.mxu0 0.0
    %2206 = vmatprep.subr.mxu0 0.0
    %2207 = vmatpush1.msra.mxu0 0.0
    %2208 = vmatprep.subr.mxu0 0.0
    %2209 = vmatpush1.msra.mxu0 0.0
    %2210 = vmatprep.subr.mxu0 0.0
    %2211 = vmatpush1.msra.mxu0 0.0
    %2212 = vmatprep.subr.mxu0 0.0
    %2213 = vmatpush1.msra.mxu0 0.0
    %2214 = vmatprep.subr.mxu0 0.0
    %2215 = vmatpush1.msra.mxu0 0.0
    %2216 = vmatprep.subr.mxu0 0.0
    %2217 = vmatpush1.msra.mxu0 %v2181
    %2218 = vmatprep.subr.mxu0 0.0
    %2219 = vmatpush1.msra.mxu0 %v2180
    %2220 = vmatprep.subr.mxu0 0.0
    %2221 = vmatpush1.msra.mxu0 %v2179
    %2222 = vmatprep.subr.mxu0 0.0
    %2223 = vmatpush1.msra.mxu0 %v2178
    %2224 = vmatprep.subr.mxu0 0.0
    %2225 = vmatpush2.msra.mxu0 0.0
    %2226 = vmatprep.subr.mxu0 0.0
    %2227 = vmatpush2.msra.mxu0 0.0
    %2228 = vmatprep.subr.mxu0 0.0
    %2229 = vmatpush2.msra.mxu0 0.0
    %2230 = vmatprep.subr.mxu0 0.0
    %2231 = vmatpush2.msra.mxu0 0.0
    %2232 = vmatprep.subr.mxu0 0.0
    %2233 = vmatpush2.msra.mxu0 0.0
    %2234 = vmatprep.subr.mxu0 0.0
    %2235 = vmatpush2.msra.mxu0 0.0
    %2236 = vmatprep.subr.mxu0 0.0
    %2237 = vmatpush2.msra.mxu0 0.0
    %2238 = vmatprep.subr.mxu0 0.0
    %2239 = vmatpush2.msra.mxu0 0.0
    %2240 = vmatprep.subr.mxu0 0.0
    %2241 = vmatpush2.msra.mxu0 0.0
    %2242 = vmatprep.subr.mxu0 0.0
    %2243 = vmatpush2.msra.mxu0 0.0
    %2244 = vmatprep.subr.mxu0 0.0
    %2245 = vmatpush2.msra.mxu0 0.0
    %2246 = vmatprep.subr.mxu0 0.0
    %2247 = vmatpush2.msra.mxu0 0.0
    %2248 = vmatprep.subr.mxu0 0.0
    %2249 = vmatpush2.msra.mxu0 0.0
    %2250 = vmatprep.subr.mxu0 0.0
    %2251 = vmatpush2.msra.mxu0 0.0
    %2252 = vmatprep.subr.mxu0 0.0
    %2253 = vmatpush2.msra.mxu0 0.0
    %2254 = vmatprep.subr.mxu0 0.0
    %2255 = vmatpush2.msra.mxu0 0.0
    %2256 = vmatprep.mubr.f32.mxu0 0.0
    %2257 = vmatmul.mubr.f32.gmra.mxu0 %v2190
    %v2258 = vpop.f32.mrf.mxu0
    %v2259 = vadd.f32 %v2187, %v2258
    %v2260 = vpop.f32.mrf.mxu0
    %2261 = vdwg.mxu0
    %v2262 = vmax.f32 %v2259, 0.0
    %v2263 = vld [vmem:[%s20] sm:$0xff]
    %v2264 = vld [vmem:[%s20 + $0x8] sm:$0xff]
    %v2265 = vld [vmem:[%s20 + $0x10] sm:$0xff]
    %v2266 = vld [vmem:[%s20 + $0x18] sm:$0xff]
    %v2267 = vld [vmem:[%s20 + $0x20] sm:$0xff]
    %v2268 = vld [vmem:[%s20 + $0x28] sm:$0xff]
    %v2269 = vld [vmem:[%s20 + $0x30] sm:$0xff]
    %v2270 = vld [vmem:[%s20 + $0x38] sm:$0xff]
    %v2271 = vld [vmem:[%s21] sm:$0x1]
    %v2273 = vlaneseq
    %v2274 = vshrl.u32 %v2273, 7
    %v2275 = vsub.s32 0, %v2274
    %v2276 = vrot.slane %v2271, %v2275
    %v2279 = vsel %vm990, %v2262, 0
    %2281 = vmatprep.subr.mxu0 0.0
    %2282 = vmatpush1.msra.mxu0 0.0
    %2283 = vmatprep.subr.mxu0 0.0
    %2284 = vmatpush1.msra.mxu0 0.0
    %2285 = vmatprep.subr.mxu0 0.0
    %2286 = vmatpush1.msra.mxu0 0.0
    %2287 = vmatprep.subr.mxu0 0.0
    %2288 = vmatpush1.msra.mxu0 0.0
    %2289 = vmatprep.subr.mxu0 0.0
    %2290 = vmatpush1.msra.mxu0 0.0
    %2291 = vmatprep.subr.mxu0 0.0
    %2292 = vmatpush1.msra.mxu0 0.0
    %2293 = vmatprep.subr.mxu0 0.0
    %2294 = vmatpush1.msra.mxu0 0.0
    %2295 = vmatprep.subr.mxu0 0.0
    %2296 = vmatpush1.msra.mxu0 0.0
    %2297 = vmatprep.subr.mxu0 0.0
    %2298 = vmatpush1.msra.mxu0 %v2270
    %2299 = vmatprep.subr.mxu0 0.0
    %2300 = vmatpush1.msra.mxu0 %v2269
    %2301 = vmatprep.subr.mxu0 0.0
    %2302 = vmatpush1.msra.mxu0 %v2268
    %2303 = vmatprep.subr.mxu0 0.0
    %2304 = vmatpush1.msra.mxu0 %v2267
    %2305 = vmatprep.subr.mxu0 0.0
    %2306 = vmatpush1.msra.mxu0 %v2266
    %2307 = vmatprep.subr.mxu0 0.0
    %2308 = vmatpush1.msra.mxu0 %v2265
    %2309 = vmatprep.subr.mxu0 0.0
    %2310 = vmatpush1.msra.mxu0 %v2264
    %2311 = vmatprep.subr.mxu0 0.0
    %2312 = vmatpush1.msra.mxu0 %v2263
    %2313 = vmatprep.subr.mxu0 0.0
    %2314 = vmatpush2.msra.mxu0 0.0
    %2315 = vmatprep.subr.mxu0 0.0
    %2316 = vmatpush2.msra.mxu0 0.0
    %2317 = vmatprep.subr.mxu0 0.0
    %2318 = vmatpush2.msra.mxu0 0.0
    %2319 = vmatprep.subr.mxu0 0.0
    %2320 = vmatpush2.msra.mxu0 0.0
    %2321 = vmatprep.subr.mxu0 0.0
    %2322 = vmatpush2.msra.mxu0 0.0
    %2323 = vmatprep.subr.mxu0 0.0
    %2324 = vmatpush2.msra.mxu0 0.0
    %2325 = vmatprep.subr.mxu0 0.0
    %2326 = vmatpush2.msra.mxu0 0.0
    %2327 = vmatprep.subr.mxu0 0.0
    %2328 = vmatpush2.msra.mxu0 0.0
    %2329 = vmatprep.subr.mxu0 0.0
    %2330 = vmatpush2.msra.mxu0 0.0
    %2331 = vmatprep.subr.mxu0 0.0
    %2332 = vmatpush2.msra.mxu0 0.0
    %2333 = vmatprep.subr.mxu0 0.0
    %2334 = vmatpush2.msra.mxu0 0.0
    %2335 = vmatprep.subr.mxu0 0.0
    %2336 = vmatpush2.msra.mxu0 0.0
    %2337 = vmatprep.subr.mxu0 0.0
    %2338 = vmatpush2.msra.mxu0 0.0
    %2339 = vmatprep.subr.mxu0 0.0
    %2340 = vmatpush2.msra.mxu0 0.0
    %2341 = vmatprep.subr.mxu0 0.0
    %2342 = vmatpush2.msra.mxu0 0.0
    %2343 = vmatprep.subr.mxu0 0.0
    %2344 = vmatpush2.msra.mxu0 0.0
    %2345 = vmatprep.mubr.f32.mxu0 0.0
    %2346 = vmatmul.mubr.f32.gmra.mxu0 %v2279
    %v2347 = vpop.f32.mrf.mxu0
    %v2348 = vadd.f32 %v2276, %v2347
    %v2349 = vpop.f32.mrf.mxu0
    %2350 = vdwg.mxu0
    %v2351 = vadd.f32 %v2348, %v2176
    %v2352 = vld [vmem:[%s22] sm:$0x1]
    %v2353 = vld [vmem:[%s23] sm:$0x1]
    %v2354 = vsel %vm89, %v2351, 0.0
    %2355 = vadd.xlane.f32.xlu0 %v2354
    %v2356 = vpop.xlane.xlu0 %2355
    %v2357 = vmul.f32 %v2356, %v1107
    %v2358 = vsub.f32 %v2351, %v2357
    %v2359 = vmul.f32 %v2358, %v2358
    %v2360 = vsel %vm89, %v2359, 0.0
    %2361 = vadd.xlane.f32.xlu0 %v2360
    %v2362 = vpop.xlane.xlu0 %2361
    %v2363 = vmul.f32 %v2362, %v1107
    %v2364 = vadd.f32 %v2363, 1e-05
    %v2365 = vrsqrt.pop %v2364
    %v2366 = vmul.f32 %v2358, %v2365
    %v2368 = vlaneseq
    %v2369 = vshrl.u32 %v2368, 7
    %v2370 = vsub.s32 0, %v2369
    %v2371 = vrot.slane %v2352, %v2370
    %v2373 = vmul.f32 %v2366, %v2371
    %v2375 = vlaneseq
    %v2376 = vshrl.u32 %v2375, 7
    %v2377 = vsub.s32 0, %v2376
    %v2378 = vrot.slane %v2353, %v2377
    %v2380 = vadd.f32 %v2373, %v2378
    %2381 = vst.msk [vmem:[#allocation2] sm:$0xff] %vm89, %v2380
    // Predicated region
    $region98: #{tpu_custom_call.1} parent=1 // pred_check
      _
    $region99: #{tpu_custom_call.1} parent=1 // pred_check_branch
      %2383 = sbr.rel (0) target = $region101
    $region100: #{tpu_custom_call.1} parent=1 // pred_region
      %s2385 = ssub.s32 128, 128
      %2386 = vsyncadd [#allocation3], %s2385
      %s2388 = sshll.u32 [#allocation2], 4
      %s2389 = int_to_ptr.vmem [resolvable:$true] %s2388
      %2391 = dma.vmem_to_hbm [thread:$0]  %s2389, 128, %s24, [#allocation3]
    $region101: #{tpu_custom_call.1} parent=1 // pred_fallthru
      _
    // Predicated region
    $region102: #{tpu_custom_call.1} parent=1 // pred_check
      _
    $region103: #{tpu_custom_call.1} parent=1 // pred_check_branch
      %2393 = sbr.rel (0) target = $region105
    $region104: #{tpu_custom_call.1} parent=1 // pred_region
      %s2395 = ssub.s32 128, 128
      %2396 = vsyncadd [#allocation5], %s2395
      %s2398 = sshll.u32 [#allocation4], 4
      %s2399 = int_to_ptr.vmem [resolvable:$true] %s2398
      %2401 = dma.vmem_to_hbm [thread:$0]  %s2399, 128, %s25, [#allocation5]
    $region105: #{tpu_custom_call.1} parent=1 // pred_fallthru
      _
    // Predicated region
    $region106: #{tpu_custom_call.1} parent=1 // pred_check
      _
    $region107: #{tpu_custom_call.1} parent=1 // pred_check_branch
      %2403 = sbr.rel (0) target = $region109
    $region108: #{tpu_custom_call.1} parent=1 // pred_region
      %s2405 = ssub.s32 128, 128
      %2406 = vsyncadd [#allocation5], %s2405
      %s2408 = sshll.u32 [#allocation6], 4
      %s2409 = int_to_ptr.vmem [resolvable:$true] %s2408
      %2411 = dma.vmem_to_hbm [thread:$0]  %s2409, 128, %s26, [#allocation5]
    $region109: #{tpu_custom_call.1} parent=1 // pred_fallthru
      _
    // Predicated region
    $region110: #{tpu_custom_call.1} parent=1 // pred_check
      _
    $region111: #{tpu_custom_call.1} parent=1 // pred_check_branch
      %2413 = sbr.rel (0) target = $region113
    $region112: #{tpu_custom_call.1} parent=1 // pred_region
      %2414 = dma.done [#allocation3], 128
    $region113: #{tpu_custom_call.1} parent=1 // pred_fallthru
      _
    // Predicated region
    $region114: #{tpu_custom_call.1} parent=1 // pred_check
      _
    $region115: #{tpu_custom_call.1} parent=1 // pred_check_branch
      %2416 = sbr.rel (0) target = $region117
    $region116: #{tpu_custom_call.1} parent=1 // pred_region
      %2417 = dma.done [#allocation5], 128
    $region117: #{tpu_custom_call.1} parent=1 // pred_fallthru
      _
    // Predicated region
    $region118: #{tpu_custom_call.1} parent=1 // pred_check
      _
    $region119: #{tpu_custom_call.1} parent=1 // pred_check_branch
      %2419 = sbr.rel (0) target = $region121
    $region120: #{tpu_custom_call.1} parent=1 // pred_region
      %2420 = dma.done [#allocation5], 128
    $region121: #{tpu_custom_call.1} parent=1 // pred_fallthru
      _
    %2421 = vsyncpa [#allocation3], 1
    %2422 = vsyncpa [#allocation5], 1

</llo_original>
